<compile_context>
chip_gen: v7x
topology: tpu7x:2x2x1
jax: 0.10.0
libtpu: 0.0.40
codegen_flags: <defaults>
</compile_context>

<pallas_src>
import functools

import jax
import jax.numpy as jnp
import numpy as np
from jax.experimental import pallas as pl
from jax.experimental.pallas import tpu as pltpu


def _ptr_scorer_kernel(attn_mem_ref, w_pre_ref, w_h_ref, consts_ref, out_ref,
                       *, n_step, n_hop, hidden):
    H = hidden
    f32 = jnp.float32

    # ---------------- Prologue: step-invariant work (off the serial chain) ---
    attn_mem = attn_mem_ref[...]                                    # [N, D]
    pre = jnp.dot(attn_mem, w_pre_ref[...],
                  preferred_element_type=f32)                       # [N, 6H+1]
    attn_feat = pre[:, 0 * H:1 * H]                                 # attn_mem @ attn_wm
    hop_feat = pre[:, 1 * H:2 * H]                                  # attn_mem @ hop_wm
    g_ext = pre[:, 2 * H:6 * H + 1]                                 # attn_mem @ [w_ih | score_w^T]

    w_h = w_h_ref[...]                                              # [H, 2H+2]
    hop_wq = w_h[:, 0 * H:1 * H]
    attn_wq = w_h[:, 1 * H:2 * H]
    hop_v_col = w_h[:, 2 * H:2 * H + 1]                             # [H, 1]
    attn_v_col = w_h[:, 2 * H + 1:2 * H + 2]                        # [H, 1]

    # Folded projections: after any hop, the query projection needed by the
    # NEXT attention is wts^T @ (hop_feat @ W) — the context itself is never
    # materialised (removes one serial MXU round-trip per hop).
    m_fold = jnp.dot(hop_feat, w_h[:, 0:2 * H],
                     preferred_element_type=f32)                    # [N, 2H]
    m_hop = m_fold[:, 0:H]                                          # hop_feat @ hop_wq
    m_attn = m_fold[:, H:2 * H]                                     # hop_feat @ attn_wq

    consts = consts_ref[...]                                        # [3, 4H]
    gates0 = consts[0:1, :]                                         # init_i@w_ih + gates_const
    gates_const = consts[1:2, :]                                    # init_h@w_hh + b_ih + b_hh
    c0 = consts[2:3, 0:H]                                           # [1, H]
    score_b = consts[2:3, H:H + 1]                                  # [1, 1]

    # Weight used for the first (h-driven) query projection of every step.
    w_first = hop_wq if n_hop > 0 else attn_wq

    # sigmoid(x) == 0.5*(1 + tanh(x/2)): one EUP pass over the full gate row.
    lane4h = jax.lax.broadcasted_iota(jnp.int32, (1, 4 * H), 1)
    is_g = (lane4h >= 2 * H) & (lane4h < 3 * H)
    gate_scale = jnp.where(is_g, 1.0, 0.5).astype(f32)

    lane_out = jax.lax.broadcasted_iota(jnp.int32, (1, n_step), 1)
    row = jnp.zeros((1, n_step), f32)

    def _softmax_col(logits):                                       # softmax over N (axis 0)
        m = jnp.max(logits, axis=0, keepdims=True)
        e = jnp.exp(logits - m)
        return e / jnp.sum(e, axis=0, keepdims=True)                # exact divide

    # ---------------- Serial decode chain ------------------------------------
    # TODO(synk): for n_step >> 8 move this to lax.fori_loop carrying
    # (gates, row); the short static unroll is kept for n_step=4.
    gates = gates0                                                  # [1, 4H]
    for step in range(n_step):
        # LSTM cell with states pinned at their init values (as in reference).
        t = jnp.tanh(gates * gate_scale)                            # single EUP pass
        i_g = 0.5 + 0.5 * t[:, 0 * H:1 * H]
        f_g = 0.5 + 0.5 * t[:, 1 * H:2 * H]
        g_g = t[:, 2 * H:3 * H]
        o_g = 0.5 + 0.5 * t[:, 3 * H:4 * H]
        c = f_g * c0 + i_g * g_g
        h = o_g * jnp.tanh(c)                                       # [1, H]

        # Hop attentions (context never materialised — see folding note).
        qproj = jnp.dot(h, w_first, preferred_element_type=f32)     # [1, H]
        for j in range(n_hop):
            s = hop_feat + qproj                                    # [N, H]
            logits = jnp.dot(jnp.tanh(s), hop_v_col,
                             preferred_element_type=f32)            # [N, 1]  (MXU)
            wts = _softmax_col(logits)                              # [N, 1]
            m_next = m_hop if j < n_hop - 1 else m_attn
            qproj = jax.lax.dot_general(wts, m_next,
                                        (((0,), (0,)), ((), ())),
                                        preferred_element_type=f32)  # [1, H]

        # Final attention over attn_mem.
        s = attn_feat + qproj
        logits = jnp.dot(jnp.tanh(s), attn_v_col, preferred_element_type=f32)
        wts = _softmax_col(logits)                                  # [N, 1]

        # One MXU op yields this step's score AND the next step's gates:
        #   wts^T @ [attn_mem @ w_ih | attn_mem @ score_w^T]
        full = jax.lax.dot_general(wts, g_ext, (((0,), (0,)), ((), ())),
                                   preferred_element_type=f32)      # [1, 4H+1]
        score = full[:, 4 * H:4 * H + 1] + score_b                  # [1, 1]
        row = jnp.where(lane_out == step, score, row)
        gates = full[:, 0:4 * H] + gates_const                      # next-step gates

    out_ref[...] = row                                              # [1, n_step]


def ptr_scorer_forward(params, attn_mem, n_step, n_hop):
    """Returns [n_step, 1, 1], matching the list of [1, 1] torch tensors."""
    H = params["init_h"].shape[-1]
    f32 = jnp.float32

    # ---- Wrapper-side packing (parameter-only; 15 inputs -> 4 DMAs) --------
    # One fused [D, 6H+1] weight: a single prologue matmul produces attn_feat,
    # hop_feat, attn_mem@w_ih and attn_mem@score_w^T.
    w_pre = jnp.concatenate(
        [params["attn_wm"], params["hop_wm"], params["w_ih"],
         params["score_w"].T], axis=-1).astype(f32)                 # [D, 6H+1]
    # All [H, .]-shaped weights in one buffer.
    w_h = jnp.concatenate(
        [params["hop_wq"], params["attn_wq"],
         params["hop_v"].T, params["attn_v"].T], axis=-1).astype(f32)  # [H, 2H+2]
    # consts: row0 = step-0 gate row, row1 = step-invariant gate contribution,
    # row2 = [init_c | score_b | 0...] packed into 4H lanes.
    gates_const = (params["init_h"] @ params["w_hh"]
                   + params["b_hh"] + params["b_ih"])                # [1, 4H]
    gates0 = params["init_i"] @ params["w_ih"] + gates_const        # [1, 4H]
    row2 = jnp.zeros((1, 4 * H), f32)
    row2 = row2.at[:, 0:H].set(params["init_c"].astype(f32))
    row2 = row2.at[:, H:H + 1].set(params["score_b"].astype(f32))
    consts = jnp.concatenate([gates0, gates_const, row2], axis=0).astype(f32)

    kernel = functools.partial(_ptr_scorer_kernel,
                               n_step=n_step, n_hop=n_hop, hidden=H)
    args = (attn_mem.astype(f32), w_pre, w_h, consts)
    out = pl.pallas_call(
        kernel,
        out_shape=jax.ShapeDtypeStruct((1, n_step), f32),           # lane-dense row
        in_specs=[pl.BlockSpec(memory_space=pltpu.MemorySpace.VMEM)] * len(args),
        out_specs=pl.BlockSpec(memory_space=pltpu.MemorySpace.VMEM),
    )(*args)
    # TODO(synk): the module scores a single document; for real throughput,
    # batch independent documents into the sublane/M dimension ([B, .] states,
    # [B, n_step] output) and on v7x add a leading "parallel" grid axis so the
    # batch is sharded across both TensorCores.
    return out.reshape(n_step, 1, 1)


# ----------------------------- pure-JAX reference -----------------------------

def _attention_ref(att, att_feat, query, v_row, w):
    s = att_feat + query @ w
    logits = jnp.sum(jnp.tanh(s) * v_row, axis=-1, keepdims=True)
    m = jnp.max(logits, axis=0, keepdims=True)
    e = jnp.exp(logits - m)
    wts = e / jnp.sum(e, axis=0, keepdims=True)
    return jnp.sum(wts * att, axis=0, keepdims=True)


def ptr_scorer_reference(params, attn_mem, n_step, n_hop):
    """Pure-JAX reference mirroring the PyTorch forward, for validation."""
    attn_feat = attn_mem @ params["attn_wm"]
    hop_feat = attn_mem @ params["hop_wm"]
    h0, c0 = params["init_h"], params["init_c"]
    H = h0.shape[-1]
    lstm_in = params["init_i"]
    scores = []
    for _ in range(n_step):
        gates = (lstm_in @ params["w_ih"] + params["b_ih"]
                 + h0 @ params["w_hh"] + params["b_hh"])
        i_g = jax.nn.sigmoid(gates[:, 0 * H:1 * H])
        f_g = jax.nn.sigmoid(gates[:, 1 * H:2 * H])
        g_g = jnp.tanh(gates[:, 2 * H:3 * H])
        o_g = jax.nn.sigmoid(gates[:, 3 * H:4 * H])
        c = f_g * c0 + i_g * g_g
        h = o_g * jnp.tanh(c)
        query = h
        for _ in range(n_hop):
            query = _attention_ref(hop_feat, hop_feat, query,
                                   params["hop_v"], params["hop_wq"])
        output = _attention_ref(attn_mem, attn_feat, query,
                                params["attn_v"], params["attn_wq"])
        scores.append(jnp.sum(output * params["score_w"], axis=-1, keepdims=True)
                      + params["score_b"])
        lstm_in = output
    return jnp.stack(scores, axis=0)                                # [n_step, 1, 1]


def make_params(key, d_in, hidden):
    ks = jax.random.split(key, 16)
    s = 0.1
    f32 = jnp.float32
    return dict(
        attn_wm=jax.random.normal(ks[0], (d_in, hidden), f32) * s,
        attn_wq=jax.random.normal(ks[1], (hidden, hidden), f32) * s,
        attn_v=jax.random.normal(ks[2], (1, hidden), f32) * s,
        hop_wm=jax.random.normal(ks[3], (d_in, hidden), f32) * s,
        hop_wq=jax.random.normal(ks[4], (hidden, hidden), f32) * s,
        hop_v=jax.random.normal(ks[5], (1, hidden), f32) * s,
        w_ih=jax.random.normal(ks[6], (d_in, 4 * hidden), f32) * s,    # pre-transposed
        w_hh=jax.random.normal(ks[7], (hidden, 4 * hidden), f32) * s,  # pre-transposed
        b_ih=jax.random.normal(ks[8], (1, 4 * hidden), f32) * s,
        b_hh=jax.random.normal(ks[9], (1, 4 * hidden), f32) * s,
        init_h=jax.random.normal(ks[10], (1, hidden), f32) * s,        # n_layer = 1
        init_c=jax.random.normal(ks[11], (1, hidden), f32) * s,
        init_i=jax.random.normal(ks[12], (1, d_in), f32) * s,
        score_w=jax.random.normal(ks[13], (1, d_in), f32) * s,         # nn.Linear(D_in, 1)
        score_b=jax.random.normal(ks[14], (1, 1), f32) * s,
    )


if __name__ == "__main__":
    key = jax.random.PRNGKey(0)
    k_param, k_mem = jax.random.split(key)

    N_SENTS, D_IN, HIDDEN = 8, 32, 32
    N_STEP, N_HOP = 4, 2

    params = make_params(k_param, D_IN, HIDDEN)
    attn_mem = jax.random.normal(k_mem, (N_SENTS, D_IN), jnp.float32)

    out = ptr_scorer_forward(params, attn_mem, N_STEP, N_HOP)
    out = jax.block_until_ready(out)

    ref = jax.block_until_ready(ptr_scorer_reference(params, attn_mem, N_STEP, N_HOP))

    assert out.shape == (N_STEP, 1, 1)
    if not np.allclose(np.asarray(out), np.asarray(ref), rtol=2e-3, atol=2e-3):
        raise AssertionError(f"mismatch:\nkernel={np.asarray(out).ravel()}\n"
                             f"ref={np.asarray(ref).ravel()}")
    print("KERNEL_OK")
</pallas_src>

<mosaic_0001>
module attributes {stable_mosaic.version = 11 : i64} {
  func.func @_ptr_scorer_kernel(%arg0: memref<8x32xf32, #tpu.memory_space<vmem>>, %arg1: memref<32x193xf32, #tpu.memory_space<vmem>>, %arg2: memref<32x66xf32, #tpu.memory_space<vmem>>, %arg3: memref<3x128xf32, #tpu.memory_space<vmem>>, %arg4: memref<1x4xf32, #tpu.memory_space<vmem>>) attributes {dimension_semantics = [], scalar_prefetch = 0 : i64, scratch_operands = 0 : i64, tpu.core_type = #tpu.core_type<tc>} {
    %c0 = arith.constant 0 : index
    %c0_0 = arith.constant 0 : index
    %0 = vector.load %arg0[%c0, %c0_0] : memref<8x32xf32, #tpu.memory_space<vmem>>, vector<8x32xf32>
    %c0_1 = arith.constant 0 : index
    %c0_2 = arith.constant 0 : index
    %1 = vector.load %arg1[%c0_1, %c0_2] : memref<32x193xf32, #tpu.memory_space<vmem>>, vector<32x193xf32>
    %cst = arith.constant dense<0.000000e+00> : vector<8x193xf32>
    %2 = tpu.matmul %0, %1, %cst {dimension_numbers = #tpu.dot_dimension_numbers<[1], [0], [0], [1], [0, 0, 1, 1], [], []>} : vector<8x32xf32>, vector<32x193xf32>, vector<8x193xf32> -> vector<8x193xf32>
    %3 = vector.extract_strided_slice %2 {offsets = [0, 0], sizes = [8, 32], strides = [1, 1]} : vector<8x193xf32> to vector<8x32xf32>
    %4 = vector.extract_strided_slice %2 {offsets = [0, 32], sizes = [8, 32], strides = [1, 1]} : vector<8x193xf32> to vector<8x32xf32>
    %5 = vector.extract_strided_slice %2 {offsets = [0, 64], sizes = [8, 129], strides = [1, 1]} : vector<8x193xf32> to vector<8x129xf32>
    %c0_3 = arith.constant 0 : index
    %c0_4 = arith.constant 0 : index
    %6 = vector.load %arg2[%c0_3, %c0_4] : memref<32x66xf32, #tpu.memory_space<vmem>>, vector<32x66xf32>
    %7 = vector.extract_strided_slice %6 {offsets = [0, 0], sizes = [32, 32], strides = [1, 1]} : vector<32x66xf32> to vector<32x32xf32>
    %8 = vector.extract_strided_slice %6 {offsets = [0, 64], sizes = [32, 1], strides = [1, 1]} : vector<32x66xf32> to vector<32x1xf32>
    %9 = vector.extract_strided_slice %6 {offsets = [0, 65], sizes = [32, 1], strides = [1, 1]} : vector<32x66xf32> to vector<32x1xf32>
    %10 = vector.extract_strided_slice %6 {offsets = [0, 0], sizes = [32, 64], strides = [1, 1]} : vector<32x66xf32> to vector<32x64xf32>
    %cst_5 = arith.constant dense<0.000000e+00> : vector<8x64xf32>
    %11 = tpu.matmul %4, %10, %cst_5 {dimension_numbers = #tpu.dot_dimension_numbers<[1], [0], [0], [1], [0, 0, 1, 1], [], []>} : vector<8x32xf32>, vector<32x64xf32>, vector<8x64xf32> -> vector<8x64xf32>
    %12 = vector.extract_strided_slice %11 {offsets = [0, 0], sizes = [8, 32], strides = [1, 1]} : vector<8x64xf32> to vector<8x32xf32>
    %13 = vector.extract_strided_slice %11 {offsets = [0, 32], sizes = [8, 32], strides = [1, 1]} : vector<8x64xf32> to vector<8x32xf32>
    %c0_6 = arith.constant 0 : index
    %c0_7 = arith.constant 0 : index
    %14 = vector.load %arg3[%c0_6, %c0_7] : memref<3x128xf32, #tpu.memory_space<vmem>>, vector<3x128xf32>
    %15 = vector.extract_strided_slice %14 {offsets = [0, 0], sizes = [1, 128], strides = [1, 1]} : vector<3x128xf32> to vector<1x128xf32>
    %16 = vector.extract_strided_slice %14 {offsets = [1, 0], sizes = [1, 128], strides = [1, 1]} : vector<3x128xf32> to vector<1x128xf32>
    %17 = vector.extract_strided_slice %14 {offsets = [2, 0], sizes = [1, 32], strides = [1, 1]} : vector<3x128xf32> to vector<1x32xf32>
    %18 = vector.extract_strided_slice %14 {offsets = [2, 32], sizes = [1, 1], strides = [1, 1]} : vector<3x128xf32> to vector<1x1xf32>
    %19 = tpu.iota {dimensions = array<i32: 1>} : vector<1x128xi32>
    %c64_i32 = arith.constant 64 : i32
    %20 = vector.broadcast %c64_i32 : i32 to vector<1x128xi32>
    %21 = arith.cmpi sge, %19, %20 : vector<1x128xi32>
    %c96_i32 = arith.constant 96 : i32
    %22 = vector.broadcast %c96_i32 : i32 to vector<1x128xi32>
    %23 = arith.cmpi slt, %19, %22 : vector<1x128xi32>
    %24 = arith.andi %21, %23 : vector<1x128xi1>
    %cst_8 = arith.constant 1.000000e+00 : f32
    %cst_9 = arith.constant 5.000000e-01 : f32
    %25 = vector.broadcast %cst_8 : f32 to vector<1x128xf32>
    %26 = vector.broadcast %cst_9 : f32 to vector<1x128xf32>
    %27 = arith.select %24, %25, %26 : vector<1x128xi1>, vector<1x128xf32>
    %28 = tpu.iota {dimensions = array<i32: 1>} : vector<1x4xi32>
    %cst_10 = arith.constant 0.000000e+00 : f32
    %29 = vector.broadcast %cst_10 : f32 to vector<1x4xf32>
    %30 = arith.mulf %15, %27 : vector<1x128xf32>
    %31 = math.tanh %30 : vector<1x128xf32>
    %32 = vector.extract_strided_slice %31 {offsets = [0, 0], sizes = [1, 32], strides = [1, 1]} : vector<1x128xf32> to vector<1x32xf32>
    %cst_11 = arith.constant 5.000000e-01 : f32
    %33 = vector.broadcast %cst_11 : f32 to vector<1x32xf32>
    %34 = arith.mulf %33, %32 : vector<1x32xf32>
    %cst_12 = arith.constant 5.000000e-01 : f32
    %35 = vector.broadcast %cst_12 : f32 to vector<1x32xf32>
    %36 = arith.addf %35, %34 : vector<1x32xf32>
    %37 = vector.extract_strided_slice %31 {offsets = [0, 32], sizes = [1, 32], strides = [1, 1]} : vector<1x128xf32> to vector<1x32xf32>
    %cst_13 = arith.constant 5.000000e-01 : f32
    %38 = vector.broadcast %cst_13 : f32 to vector<1x32xf32>
    %39 = arith.mulf %38, %37 : vector<1x32xf32>
    %cst_14 = arith.constant 5.000000e-01 : f32
    %40 = vector.broadcast %cst_14 : f32 to vector<1x32xf32>
    %41 = arith.addf %40, %39 : vector<1x32xf32>
    %42 = vector.extract_strided_slice %31 {offsets = [0, 64], sizes = [1, 32], strides = [1, 1]} : vector<1x128xf32> to vector<1x32xf32>
    %43 = vector.extract_strided_slice %31 {offsets = [0, 96], sizes = [1, 32], strides = [1, 1]} : vector<1x128xf32> to vector<1x32xf32>
    %cst_15 = arith.constant 5.000000e-01 : f32
    %44 = vector.broadcast %cst_15 : f32 to vector<1x32xf32>
    %45 = arith.mulf %44, %43 : vector<1x32xf32>
    %cst_16 = arith.constant 5.000000e-01 : f32
    %46 = vector.broadcast %cst_16 : f32 to vector<1x32xf32>
    %47 = arith.addf %46, %45 : vector<1x32xf32>
    %48 = arith.mulf %41, %17 : vector<1x32xf32>
    %49 = arith.mulf %36, %42 : vector<1x32xf32>
    %50 = arith.addf %48, %49 : vector<1x32xf32>
    %51 = math.tanh %50 : vector<1x32xf32>
    %52 = arith.mulf %47, %51 : vector<1x32xf32>
    %cst_17 = arith.constant dense<0.000000e+00> : vector<1x32xf32>
    %53 = tpu.matmul %52, %7, %cst_17 {dimension_numbers = #tpu.dot_dimension_numbers<[1], [0], [0], [1], [0, 0, 1, 1], [], []>} : vector<1x32xf32>, vector<32x32xf32>, vector<1x32xf32> -> vector<1x32xf32>
    %54 = vector.broadcast %53 : vector<1x32xf32> to vector<8x32xf32>
    %55 = arith.addf %4, %54 : vector<8x32xf32>
    %56 = math.tanh %55 : vector<8x32xf32>
    %cst_18 = arith.constant dense<0.000000e+00> : vector<8x1xf32>
    %57 = tpu.matmul %56, %8, %cst_18 {dimension_numbers = #tpu.dot_dimension_numbers<[1], [0], [0], [1], [0, 0, 1, 1], [], []>} : vector<8x32xf32>, vector<32x1xf32>, vector<8x1xf32> -> vector<8x1xf32>
    %cst_19 = arith.constant dense<0xFF800000> : vector<1xf32>
    %58 = vector.multi_reduction <maximumf>, %57, %cst_19 [0] : vector<8x1xf32> to vector<1xf32>
    %59 = vector.shape_cast %58 : vector<1xf32> to vector<1x1xf32>
    %60 = vector.broadcast %59 : vector<1x1xf32> to vector<8x1xf32>
    %61 = arith.subf %57, %60 : vector<8x1xf32>
    %62 = math.exp %61 : vector<8x1xf32>
    %cst_20 = arith.constant dense<0.000000e+00> : vector<1xf32>
    %63 = vector.multi_reduction <add>, %62, %cst_20 [0] : vector<8x1xf32> to vector<1xf32>
    %64 = vector.shape_cast %63 : vector<1xf32> to vector<1x1xf32>
    %65 = vector.broadcast %64 : vector<1x1xf32> to vector<8x1xf32>
    %66 = arith.divf %62, %65 : vector<8x1xf32>
    %cst_21 = arith.constant dense<0.000000e+00> : vector<1x32xf32>
    %67 = tpu.matmul %66, %12, %cst_21 {dimension_numbers = #tpu.dot_dimension_numbers<[0], [0], [1], [1], [0, 1, 1, 1], [], []>} : vector<8x1xf32>, vector<8x32xf32>, vector<1x32xf32> -> vector<1x32xf32>
    %68 = vector.broadcast %67 : vector<1x32xf32> to vector<8x32xf32>
    %69 = arith.addf %4, %68 : vector<8x32xf32>
    %70 = math.tanh %69 : vector<8x32xf32>
    %cst_22 = arith.constant dense<0.000000e+00> : vector<8x1xf32>
    %71 = tpu.matmul %70, %8, %cst_22 {dimension_numbers = #tpu.dot_dimension_numbers<[1], [0], [0], [1], [0, 0, 1, 1], [], []>} : vector<8x32xf32>, vector<32x1xf32>, vector<8x1xf32> -> vector<8x1xf32>
    %cst_23 = arith.constant dense<0xFF800000> : vector<1xf32>
    %72 = vector.multi_reduction <maximumf>, %71, %cst_23 [0] : vector<8x1xf32> to vector<1xf32>
    %73 = vector.shape_cast %72 : vector<1xf32> to vector<1x1xf32>
    %74 = vector.broadcast %73 : vector<1x1xf32> to vector<8x1xf32>
    %75 = arith.subf %71, %74 : vector<8x1xf32>
    %76 = math.exp %75 : vector<8x1xf32>
    %cst_24 = arith.constant dense<0.000000e+00> : vector<1xf32>
    %77 = vector.multi_reduction <add>, %76, %cst_24 [0] : vector<8x1xf32> to vector<1xf32>
    %78 = vector.shape_cast %77 : vector<1xf32> to vector<1x1xf32>
    %79 = vector.broadcast %78 : vector<1x1xf32> to vector<8x1xf32>
    %80 = arith.divf %76, %79 : vector<8x1xf32>
    %cst_25 = arith.constant dense<0.000000e+00> : vector<1x32xf32>
    %81 = tpu.matmul %80, %13, %cst_25 {dimension_numbers = #tpu.dot_dimension_numbers<[0], [0], [1], [1], [0, 1, 1, 1], [], []>} : vector<8x1xf32>, vector<8x32xf32>, vector<1x32xf32> -> vector<1x32xf32>
    %82 = vector.broadcast %81 : vector<1x32xf32> to vector<8x32xf32>
    %83 = arith.addf %3, %82 : vector<8x32xf32>
    %84 = math.tanh %83 : vector<8x32xf32>
    %cst_26 = arith.constant dense<0.000000e+00> : vector<8x1xf32>
    %85 = tpu.matmul %84, %9, %cst_26 {dimension_numbers = #tpu.dot_dimension_numbers<[1], [0], [0], [1], [0, 0, 1, 1], [], []>} : vector<8x32xf32>, vector<32x1xf32>, vector<8x1xf32> -> vector<8x1xf32>
    %cst_27 = arith.constant dense<0xFF800000> : vector<1xf32>
    %86 = vector.multi_reduction <maximumf>, %85, %cst_27 [0] : vector<8x1xf32> to vector<1xf32>
    %87 = vector.shape_cast %86 : vector<1xf32> to vector<1x1xf32>
    %88 = vector.broadcast %87 : vector<1x1xf32> to vector<8x1xf32>
    %89 = arith.subf %85, %88 : vector<8x1xf32>
    %90 = math.exp %89 : vector<8x1xf32>
    %cst_28 = arith.constant dense<0.000000e+00> : vector<1xf32>
    %91 = vector.multi_reduction <add>, %90, %cst_28 [0] : vector<8x1xf32> to vector<1xf32>
    %92 = vector.shape_cast %91 : vector<1xf32> to vector<1x1xf32>
    %93 = vector.broadcast %92 : vector<1x1xf32> to vector<8x1xf32>
    %94 = arith.divf %90, %93 : vector<8x1xf32>
    %cst_29 = arith.constant dense<0.000000e+00> : vector<1x129xf32>
    %95 = tpu.matmul %94, %5, %cst_29 {dimension_numbers = #tpu.dot_dimension_numbers<[0], [0], [1], [1], [0, 1, 1, 1], [], []>} : vector<8x1xf32>, vector<8x129xf32>, vector<1x129xf32> -> vector<1x129xf32>
    %96 = vector.extract_strided_slice %95 {offsets = [0, 128], sizes = [1, 1], strides = [1, 1]} : vector<1x129xf32> to vector<1x1xf32>
    %97 = arith.addf %96, %18 : vector<1x1xf32>
    %c0_i32 = arith.constant 0 : i32
    %98 = vector.broadcast %c0_i32 : i32 to vector<1x4xi32>
    %99 = arith.cmpi eq, %28, %98 : vector<1x4xi32>
    %100 = vector.shape_cast %97 : vector<1x1xf32> to vector<1x1xf32>
    %101 = vector.broadcast %100 : vector<1x1xf32> to vector<1x4xf32>
    %102 = arith.select %99, %101, %29 : vector<1x4xi1>, vector<1x4xf32>
    %103 = vector.extract_strided_slice %95 {offsets = [0, 0], sizes = [1, 128], strides = [1, 1]} : vector<1x129xf32> to vector<1x128xf32>
    %104 = arith.addf %103, %16 : vector<1x128xf32>
    %105 = arith.mulf %104, %27 : vector<1x128xf32>
    %106 = math.tanh %105 : vector<1x128xf32>
    %107 = vector.extract_strided_slice %106 {offsets = [0, 0], sizes = [1, 32], strides = [1, 1]} : vector<1x128xf32> to vector<1x32xf32>
    %cst_30 = arith.constant 5.000000e-01 : f32
    %108 = vector.broadcast %cst_30 : f32 to vector<1x32xf32>
    %109 = arith.mulf %108, %107 : vector<1x32xf32>
    %cst_31 = arith.constant 5.000000e-01 : f32
    %110 = vector.broadcast %cst_31 : f32 to vector<1x32xf32>
    %111 = arith.addf %110, %109 : vector<1x32xf32>
    %112 = vector.extract_strided_slice %106 {offsets = [0, 32], sizes = [1, 32], strides = [1, 1]} : vector<1x128xf32> to vector<1x32xf32>
    %cst_32 = arith.constant 5.000000e-01 : f32
    %113 = vector.broadcast %cst_32 : f32 to vector<1x32xf32>
    %114 = arith.mulf %113, %112 : vector<1x32xf32>
    %cst_33 = arith.constant 5.000000e-01 : f32
    %115 = vector.broadcast %cst_33 : f32 to vector<1x32xf32>
    %116 = arith.addf %115, %114 : vector<1x32xf32>
    %117 = vector.extract_strided_slice %106 {offsets = [0, 64], sizes = [1, 32], strides = [1, 1]} : vector<1x128xf32> to vector<1x32xf32>
    %118 = vector.extract_strided_slice %106 {offsets = [0, 96], sizes = [1, 32], strides = [1, 1]} : vector<1x128xf32> to vector<1x32xf32>
    %cst_34 = arith.constant 5.000000e-01 : f32
    %119 = vector.broadcast %cst_34 : f32 to vector<1x32xf32>
    %120 = arith.mulf %119, %118 : vector<1x32xf32>
    %cst_35 = arith.constant 5.000000e-01 : f32
    %121 = vector.broadcast %cst_35 : f32 to vector<1x32xf32>
    %122 = arith.addf %121, %120 : vector<1x32xf32>
    %123 = arith.mulf %116, %17 : vector<1x32xf32>
    %124 = arith.mulf %111, %117 : vector<1x32xf32>
    %125 = arith.addf %123, %124 : vector<1x32xf32>
    %126 = math.tanh %125 : vector<1x32xf32>
    %127 = arith.mulf %122, %126 : vector<1x32xf32>
    %cst_36 = arith.constant dense<0.000000e+00> : vector<1x32xf32>
    %128 = tpu.matmul %127, %7, %cst_36 {dimension_numbers = #tpu.dot_dimension_numbers<[1], [0], [0], [1], [0, 0, 1, 1], [], []>} : vector<1x32xf32>, vector<32x32xf32>, vector<1x32xf32> -> vector<1x32xf32>
    %129 = vector.broadcast %128 : vector<1x32xf32> to vector<8x32xf32>
    %130 = arith.addf %4, %129 : vector<8x32xf32>
    %131 = math.tanh %130 : vector<8x32xf32>
    %cst_37 = arith.constant dense<0.000000e+00> : vector<8x1xf32>
    %132 = tpu.matmul %131, %8, %cst_37 {dimension_numbers = #tpu.dot_dimension_numbers<[1], [0], [0], [1], [0, 0, 1, 1], [], []>} : vector<8x32xf32>, vector<32x1xf32>, vector<8x1xf32> -> vector<8x1xf32>
    %cst_38 = arith.constant dense<0xFF800000> : vector<1xf32>
    %133 = vector.multi_reduction <maximumf>, %132, %cst_38 [0] : vector<8x1xf32> to vector<1xf32>
    %134 = vector.shape_cast %133 : vector<1xf32> to vector<1x1xf32>
    %135 = vector.broadcast %134 : vector<1x1xf32> to vector<8x1xf32>
    %136 = arith.subf %132, %135 : vector<8x1xf32>
    %137 = math.exp %136 : vector<8x1xf32>
    %cst_39 = arith.constant dense<0.000000e+00> : vector<1xf32>
    %138 = vector.multi_reduction <add>, %137, %cst_39 [0] : vector<8x1xf32> to vector<1xf32>
    %139 = vector.shape_cast %138 : vector<1xf32> to vector<1x1xf32>
    %140 = vector.broadcast %139 : vector<1x1xf32> to vector<8x1xf32>
    %141 = arith.divf %137, %140 : vector<8x1xf32>
    %cst_40 = arith.constant dense<0.000000e+00> : vector<1x32xf32>
    %142 = tpu.matmul %141, %12, %cst_40 {dimension_numbers = #tpu.dot_dimension_numbers<[0], [0], [1], [1], [0, 1, 1, 1], [], []>} : vector<8x1xf32>, vector<8x32xf32>, vector<1x32xf32> -> vector<1x32xf32>
    %143 = vector.broadcast %142 : vector<1x32xf32> to vector<8x32xf32>
    %144 = arith.addf %4, %143 : vector<8x32xf32>
    %145 = math.tanh %144 : vector<8x32xf32>
    %cst_41 = arith.constant dense<0.000000e+00> : vector<8x1xf32>
    %146 = tpu.matmul %145, %8, %cst_41 {dimension_numbers = #tpu.dot_dimension_numbers<[1], [0], [0], [1], [0, 0, 1, 1], [], []>} : vector<8x32xf32>, vector<32x1xf32>, vector<8x1xf32> -> vector<8x1xf32>
    %cst_42 = arith.constant dense<0xFF800000> : vector<1xf32>
    %147 = vector.multi_reduction <maximumf>, %146, %cst_42 [0] : vector<8x1xf32> to vector<1xf32>
    %148 = vector.shape_cast %147 : vector<1xf32> to vector<1x1xf32>
    %149 = vector.broadcast %148 : vector<1x1xf32> to vector<8x1xf32>
    %150 = arith.subf %146, %149 : vector<8x1xf32>
    %151 = math.exp %150 : vector<8x1xf32>
    %cst_43 = arith.constant dense<0.000000e+00> : vector<1xf32>
    %152 = vector.multi_reduction <add>, %151, %cst_43 [0] : vector<8x1xf32> to vector<1xf32>
    %153 = vector.shape_cast %152 : vector<1xf32> to vector<1x1xf32>
    %154 = vector.broadcast %153 : vector<1x1xf32> to vector<8x1xf32>
    %155 = arith.divf %151, %154 : vector<8x1xf32>
    %cst_44 = arith.constant dense<0.000000e+00> : vector<1x32xf32>
    %156 = tpu.matmul %155, %13, %cst_44 {dimension_numbers = #tpu.dot_dimension_numbers<[0], [0], [1], [1], [0, 1, 1, 1], [], []>} : vector<8x1xf32>, vector<8x32xf32>, vector<1x32xf32> -> vector<1x32xf32>
    %157 = vector.broadcast %156 : vector<1x32xf32> to vector<8x32xf32>
    %158 = arith.addf %3, %157 : vector<8x32xf32>
    %159 = math.tanh %158 : vector<8x32xf32>
    %cst_45 = arith.constant dense<0.000000e+00> : vector<8x1xf32>
    %160 = tpu.matmul %159, %9, %cst_45 {dimension_numbers = #tpu.dot_dimension_numbers<[1], [0], [0], [1], [0, 0, 1, 1], [], []>} : vector<8x32xf32>, vector<32x1xf32>, vector<8x1xf32> -> vector<8x1xf32>
    %cst_46 = arith.constant dense<0xFF800000> : vector<1xf32>
    %161 = vector.multi_reduction <maximumf>, %160, %cst_46 [0] : vector<8x1xf32> to vector<1xf32>
    %162 = vector.shape_cast %161 : vector<1xf32> to vector<1x1xf32>
    %163 = vector.broadcast %162 : vector<1x1xf32> to vector<8x1xf32>
    %164 = arith.subf %160, %163 : vector<8x1xf32>
    %165 = math.exp %164 : vector<8x1xf32>
    %cst_47 = arith.constant dense<0.000000e+00> : vector<1xf32>
    %166 = vector.multi_reduction <add>, %165, %cst_47 [0] : vector<8x1xf32> to vector<1xf32>
    %167 = vector.shape_cast %166 : vector<1xf32> to vector<1x1xf32>
    %168 = vector.broadcast %167 : vector<1x1xf32> to vector<8x1xf32>
    %169 = arith.divf %165, %168 : vector<8x1xf32>
    %cst_48 = arith.constant dense<0.000000e+00> : vector<1x129xf32>
    %170 = tpu.matmul %169, %5, %cst_48 {dimension_numbers = #tpu.dot_dimension_numbers<[0], [0], [1], [1], [0, 1, 1, 1], [], []>} : vector<8x1xf32>, vector<8x129xf32>, vector<1x129xf32> -> vector<1x129xf32>
    %171 = vector.extract_strided_slice %170 {offsets = [0, 128], sizes = [1, 1], strides = [1, 1]} : vector<1x129xf32> to vector<1x1xf32>
    %172 = arith.addf %171, %18 : vector<1x1xf32>
    %c1_i32 = arith.constant 1 : i32
    %173 = vector.broadcast %c1_i32 : i32 to vector<1x4xi32>
    %174 = arith.cmpi eq, %28, %173 : vector<1x4xi32>
    %175 = vector.shape_cast %172 : vector<1x1xf32> to vector<1x1xf32>
    %176 = vector.broadcast %175 : vector<1x1xf32> to vector<1x4xf32>
    %177 = arith.select %174, %176, %102 : vector<1x4xi1>, vector<1x4xf32>
    %178 = vector.extract_strided_slice %170 {offsets = [0, 0], sizes = [1, 128], strides = [1, 1]} : vector<1x129xf32> to vector<1x128xf32>
    %179 = arith.addf %178, %16 : vector<1x128xf32>
    %180 = arith.mulf %179, %27 : vector<1x128xf32>
    %181 = math.tanh %180 : vector<1x128xf32>
    %182 = vector.extract_strided_slice %181 {offsets = [0, 0], sizes = [1, 32], strides = [1, 1]} : vector<1x128xf32> to vector<1x32xf32>
    %cst_49 = arith.constant 5.000000e-01 : f32
    %183 = vector.broadcast %cst_49 : f32 to vector<1x32xf32>
    %184 = arith.mulf %183, %182 : vector<1x32xf32>
    %cst_50 = arith.constant 5.000000e-01 : f32
    %185 = vector.broadcast %cst_50 : f32 to vector<1x32xf32>
    %186 = arith.addf %185, %184 : vector<1x32xf32>
    %187 = vector.extract_strided_slice %181 {offsets = [0, 32], sizes = [1, 32], strides = [1, 1]} : vector<1x128xf32> to vector<1x32xf32>
    %cst_51 = arith.constant 5.000000e-01 : f32
    %188 = vector.broadcast %cst_51 : f32 to vector<1x32xf32>
    %189 = arith.mulf %188, %187 : vector<1x32xf32>
    %cst_52 = arith.constant 5.000000e-01 : f32
    %190 = vector.broadcast %cst_52 : f32 to vector<1x32xf32>
    %191 = arith.addf %190, %189 : vector<1x32xf32>
    %192 = vector.extract_strided_slice %181 {offsets = [0, 64], sizes = [1, 32], strides = [1, 1]} : vector<1x128xf32> to vector<1x32xf32>
    %193 = vector.extract_strided_slice %181 {offsets = [0, 96], sizes = [1, 32], strides = [1, 1]} : vector<1x128xf32> to vector<1x32xf32>
    %cst_53 = arith.constant 5.000000e-01 : f32
    %194 = vector.broadcast %cst_53 : f32 to vector<1x32xf32>
    %195 = arith.mulf %194, %193 : vector<1x32xf32>
    %cst_54 = arith.constant 5.000000e-01 : f32
    %196 = vector.broadcast %cst_54 : f32 to vector<1x32xf32>
    %197 = arith.addf %196, %195 : vector<1x32xf32>
    %198 = arith.mulf %191, %17 : vector<1x32xf32>
    %199 = arith.mulf %186, %192 : vector<1x32xf32>
    %200 = arith.addf %198, %199 : vector<1x32xf32>
    %201 = math.tanh %200 : vector<1x32xf32>
    %202 = arith.mulf %197, %201 : vector<1x32xf32>
    %cst_55 = arith.constant dense<0.000000e+00> : vector<1x32xf32>
    %203 = tpu.matmul %202, %7, %cst_55 {dimension_numbers = #tpu.dot_dimension_numbers<[1], [0], [0], [1], [0, 0, 1, 1], [], []>} : vector<1x32xf32>, vector<32x32xf32>, vector<1x32xf32> -> vector<1x32xf32>
    %204 = vector.broadcast %203 : vector<1x32xf32> to vector<8x32xf32>
    %205 = arith.addf %4, %204 : vector<8x32xf32>
    %206 = math.tanh %205 : vector<8x32xf32>
    %cst_56 = arith.constant dense<0.000000e+00> : vector<8x1xf32>
    %207 = tpu.matmul %206, %8, %cst_56 {dimension_numbers = #tpu.dot_dimension_numbers<[1], [0], [0], [1], [0, 0, 1, 1], [], []>} : vector<8x32xf32>, vector<32x1xf32>, vector<8x1xf32> -> vector<8x1xf32>
    %cst_57 = arith.constant dense<0xFF800000> : vector<1xf32>
    %208 = vector.multi_reduction <maximumf>, %207, %cst_57 [0] : vector<8x1xf32> to vector<1xf32>
    %209 = vector.shape_cast %208 : vector<1xf32> to vector<1x1xf32>
    %210 = vector.broadcast %209 : vector<1x1xf32> to vector<8x1xf32>
    %211 = arith.subf %207, %210 : vector<8x1xf32>
    %212 = math.exp %211 : vector<8x1xf32>
    %cst_58 = arith.constant dense<0.000000e+00> : vector<1xf32>
    %213 = vector.multi_reduction <add>, %212, %cst_58 [0] : vector<8x1xf32> to vector<1xf32>
    %214 = vector.shape_cast %213 : vector<1xf32> to vector<1x1xf32>
    %215 = vector.broadcast %214 : vector<1x1xf32> to vector<8x1xf32>
    %216 = arith.divf %212, %215 : vector<8x1xf32>
    %cst_59 = arith.constant dense<0.000000e+00> : vector<1x32xf32>
    %217 = tpu.matmul %216, %12, %cst_59 {dimension_numbers = #tpu.dot_dimension_numbers<[0], [0], [1], [1], [0, 1, 1, 1], [], []>} : vector<8x1xf32>, vector<8x32xf32>, vector<1x32xf32> -> vector<1x32xf32>
    %218 = vector.broadcast %217 : vector<1x32xf32> to vector<8x32xf32>
    %219 = arith.addf %4, %218 : vector<8x32xf32>
    %220 = math.tanh %219 : vector<8x32xf32>
    %cst_60 = arith.constant dense<0.000000e+00> : vector<8x1xf32>
    %221 = tpu.matmul %220, %8, %cst_60 {dimension_numbers = #tpu.dot_dimension_numbers<[1], [0], [0], [1], [0, 0, 1, 1], [], []>} : vector<8x32xf32>, vector<32x1xf32>, vector<8x1xf32> -> vector<8x1xf32>
    %cst_61 = arith.constant dense<0xFF800000> : vector<1xf32>
    %222 = vector.multi_reduction <maximumf>, %221, %cst_61 [0] : vector<8x1xf32> to vector<1xf32>
    %223 = vector.shape_cast %222 : vector<1xf32> to vector<1x1xf32>
    %224 = vector.broadcast %223 : vector<1x1xf32> to vector<8x1xf32>
    %225 = arith.subf %221, %224 : vector<8x1xf32>
    %226 = math.exp %225 : vector<8x1xf32>
    %cst_62 = arith.constant dense<0.000000e+00> : vector<1xf32>
    %227 = vector.multi_reduction <add>, %226, %cst_62 [0] : vector<8x1xf32> to vector<1xf32>
    %228 = vector.shape_cast %227 : vector<1xf32> to vector<1x1xf32>
    %229 = vector.broadcast %228 : vector<1x1xf32> to vector<8x1xf32>
    %230 = arith.divf %226, %229 : vector<8x1xf32>
    %cst_63 = arith.constant dense<0.000000e+00> : vector<1x32xf32>
    %231 = tpu.matmul %230, %13, %cst_63 {dimension_numbers = #tpu.dot_dimension_numbers<[0], [0], [1], [1], [0, 1, 1, 1], [], []>} : vector<8x1xf32>, vector<8x32xf32>, vector<1x32xf32> -> vector<1x32xf32>
    %232 = vector.broadcast %231 : vector<1x32xf32> to vector<8x32xf32>
    %233 = arith.addf %3, %232 : vector<8x32xf32>
    %234 = math.tanh %233 : vector<8x32xf32>
    %cst_64 = arith.constant dense<0.000000e+00> : vector<8x1xf32>
    %235 = tpu.matmul %234, %9, %cst_64 {dimension_numbers = #tpu.dot_dimension_numbers<[1], [0], [0], [1], [0, 0, 1, 1], [], []>} : vector<8x32xf32>, vector<32x1xf32>, vector<8x1xf32> -> vector<8x1xf32>
    %cst_65 = arith.constant dense<0xFF800000> : vector<1xf32>
    %236 = vector.multi_reduction <maximumf>, %235, %cst_65 [0] : vector<8x1xf32> to vector<1xf32>
    %237 = vector.shape_cast %236 : vector<1xf32> to vector<1x1xf32>
    %238 = vector.broadcast %237 : vector<1x1xf32> to vector<8x1xf32>
    %239 = arith.subf %235, %238 : vector<8x1xf32>
    %240 = math.exp %239 : vector<8x1xf32>
    %cst_66 = arith.constant dense<0.000000e+00> : vector<1xf32>
    %241 = vector.multi_reduction <add>, %240, %cst_66 [0] : vector<8x1xf32> to vector<1xf32>
    %242 = vector.shape_cast %241 : vector<1xf32> to vector<1x1xf32>
    %243 = vector.broadcast %242 : vector<1x1xf32> to vector<8x1xf32>
    %244 = arith.divf %240, %243 : vector<8x1xf32>
    %cst_67 = arith.constant dense<0.000000e+00> : vector<1x129xf32>
    %245 = tpu.matmul %244, %5, %cst_67 {dimension_numbers = #tpu.dot_dimension_numbers<[0], [0], [1], [1], [0, 1, 1, 1], [], []>} : vector<8x1xf32>, vector<8x129xf32>, vector<1x129xf32> -> vector<1x129xf32>
    %246 = vector.extract_strided_slice %245 {offsets = [0, 128], sizes = [1, 1], strides = [1, 1]} : vector<1x129xf32> to vector<1x1xf32>
    %247 = arith.addf %246, %18 : vector<1x1xf32>
    %c2_i32 = arith.constant 2 : i32
    %248 = vector.broadcast %c2_i32 : i32 to vector<1x4xi32>
    %249 = arith.cmpi eq, %28, %248 : vector<1x4xi32>
    %250 = vector.shape_cast %247 : vector<1x1xf32> to vector<1x1xf32>
    %251 = vector.broadcast %250 : vector<1x1xf32> to vector<1x4xf32>
    %252 = arith.select %249, %251, %177 : vector<1x4xi1>, vector<1x4xf32>
    %253 = vector.extract_strided_slice %245 {offsets = [0, 0], sizes = [1, 128], strides = [1, 1]} : vector<1x129xf32> to vector<1x128xf32>
    %254 = arith.addf %253, %16 : vector<1x128xf32>
    %255 = arith.mulf %254, %27 : vector<1x128xf32>
    %256 = math.tanh %255 : vector<1x128xf32>
    %257 = vector.extract_strided_slice %256 {offsets = [0, 0], sizes = [1, 32], strides = [1, 1]} : vector<1x128xf32> to vector<1x32xf32>
    %cst_68 = arith.constant 5.000000e-01 : f32
    %258 = vector.broadcast %cst_68 : f32 to vector<1x32xf32>
    %259 = arith.mulf %258, %257 : vector<1x32xf32>
    %cst_69 = arith.constant 5.000000e-01 : f32
    %260 = vector.broadcast %cst_69 : f32 to vector<1x32xf32>
    %261 = arith.addf %260, %259 : vector<1x32xf32>
    %262 = vector.extract_strided_slice %256 {offsets = [0, 32], sizes = [1, 32], strides = [1, 1]} : vector<1x128xf32> to vector<1x32xf32>
    %cst_70 = arith.constant 5.000000e-01 : f32
    %263 = vector.broadcast %cst_70 : f32 to vector<1x32xf32>
    %264 = arith.mulf %263, %262 : vector<1x32xf32>
    %cst_71 = arith.constant 5.000000e-01 : f32
    %265 = vector.broadcast %cst_71 : f32 to vector<1x32xf32>
    %266 = arith.addf %265, %264 : vector<1x32xf32>
    %267 = vector.extract_strided_slice %256 {offsets = [0, 64], sizes = [1, 32], strides = [1, 1]} : vector<1x128xf32> to vector<1x32xf32>
    %268 = vector.extract_strided_slice %256 {offsets = [0, 96], sizes = [1, 32], strides = [1, 1]} : vector<1x128xf32> to vector<1x32xf32>
    %cst_72 = arith.constant 5.000000e-01 : f32
    %269 = vector.broadcast %cst_72 : f32 to vector<1x32xf32>
    %270 = arith.mulf %269, %268 : vector<1x32xf32>
    %cst_73 = arith.constant 5.000000e-01 : f32
    %271 = vector.broadcast %cst_73 : f32 to vector<1x32xf32>
    %272 = arith.addf %271, %270 : vector<1x32xf32>
    %273 = arith.mulf %266, %17 : vector<1x32xf32>
    %274 = arith.mulf %261, %267 : vector<1x32xf32>
    %275 = arith.addf %273, %274 : vector<1x32xf32>
    %276 = math.tanh %275 : vector<1x32xf32>
    %277 = arith.mulf %272, %276 : vector<1x32xf32>
    %cst_74 = arith.constant dense<0.000000e+00> : vector<1x32xf32>
    %278 = tpu.matmul %277, %7, %cst_74 {dimension_numbers = #tpu.dot_dimension_numbers<[1], [0], [0], [1], [0, 0, 1, 1], [], []>} : vector<1x32xf32>, vector<32x32xf32>, vector<1x32xf32> -> vector<1x32xf32>
    %279 = vector.broadcast %278 : vector<1x32xf32> to vector<8x32xf32>
    %280 = arith.addf %4, %279 : vector<8x32xf32>
    %281 = math.tanh %280 : vector<8x32xf32>
    %cst_75 = arith.constant dense<0.000000e+00> : vector<8x1xf32>
    %282 = tpu.matmul %281, %8, %cst_75 {dimension_numbers = #tpu.dot_dimension_numbers<[1], [0], [0], [1], [0, 0, 1, 1], [], []>} : vector<8x32xf32>, vector<32x1xf32>, vector<8x1xf32> -> vector<8x1xf32>
    %cst_76 = arith.constant dense<0xFF800000> : vector<1xf32>
    %283 = vector.multi_reduction <maximumf>, %282, %cst_76 [0] : vector<8x1xf32> to vector<1xf32>
    %284 = vector.shape_cast %283 : vector<1xf32> to vector<1x1xf32>
    %285 = vector.broadcast %284 : vector<1x1xf32> to vector<8x1xf32>
    %286 = arith.subf %282, %285 : vector<8x1xf32>
    %287 = math.exp %286 : vector<8x1xf32>
    %cst_77 = arith.constant dense<0.000000e+00> : vector<1xf32>
    %288 = vector.multi_reduction <add>, %287, %cst_77 [0] : vector<8x1xf32> to vector<1xf32>
    %289 = vector.shape_cast %288 : vector<1xf32> to vector<1x1xf32>
    %290 = vector.broadcast %289 : vector<1x1xf32> to vector<8x1xf32>
    %291 = arith.divf %287, %290 : vector<8x1xf32>
    %cst_78 = arith.constant dense<0.000000e+00> : vector<1x32xf32>
    %292 = tpu.matmul %291, %12, %cst_78 {dimension_numbers = #tpu.dot_dimension_numbers<[0], [0], [1], [1], [0, 1, 1, 1], [], []>} : vector<8x1xf32>, vector<8x32xf32>, vector<1x32xf32> -> vector<1x32xf32>
    %293 = vector.broadcast %292 : vector<1x32xf32> to vector<8x32xf32>
    %294 = arith.addf %4, %293 : vector<8x32xf32>
    %295 = math.tanh %294 : vector<8x32xf32>
    %cst_79 = arith.constant dense<0.000000e+00> : vector<8x1xf32>
    %296 = tpu.matmul %295, %8, %cst_79 {dimension_numbers = #tpu.dot_dimension_numbers<[1], [0], [0], [1], [0, 0, 1, 1], [], []>} : vector<8x32xf32>, vector<32x1xf32>, vector<8x1xf32> -> vector<8x1xf32>
    %cst_80 = arith.constant dense<0xFF800000> : vector<1xf32>
    %297 = vector.multi_reduction <maximumf>, %296, %cst_80 [0] : vector<8x1xf32> to vector<1xf32>
    %298 = vector.shape_cast %297 : vector<1xf32> to vector<1x1xf32>
    %299 = vector.broadcast %298 : vector<1x1xf32> to vector<8x1xf32>
    %300 = arith.subf %296, %299 : vector<8x1xf32>
    %301 = math.exp %300 : vector<8x1xf32>
    %cst_81 = arith.constant dense<0.000000e+00> : vector<1xf32>
    %302 = vector.multi_reduction <add>, %301, %cst_81 [0] : vector<8x1xf32> to vector<1xf32>
    %303 = vector.shape_cast %302 : vector<1xf32> to vector<1x1xf32>
    %304 = vector.broadcast %303 : vector<1x1xf32> to vector<8x1xf32>
    %305 = arith.divf %301, %304 : vector<8x1xf32>
    %cst_82 = arith.constant dense<0.000000e+00> : vector<1x32xf32>
    %306 = tpu.matmul %305, %13, %cst_82 {dimension_numbers = #tpu.dot_dimension_numbers<[0], [0], [1], [1], [0, 1, 1, 1], [], []>} : vector<8x1xf32>, vector<8x32xf32>, vector<1x32xf32> -> vector<1x32xf32>
    %307 = vector.broadcast %306 : vector<1x32xf32> to vector<8x32xf32>
    %308 = arith.addf %3, %307 : vector<8x32xf32>
    %309 = math.tanh %308 : vector<8x32xf32>
    %cst_83 = arith.constant dense<0.000000e+00> : vector<8x1xf32>
    %310 = tpu.matmul %309, %9, %cst_83 {dimension_numbers = #tpu.dot_dimension_numbers<[1], [0], [0], [1], [0, 0, 1, 1], [], []>} : vector<8x32xf32>, vector<32x1xf32>, vector<8x1xf32> -> vector<8x1xf32>
    %cst_84 = arith.constant dense<0xFF800000> : vector<1xf32>
    %311 = vector.multi_reduction <maximumf>, %310, %cst_84 [0] : vector<8x1xf32> to vector<1xf32>
    %312 = vector.shape_cast %311 : vector<1xf32> to vector<1x1xf32>
    %313 = vector.broadcast %312 : vector<1x1xf32> to vector<8x1xf32>
    %314 = arith.subf %310, %313 : vector<8x1xf32>
    %315 = math.exp %314 : vector<8x1xf32>
    %cst_85 = arith.constant dense<0.000000e+00> : vector<1xf32>
    %316 = vector.multi_reduction <add>, %315, %cst_85 [0] : vector<8x1xf32> to vector<1xf32>
    %317 = vector.shape_cast %316 : vector<1xf32> to vector<1x1xf32>
    %318 = vector.broadcast %317 : vector<1x1xf32> to vector<8x1xf32>
    %319 = arith.divf %315, %318 : vector<8x1xf32>
    %cst_86 = arith.constant dense<0.000000e+00> : vector<1x129xf32>
    %320 = tpu.matmul %319, %5, %cst_86 {dimension_numbers = #tpu.dot_dimension_numbers<[0], [0], [1], [1], [0, 1, 1, 1], [], []>} : vector<8x1xf32>, vector<8x129xf32>, vector<1x129xf32> -> vector<1x129xf32>
    %321 = vector.extract_strided_slice %320 {offsets = [0, 128], sizes = [1, 1], strides = [1, 1]} : vector<1x129xf32> to vector<1x1xf32>
    %322 = arith.addf %321, %18 : vector<1x1xf32>
    %c3_i32 = arith.constant 3 : i32
    %323 = vector.broadcast %c3_i32 : i32 to vector<1x4xi32>
    %324 = arith.cmpi eq, %28, %323 : vector<1x4xi32>
    %325 = vector.shape_cast %322 : vector<1x1xf32> to vector<1x1xf32>
    %326 = vector.broadcast %325 : vector<1x1xf32> to vector<1x4xf32>
    %327 = arith.select %324, %326, %252 : vector<1x4xi1>, vector<1x4xf32>
    %c0_87 = arith.constant 0 : index
    %c0_88 = arith.constant 0 : index
    %328 = vector.load %arg4[%c0_87, %c0_88] : memref<1x4xf32, #tpu.memory_space<vmem>>, vector<1x4xf32>
    tpu.vector_store %arg4[%c0_87, %c0_88], %327 {strides = array<i32>} : memref<1x4xf32, #tpu.memory_space<vmem>>, vector<1x4xf32>,
    return
  }
}

</mosaic_0001>

<llo_original>
// kernel: tpu_custom_call.1
$region0: #{tpu_custom_call.1}
  #allocation0 [shape = 'u32[]', space=smem, size = 0x4, offset = 0x4, fixed_abs, tag = 'smem constant byte address 0x4 - core index']
  #allocation1 [shape = 'u32[144,128]{1,0:T(1,128)}', space=vmem, size = 0x12000, scoped, tag = 'internal scratch']
  %s0 = inlined_call_operand.hbm [shape: f32[8,32], index: 0, kind: input, shape index: {}]
  %s1 = inlined_call_operand.hbm [shape: f32[32,193], index: 1, kind: input, shape index: {}]
  %s2 = inlined_call_operand.hbm [shape: f32[32,66], index: 2, kind: input, shape index: {}]
  %s3 = inlined_call_operand.vmem [shape: f32[3,128], index: 3, kind: input, shape index: {}]
  %s4 = inlined_call_operand.hbm [shape: f32[1,4], index: 4, kind: output, shape index: {}]
  %s5 = sld [smem:[#allocation0]]
  $region38: #{tpu_custom_call.1} parent=0
    _
  %s7 = ssub.s32 1, %s5
  %s8 = scalar_select 0, %s7, %s5
  $region1: #{tpu_custom_call.1} parent=0
    #allocation2 [shape = 'u8[4096]{0}', space=vmem, size = 0x1000, scoped, tag = 'input window, operand 0, single buffered']
    #allocation3 [shape = 's32[1]{0}', space=sflag, size = 0x4, scoped, tag = 'scoped memory for tpu_custom_call.1']
    #allocation4 [shape = 's32[1]{0}', space=sflag, size = 0x4, scoped, tag = 'scoped memory for tpu_custom_call.1']
    #allocation5 [shape = 'u8[32768]{0}', space=vmem, size = 0x8000, scoped, tag = 'input window, operand 1, single buffered']
    #allocation6 [shape = 's32[1]{0}', space=sflag, size = 0x4, scoped, tag = 'scoped memory for tpu_custom_call.1']
    #allocation7 [shape = 'u8[16384]{0}', space=vmem, size = 0x4000, scoped, tag = 'input window, operand 2, single buffered']
    #allocation8 [shape = 'u8[512]{0}', space=vmem, size = 0x400, scoped, tag = 'output window, operand 0, single buffered']
    %9 = vsyncpa [#allocation3], 0
    %10 = vsyncpa [#allocation6], 0
    %11 = vsyncpa [#allocation4], 0
    // Predicated region
    $region2: #{tpu_custom_call.1} parent=1 // pred_check
      _
    $region3: #{tpu_custom_call.1} parent=1 // pred_check_branch
      %13 = sbr.rel (0) target = $region5
    $region4: #{tpu_custom_call.1} parent=1 // pred_region
      %s15 = ssub.s32 128, 128
      %16 = vsyncadd [#allocation3], %s15
      %s18 = sshll.u32 [#allocation2], 4
      %s19 = int_to_ptr.vmem [resolvable:$true] %s18
      %21 = dma.hbm_to_vmem [thread:$0]  %s0, 128, %s19, [#allocation3]
    $region5: #{tpu_custom_call.1} parent=1 // pred_fallthru
      _
    // Predicated region
    $region6: #{tpu_custom_call.1} parent=1 // pred_check
      _
    $region7: #{tpu_custom_call.1} parent=1 // pred_check_branch
      %23 = sbr.rel (0) target = $region9
    $region8: #{tpu_custom_call.1} parent=1 // pred_region
      %s25 = ssub.s32 1024, 1024
      %26 = vsyncadd [#allocation6], %s25
      %s27 = sshll.u32 [#allocation5], 4
      %s28 = int_to_ptr.vmem [resolvable:$true] %s27
      %33 = dma.hbm_to_vmem [thread:$0]  %s1, 1024, %s28, [#allocation6], 256, 256, 16
    $region9: #{tpu_custom_call.1} parent=1 // pred_fallthru
      _
    // Predicated region
    $region10: #{tpu_custom_call.1} parent=1 // pred_check
      _
    $region11: #{tpu_custom_call.1} parent=1 // pred_check_branch
      %35 = sbr.rel (0) target = $region13
    $region12: #{tpu_custom_call.1} parent=1 // pred_region
      %s37 = ssub.s32 512, 512
      %38 = vsyncadd [#allocation6], %s37
      %s39 = sshll.u32 [#allocation7], 4
      %s40 = int_to_ptr.vmem [resolvable:$true] %s39
      %45 = dma.hbm_to_vmem [thread:$0]  %s2, 512, %s40, [#allocation6], 128, 128, 8
    $region13: #{tpu_custom_call.1} parent=1 // pred_fallthru
      _
    // Predicated region
    $region14: #{tpu_custom_call.1} parent=1 // pred_check
      _
    $region15: #{tpu_custom_call.1} parent=1 // pred_check_branch
      %47 = sbr.rel (0) target = $region17
    $region16: #{tpu_custom_call.1} parent=1 // pred_region
      _
    $region17: #{tpu_custom_call.1} parent=1 // pred_fallthru
      _
    // Predicated region
    $region18: #{tpu_custom_call.1} parent=1 // pred_check
      _
    $region19: #{tpu_custom_call.1} parent=1 // pred_check_branch
      %49 = sbr.rel (0) target = $region21
    $region20: #{tpu_custom_call.1} parent=1 // pred_region
      %50 = dma.done [#allocation3], 128
    $region21: #{tpu_custom_call.1} parent=1 // pred_fallthru
      _
    // Predicated region
    $region22: #{tpu_custom_call.1} parent=1 // pred_check
      _
    $region23: #{tpu_custom_call.1} parent=1 // pred_check_branch
      %52 = sbr.rel (0) target = $region25
    $region24: #{tpu_custom_call.1} parent=1 // pred_region
      %53 = dma.done [#allocation6], 1024
    $region25: #{tpu_custom_call.1} parent=1 // pred_fallthru
      _
    // Predicated region
    $region26: #{tpu_custom_call.1} parent=1 // pred_check
      _
    $region27: #{tpu_custom_call.1} parent=1 // pred_check_branch
      %55 = sbr.rel (0) target = $region29
    $region28: #{tpu_custom_call.1} parent=1 // pred_region
      %56 = dma.done [#allocation6], 512
    $region29: #{tpu_custom_call.1} parent=1 // pred_fallthru
      _
    %v57 = vld [vmem:[#allocation2] sm:$0xff]
    %v58 = vld [vmem:[#allocation5] sm:$0xff]
    %v59 = vld [vmem:[#allocation5 + $0x8] sm:$0xff]
    %v60 = vld [vmem:[#allocation5 + $0x10] sm:$0xff]
    %v61 = vld [vmem:[#allocation5 + $0x18] sm:$0xff]
    %v62 = vld [vmem:[#allocation5 + $0x20] sm:$0xff]
    %v63 = vld [vmem:[#allocation5 + $0x28] sm:$0xff]
    %v64 = vld [vmem:[#allocation5 + $0x30] sm:$0xff]
    %v65 = vld [vmem:[#allocation5 + $0x38] sm:$0xff]
    %vm66 = vcmask 261120
    %v68 = vsel %vm66, %v57, 0
    %70 = vmatprep.subr.mxu0 %v59
    %71 = vmatpush1.msra.mxu0 %v58
    %72 = vmatprep.subr.mxu0 %v61
    %73 = vmatpush1.msra.mxu0 %v60
    %74 = vmatprep.subr.mxu0 %v63
    %75 = vmatpush1.msra.mxu0 %v62
    %76 = vmatprep.subr.mxu0 %v65
    %77 = vmatpush1.msra.mxu0 %v64
    %78 = vmatprep.subr.mxu0 0.0
    %79 = vmatpush1.msra.mxu0 0.0
    %80 = vmatprep.subr.mxu0 0.0
    %81 = vmatpush1.msra.mxu0 0.0
    %82 = vmatprep.subr.mxu0 0.0
    %83 = vmatpush1.msra.mxu0 0.0
    %84 = vmatprep.subr.mxu0 0.0
    %85 = vmatpush1.msra.mxu0 0.0
    %86 = vmatprep.subr.mxu0 0.0
    %87 = vmatpush1.msra.mxu0 0.0
    %88 = vmatprep.subr.mxu0 0.0
    %89 = vmatpush1.msra.mxu0 0.0
    %90 = vmatprep.subr.mxu0 0.0
    %91 = vmatpush1.msra.mxu0 0.0
    %92 = vmatprep.subr.mxu0 0.0
    %93 = vmatpush1.msra.mxu0 0.0
    %94 = vmatprep.subr.mxu0 0.0
    %95 = vmatpush1.msra.mxu0 0.0
    %96 = vmatprep.subr.mxu0 0.0
    %97 = vmatpush1.msra.mxu0 0.0
    %98 = vmatprep.subr.mxu0 0.0
    %99 = vmatpush1.msra.mxu0 0.0
    %100 = vmatprep.subr.mxu0 0.0
    %101 = vmatpush1.msra.mxu0 0.0
    %102 = vmatprep.subr.mxu0 0.0
    %103 = vmatpush1.msra.mxu0 0.0
    %104 = vmatprep.subr.mxu0 0.0
    %105 = vmatpush1.msra.mxu0 0.0
    %106 = vmatprep.subr.mxu0 0.0
    %107 = vmatpush1.msra.mxu0 0.0
    %108 = vmatprep.subr.mxu0 0.0
    %109 = vmatpush1.msra.mxu0 0.0
    %110 = vmatprep.subr.mxu0 0.0
    %111 = vmatpush1.msra.mxu0 0.0
    %112 = vmatprep.subr.mxu0 0.0
    %113 = vmatpush1.msra.mxu0 0.0
    %114 = vmatprep.subr.mxu0 0.0
    %115 = vmatpush1.msra.mxu0 0.0
    %116 = vmatprep.subr.mxu0 0.0
    %117 = vmatpush1.msra.mxu0 0.0
    %118 = vmatprep.subr.mxu0 0.0
    %119 = vmatpush1.msra.mxu0 0.0
    %120 = vmatprep.subr.mxu0 0.0
    %121 = vmatpush1.msra.mxu0 0.0
    %122 = vmatprep.subr.mxu0 0.0
    %123 = vmatpush1.msra.mxu0 0.0
    %124 = vmatprep.subr.mxu0 0.0
    %125 = vmatpush1.msra.mxu0 0.0
    %126 = vmatprep.subr.mxu0 0.0
    %127 = vmatpush1.msra.mxu0 0.0
    %128 = vmatprep.subr.mxu0 0.0
    %129 = vmatpush1.msra.mxu0 0.0
    %130 = vmatprep.subr.mxu0 0.0
    %131 = vmatpush1.msra.mxu0 0.0
    %132 = vmatprep.subr.mxu0 0.0
    %133 = vmatpush1.msra.mxu0 0.0
    %134 = vmatprep.mubr.f32.mxu0 0.0
    %135 = vmatmul.mubr.f32.gmra.mrb[0].mxu0 %v68
    %v136 = vpop.f32.mrb[0].mxu0
    %v137 = vadd.f32 0.0, %v136
    %v138 = vpop.f32.mrb[0].mxu0
    %v139 = vadd.f32 0.0, %v138
    %140 = vdwg.mxu0
    %v141 = vld [vmem:[#allocation7] sm:$0xff]
    %v142 = vld [vmem:[#allocation7 + $0x8] sm:$0xff]
    %v143 = vld [vmem:[#allocation7 + $0x10] sm:$0xff]
    %v144 = vld [vmem:[#allocation7 + $0x18] sm:$0xff]
    %146 = vrot.lane.b32.xlu0 %v137, 96
    %v147 = vpop.permute.xlu0 %146
    %v148 = vsel %vm66, %v147, 0
    %150 = vmatprep.subr.mxu0 0.0
    %151 = vmatpush1.msra.mxu0 %v141
    %152 = vmatprep.subr.mxu0 0.0
    %153 = vmatpush1.msra.mxu0 %v142
    %154 = vmatprep.subr.mxu0 0.0
    %155 = vmatpush1.msra.mxu0 %v143
    %156 = vmatprep.subr.mxu0 0.0
    %157 = vmatpush1.msra.mxu0 %v144
    %158 = vmatprep.subr.mxu0 0.0
    %159 = vmatpush1.msra.mxu0 0.0
    %160 = vmatprep.subr.mxu0 0.0
    %161 = vmatpush1.msra.mxu0 0.0
    %162 = vmatprep.subr.mxu0 0.0
    %163 = vmatpush1.msra.mxu0 0.0
    %164 = vmatprep.subr.mxu0 0.0
    %165 = vmatpush1.msra.mxu0 0.0
    %166 = vmatprep.subr.mxu0 0.0
    %167 = vmatpush1.msra.mxu0 0.0
    %168 = vmatprep.subr.mxu0 0.0
    %169 = vmatpush1.msra.mxu0 0.0
    %170 = vmatprep.subr.mxu0 0.0
    %171 = vmatpush1.msra.mxu0 0.0
    %172 = vmatprep.subr.mxu0 0.0
    %173 = vmatpush1.msra.mxu0 0.0
    %174 = vmatprep.subr.mxu0 0.0
    %175 = vmatpush1.msra.mxu0 0.0
    %176 = vmatprep.subr.mxu0 0.0
    %177 = vmatpush1.msra.mxu0 0.0
    %178 = vmatprep.subr.mxu0 0.0
    %179 = vmatpush1.msra.mxu0 0.0
    %180 = vmatprep.subr.mxu0 0.0
    %181 = vmatpush1.msra.mxu0 0.0
    %182 = vmatprep.subr.mxu0 0.0
    %183 = vmatpush1.msra.mxu0 0.0
    %184 = vmatprep.subr.mxu0 0.0
    %185 = vmatpush1.msra.mxu0 0.0
    %186 = vmatprep.subr.mxu0 0.0
    %187 = vmatpush1.msra.mxu0 0.0
    %188 = vmatprep.subr.mxu0 0.0
    %189 = vmatpush1.msra.mxu0 0.0
    %190 = vmatprep.subr.mxu0 0.0
    %191 = vmatpush1.msra.mxu0 0.0
    %192 = vmatprep.subr.mxu0 0.0
    %193 = vmatpush1.msra.mxu0 0.0
    %194 = vmatprep.subr.mxu0 0.0
    %195 = vmatpush1.msra.mxu0 0.0
    %196 = vmatprep.subr.mxu0 0.0
    %197 = vmatpush1.msra.mxu0 0.0
    %198 = vmatprep.subr.mxu0 0.0
    %199 = vmatpush1.msra.mxu0 0.0
    %200 = vmatprep.subr.mxu0 0.0
    %201 = vmatpush1.msra.mxu0 0.0
    %202 = vmatprep.subr.mxu0 0.0
    %203 = vmatpush1.msra.mxu0 0.0
    %204 = vmatprep.subr.mxu0 0.0
    %205 = vmatpush1.msra.mxu0 0.0
    %206 = vmatprep.subr.mxu0 0.0
    %207 = vmatpush1.msra.mxu0 0.0
    %208 = vmatprep.subr.mxu0 0.0
    %209 = vmatpush1.msra.mxu0 0.0
    %210 = vmatprep.subr.mxu0 0.0
    %211 = vmatpush1.msra.mxu0 0.0
    %212 = vmatprep.subr.mxu0 0.0
    %213 = vmatpush1.msra.mxu0 0.0
    %214 = vmatprep.mubr.f32.mxu0 0.0
    %215 = vmatmul.mubr.f32.gmra.mrb[0].mxu0 %v148
    %v216 = vpop.f32.mrb[0].mxu0
    %v217 = vadd.f32 0.0, %v216
    %v218 = vpop.f32.mrb[0].mxu0
    %219 = vdwg.mxu0
    %v220 = vld [vmem:[%s3] sm:$0x7]
    %v221 = vlaneseq
    %v222 = vand.u32 %v221, 127
    %vm223 = vcmp.ge.s32.totalorder %v222, 64
    %vm224 = vcmp.lt.s32.totalorder %v222, 96
    %vm225 = vmand %vm223, %vm224
    %v226 = vsel %vm225, 1.0, 0.5
    %v227 = vmul.f32 %v220, %v226
    %v228 = vtanh.pop %v227
    %v229 = vmul.f32 %v228, 0.5
    %v230 = vadd.f32 %v229, 0.5
    %v232 = vrot.slane %v220, 2
    %233 = vrot.lane.b32.xlu0 %v232, 32
    %v234 = vpop.permute.xlu0 %233
    %v236 = vmul.f32 %v230, %v234
    %238 = vrot.lane.b32.xlu0 %v228, 64
    %v239 = vpop.permute.xlu0 %238
    %v241 = vmul.f32 %v230, %v239
    %243 = vrot.lane.b32.xlu0 %v241, 32
    %v244 = vpop.permute.xlu0 %243
    %v246 = vadd.f32 %v236, %v244
    %v247 = vtanh.pop %v246
    %249 = vrot.lane.b32.xlu0 %v247, 64
    %v250 = vpop.permute.xlu0 %249
    %v252 = vmul.f32 %v230, %v250
    %254 = vrot.lane.b32.xlu0 %v252, 32
    %v255 = vpop.permute.xlu0 %254
    %v256 = vsel %vm66, %v255, 0
    %258 = vmatprep.subr.mxu0 0.0
    %259 = vmatpush1.msra.mxu0 %v141
    %260 = vmatprep.subr.mxu0 0.0
    %261 = vmatpush1.msra.mxu0 %v142
    %262 = vmatprep.subr.mxu0 0.0
    %263 = vmatpush1.msra.mxu0 %v143
    %264 = vmatprep.subr.mxu0 0.0
    %265 = vmatpush1.msra.mxu0 %v144
    %266 = vmatprep.subr.mxu0 0.0
    %267 = vmatpush1.msra.mxu0 0.0
    %268 = vmatprep.subr.mxu0 0.0
    %269 = vmatpush1.msra.mxu0 0.0
    %270 = vmatprep.subr.mxu0 0.0
    %271 = vmatpush1.msra.mxu0 0.0
    %272 = vmatprep.subr.mxu0 0.0
    %273 = vmatpush1.msra.mxu0 0.0
    %274 = vmatprep.subr.mxu0 0.0
    %275 = vmatpush1.msra.mxu0 0.0
    %276 = vmatprep.subr.mxu0 0.0
    %277 = vmatpush1.msra.mxu0 0.0
    %278 = vmatprep.subr.mxu0 0.0
    %279 = vmatpush1.msra.mxu0 0.0
    %280 = vmatprep.subr.mxu0 0.0
    %281 = vmatpush1.msra.mxu0 0.0
    %282 = vmatprep.subr.mxu0 0.0
    %283 = vmatpush1.msra.mxu0 0.0
    %284 = vmatprep.subr.mxu0 0.0
    %285 = vmatpush1.msra.mxu0 0.0
    %286 = vmatprep.subr.mxu0 0.0
    %287 = vmatpush1.msra.mxu0 0.0
    %288 = vmatprep.subr.mxu0 0.0
    %289 = vmatpush1.msra.mxu0 0.0
    %290 = vmatprep.subr.mxu0 0.0
    %291 = vmatpush1.msra.mxu0 0.0
    %292 = vmatprep.subr.mxu0 0.0
    %293 = vmatpush1.msra.mxu0 0.0
    %294 = vmatprep.subr.mxu0 0.0
    %295 = vmatpush1.msra.mxu0 0.0
    %296 = vmatprep.subr.mxu0 0.0
    %297 = vmatpush1.msra.mxu0 0.0
    %298 = vmatprep.subr.mxu0 0.0
    %299 = vmatpush1.msra.mxu0 0.0
    %300 = vmatprep.subr.mxu0 0.0
    %301 = vmatpush1.msra.mxu0 0.0
    %302 = vmatprep.subr.mxu0 0.0
    %303 = vmatpush1.msra.mxu0 0.0
    %304 = vmatprep.subr.mxu0 0.0
    %305 = vmatpush1.msra.mxu0 0.0
    %306 = vmatprep.subr.mxu0 0.0
    %307 = vmatpush1.msra.mxu0 0.0
    %308 = vmatprep.subr.mxu0 0.0
    %309 = vmatpush1.msra.mxu0 0.0
    %310 = vmatprep.subr.mxu0 0.0
    %311 = vmatpush1.msra.mxu0 0.0
    %312 = vmatprep.subr.mxu0 0.0
    %313 = vmatpush1.msra.mxu0 0.0
    %314 = vmatprep.subr.mxu0 0.0
    %315 = vmatpush1.msra.mxu0 0.0
    %316 = vmatprep.subr.mxu0 0.0
    %317 = vmatpush1.msra.mxu0 0.0
    %318 = vmatprep.subr.mxu0 0.0
    %319 = vmatpush1.msra.mxu0 0.0
    %320 = vmatprep.subr.mxu0 0.0
    %321 = vmatpush1.msra.mxu0 0.0
    %322 = vmatprep.mubr.f32.mxu0 0.0
    %323 = vmatmul.mubr.f32.gmra.mrb[0].mxu0 %v256
    %v324 = vpop.f32.mrb[0].mxu0
    %v325 = vadd.f32 0.0, %v324
    %v326 = vpop.f32.mrb[0].mxu0
    %327 = vdwg.mxu0
    %v328 = vlaneseq
    %v329 = vshrl.u32 %v328, 7
    %v330 = vsub.s32 0, %v329
    %v331 = vrot.slane %v325, %v330
    %333 = vrot.lane.b32.xlu0 %v331, 32
    %v334 = vpop.permute.xlu0 %333
    %v336 = vadd.f32 %v137, %v334
    %v337 = vtanh.pop %v336
    %339 = vrot.lane.b32.xlu0 %v337, 96
    %v340 = vpop.permute.xlu0 %339
    %345 = vrot.lane.b32.xlu0 %v141, 64
    %v346 = vpop.permute.xlu0 %345
    %347 = vrot.lane.b32.xlu0 %v142, 64
    %v348 = vpop.permute.xlu0 %347
    %349 = vrot.lane.b32.xlu0 %v143, 64
    %v350 = vpop.permute.xlu0 %349
    %351 = vrot.lane.b32.xlu0 %v144, 64
    %v352 = vpop.permute.xlu0 %351
    %v357 = vsel %vm66, %v340, 0
    %359 = vmatprep.subr.mxu0 0.0
    %360 = vmatpush1.msra.mxu0 %v346
    %361 = vmatprep.subr.mxu0 0.0
    %362 = vmatpush1.msra.mxu0 %v348
    %363 = vmatprep.subr.mxu0 0.0
    %364 = vmatpush1.msra.mxu0 %v350
    %365 = vmatprep.subr.mxu0 0.0
    %366 = vmatpush1.msra.mxu0 %v352
    %367 = vmatprep.subr.mxu0 0.0
    %368 = vmatpush1.msra.mxu0 0.0
    %369 = vmatprep.subr.mxu0 0.0
    %370 = vmatpush1.msra.mxu0 0.0
    %371 = vmatprep.subr.mxu0 0.0
    %372 = vmatpush1.msra.mxu0 0.0
    %373 = vmatprep.subr.mxu0 0.0
    %374 = vmatpush1.msra.mxu0 0.0
    %375 = vmatprep.subr.mxu0 0.0
    %376 = vmatpush1.msra.mxu0 0.0
    %377 = vmatprep.subr.mxu0 0.0
    %378 = vmatpush1.msra.mxu0 0.0
    %379 = vmatprep.subr.mxu0 0.0
    %380 = vmatpush1.msra.mxu0 0.0
    %381 = vmatprep.subr.mxu0 0.0
    %382 = vmatpush1.msra.mxu0 0.0
    %383 = vmatprep.subr.mxu0 0.0
    %384 = vmatpush1.msra.mxu0 0.0
    %385 = vmatprep.subr.mxu0 0.0
    %386 = vmatpush1.msra.mxu0 0.0
    %387 = vmatprep.subr.mxu0 0.0
    %388 = vmatpush1.msra.mxu0 0.0
    %389 = vmatprep.subr.mxu0 0.0
    %390 = vmatpush1.msra.mxu0 0.0
    %391 = vmatprep.subr.mxu0 0.0
    %392 = vmatpush1.msra.mxu0 0.0
    %393 = vmatprep.subr.mxu0 0.0
    %394 = vmatpush1.msra.mxu0 0.0
    %395 = vmatprep.subr.mxu0 0.0
    %396 = vmatpush1.msra.mxu0 0.0
    %397 = vmatprep.subr.mxu0 0.0
    %398 = vmatpush1.msra.mxu0 0.0
    %399 = vmatprep.subr.mxu0 0.0
    %400 = vmatpush1.msra.mxu0 0.0
    %401 = vmatprep.subr.mxu0 0.0
    %402 = vmatpush1.msra.mxu0 0.0
    %403 = vmatprep.subr.mxu0 0.0
    %404 = vmatpush1.msra.mxu0 0.0
    %405 = vmatprep.subr.mxu0 0.0
    %406 = vmatpush1.msra.mxu0 0.0
    %407 = vmatprep.subr.mxu0 0.0
    %408 = vmatpush1.msra.mxu0 0.0
    %409 = vmatprep.subr.mxu0 0.0
    %410 = vmatpush1.msra.mxu0 0.0
    %411 = vmatprep.subr.mxu0 0.0
    %412 = vmatpush1.msra.mxu0 0.0
    %413 = vmatprep.subr.mxu0 0.0
    %414 = vmatpush1.msra.mxu0 0.0
    %415 = vmatprep.subr.mxu0 0.0
    %416 = vmatpush1.msra.mxu0 0.0
    %417 = vmatprep.subr.mxu0 0.0
    %418 = vmatpush1.msra.mxu0 0.0
    %419 = vmatprep.subr.mxu0 0.0
    %420 = vmatpush1.msra.mxu0 0.0
    %421 = vmatprep.subr.mxu0 0.0
    %422 = vmatpush1.msra.mxu0 0.0
    %423 = vmatprep.mubr.f32.mxu0 0.0
    %424 = vmatmul.mubr.f32.gmra.mrb[0].mxu0 %v357
    %v425 = vpop.f32.mrb[0].mxu0
    %v426 = vadd.f32 0.0, %v425
    %v427 = vpop.f32.mrb[0].mxu0
    %428 = vdwg.mxu0
    %vm429 = vcmask 7168
    %v430 = vsel %vm429, %v426, -inf
    %v431 = vrot.slane %v430, 4
    %v432 = vmax.f32 %v430, %v431
    %v433 = vrot.slane %v432, 2
    %v434 = vmax.f32 %v432, %v433
    %v435 = vrot.slane %v434, 1
    %v436 = vmax.f32 %v434, %v435
    %v437 = vsub.f32 %v426, %v436
    %v438 = vmul.f32 %v437, 1.442695
    %v439 = vpow.pop %v438
    %v440 = vsel %vm429, %v439, 0.0
    %v441 = vrot.slane %v440, 4
    %v442 = vadd.f32 %v440, %v441
    %v443 = vrot.slane %v442, 2
    %v444 = vadd.f32 %v442, %v443
    %v445 = vrot.slane %v444, 1
    %v446 = vadd.f32 %v444, %v445
    %v447 = vrcp.pop %v446
    %v448 = vmul.f32 %v439, %v447
    %449 = vxpose.xlu0.b32.start [1/16] %v448, 128
    %450 = vxpose.xlu0.b32.cont [2/16] 0.0, 128
    %451 = vxpose.xlu0.b32.cont [3/16] 0.0, 128
    %452 = vxpose.xlu0.b32.cont [4/16] 0.0, 128
    %453 = vxpose.xlu0.b32.cont [5/16] 0.0, 128
    %454 = vxpose.xlu0.b32.cont [6/16] 0.0, 128
    %455 = vxpose.xlu0.b32.cont [7/16] 0.0, 128
    %456 = vxpose.xlu0.b32.cont [8/16] 0.0, 128
    %457 = vxpose.xlu0.b32.cont [9/16] 0.0, 128
    %458 = vxpose.xlu0.b32.cont [10/16] 0.0, 128
    %459 = vxpose.xlu0.b32.cont [11/16] 0.0, 128
    %460 = vxpose.xlu0.b32.cont [12/16] 0.0, 128
    %461 = vxpose.xlu0.b32.cont [13/16] 0.0, 128
    %462 = vxpose.xlu0.b32.cont [14/16] 0.0, 128
    %463 = vxpose.xlu0.b32.cont [15/16] 0.0, 128
    %464 = vxpose.xlu0.b32.end [16/16] 0.0, 128
    %v465 = vpop.trf.xlu0
    %v466 = vpop.trf.xlu0
    %v467 = vpop.trf.xlu0
    %v468 = vpop.trf.xlu0
    %v469 = vpop.trf.xlu0
    %v470 = vpop.trf.xlu0
    %v471 = vpop.trf.xlu0
    %v472 = vpop.trf.xlu0
    %v473 = vpop.trf.xlu0
    %v474 = vpop.trf.xlu0
    %v475 = vpop.trf.xlu0
    %v476 = vpop.trf.xlu0
    %v477 = vpop.trf.xlu0
    %v478 = vpop.trf.xlu0
    %v479 = vpop.trf.xlu0
    %v480 = vpop.trf.xlu0
    %vm481 = vcmask 64512
    %v483 = vsel %vm481, %v465, 0
    %485 = vmatprep.subr.mxu0 0.0
    %486 = vmatpush1.msra.mxu0 %v217
    %487 = vmatprep.subr.mxu0 0.0
    %488 = vmatpush1.msra.mxu0 0.0
    %489 = vmatprep.subr.mxu0 0.0
    %490 = vmatpush1.msra.mxu0 0.0
    %491 = vmatprep.subr.mxu0 0.0
    %492 = vmatpush1.msra.mxu0 0.0
    %493 = vmatprep.subr.mxu0 0.0
    %494 = vmatpush1.msra.mxu0 0.0
    %495 = vmatprep.subr.mxu0 0.0
    %496 = vmatpush1.msra.mxu0 0.0
    %497 = vmatprep.subr.mxu0 0.0
    %498 = vmatpush1.msra.mxu0 0.0
    %499 = vmatprep.subr.mxu0 0.0
    %500 = vmatpush1.msra.mxu0 0.0
    %501 = vmatprep.subr.mxu0 0.0
    %502 = vmatpush1.msra.mxu0 0.0
    %503 = vmatprep.subr.mxu0 0.0
    %504 = vmatpush1.msra.mxu0 0.0
    %505 = vmatprep.subr.mxu0 0.0
    %506 = vmatpush1.msra.mxu0 0.0
    %507 = vmatprep.subr.mxu0 0.0
    %508 = vmatpush1.msra.mxu0 0.0
    %509 = vmatprep.subr.mxu0 0.0
    %510 = vmatpush1.msra.mxu0 0.0
    %511 = vmatprep.subr.mxu0 0.0
    %512 = vmatpush1.msra.mxu0 0.0
    %513 = vmatprep.subr.mxu0 0.0
    %514 = vmatpush1.msra.mxu0 0.0
    %515 = vmatprep.subr.mxu0 0.0
    %516 = vmatpush1.msra.mxu0 0.0
    %517 = vmatprep.subr.mxu0 0.0
    %518 = vmatpush1.msra.mxu0 0.0
    %519 = vmatprep.subr.mxu0 0.0
    %520 = vmatpush1.msra.mxu0 0.0
    %521 = vmatprep.subr.mxu0 0.0
    %522 = vmatpush1.msra.mxu0 0.0
    %523 = vmatprep.subr.mxu0 0.0
    %524 = vmatpush1.msra.mxu0 0.0
    %525 = vmatprep.subr.mxu0 0.0
    %526 = vmatpush1.msra.mxu0 0.0
    %527 = vmatprep.subr.mxu0 0.0
    %528 = vmatpush1.msra.mxu0 0.0
    %529 = vmatprep.subr.mxu0 0.0
    %530 = vmatpush1.msra.mxu0 0.0
    %531 = vmatprep.subr.mxu0 0.0
    %532 = vmatpush1.msra.mxu0 0.0
    %533 = vmatprep.subr.mxu0 0.0
    %534 = vmatpush1.msra.mxu0 0.0
    %535 = vmatprep.subr.mxu0 0.0
    %536 = vmatpush1.msra.mxu0 0.0
    %537 = vmatprep.subr.mxu0 0.0
    %538 = vmatpush1.msra.mxu0 0.0
    %539 = vmatprep.subr.mxu0 0.0
    %540 = vmatpush1.msra.mxu0 0.0
    %541 = vmatprep.subr.mxu0 0.0
    %542 = vmatpush1.msra.mxu0 0.0
    %543 = vmatprep.subr.mxu0 0.0
    %544 = vmatpush1.msra.mxu0 0.0
    %545 = vmatprep.subr.mxu0 0.0
    %546 = vmatpush1.msra.mxu0 0.0
    %547 = vmatprep.subr.mxu0 0.0
    %548 = vmatpush1.msra.mxu0 0.0
    %549 = vmatprep.mubr.f32.mxu0 0.0
    %550 = vmatmul.mubr.f32.gmra.mrb[0].mxu0 %v483
    %v551 = vpop.f32.mrb[0].mxu0
    %v552 = vadd.f32 0.0, %v551
    %v553 = vpop.f32.mrb[0].mxu0
    %554 = vdwg.mxu0
    %v555 = vlaneseq
    %v556 = vshrl.u32 %v555, 7
    %v557 = vsub.s32 0, %v556
    %v558 = vrot.slane %v552, %v557
    %560 = vrot.lane.b32.xlu0 %v558, 32
    %v561 = vpop.permute.xlu0 %560
    %v563 = vadd.f32 %v137, %v561
    %v564 = vtanh.pop %v563
    %566 = vrot.lane.b32.xlu0 %v564, 96
    %v567 = vpop.permute.xlu0 %566
    %v568 = vsel %vm66, %v567, 0
    %570 = vmatprep.subr.mxu0 0.0
    %571 = vmatpush1.msra.mxu0 %v346
    %572 = vmatprep.subr.mxu0 0.0
    %573 = vmatpush1.msra.mxu0 %v348
    %574 = vmatprep.subr.mxu0 0.0
    %575 = vmatpush1.msra.mxu0 %v350
    %576 = vmatprep.subr.mxu0 0.0
    %577 = vmatpush1.msra.mxu0 %v352
    %578 = vmatprep.subr.mxu0 0.0
    %579 = vmatpush1.msra.mxu0 0.0
    %580 = vmatprep.subr.mxu0 0.0
    %581 = vmatpush1.msra.mxu0 0.0
    %582 = vmatprep.subr.mxu0 0.0
    %583 = vmatpush1.msra.mxu0 0.0
    %584 = vmatprep.subr.mxu0 0.0
    %585 = vmatpush1.msra.mxu0 0.0
    %586 = vmatprep.subr.mxu0 0.0
    %587 = vmatpush1.msra.mxu0 0.0
    %588 = vmatprep.subr.mxu0 0.0
    %589 = vmatpush1.msra.mxu0 0.0
    %590 = vmatprep.subr.mxu0 0.0
    %591 = vmatpush1.msra.mxu0 0.0
    %592 = vmatprep.subr.mxu0 0.0
    %593 = vmatpush1.msra.mxu0 0.0
    %594 = vmatprep.subr.mxu0 0.0
    %595 = vmatpush1.msra.mxu0 0.0
    %596 = vmatprep.subr.mxu0 0.0
    %597 = vmatpush1.msra.mxu0 0.0
    %598 = vmatprep.subr.mxu0 0.0
    %599 = vmatpush1.msra.mxu0 0.0
    %600 = vmatprep.subr.mxu0 0.0
    %601 = vmatpush1.msra.mxu0 0.0
    %602 = vmatprep.subr.mxu0 0.0
    %603 = vmatpush1.msra.mxu0 0.0
    %604 = vmatprep.subr.mxu0 0.0
    %605 = vmatpush1.msra.mxu0 0.0
    %606 = vmatprep.subr.mxu0 0.0
    %607 = vmatpush1.msra.mxu0 0.0
    %608 = vmatprep.subr.mxu0 0.0
    %609 = vmatpush1.msra.mxu0 0.0
    %610 = vmatprep.subr.mxu0 0.0
    %611 = vmatpush1.msra.mxu0 0.0
    %612 = vmatprep.subr.mxu0 0.0
    %613 = vmatpush1.msra.mxu0 0.0
    %614 = vmatprep.subr.mxu0 0.0
    %615 = vmatpush1.msra.mxu0 0.0
    %616 = vmatprep.subr.mxu0 0.0
    %617 = vmatpush1.msra.mxu0 0.0
    %618 = vmatprep.subr.mxu0 0.0
    %619 = vmatpush1.msra.mxu0 0.0
    %620 = vmatprep.subr.mxu0 0.0
    %621 = vmatpush1.msra.mxu0 0.0
    %622 = vmatprep.subr.mxu0 0.0
    %623 = vmatpush1.msra.mxu0 0.0
    %624 = vmatprep.subr.mxu0 0.0
    %625 = vmatpush1.msra.mxu0 0.0
    %626 = vmatprep.subr.mxu0 0.0
    %627 = vmatpush1.msra.mxu0 0.0
    %628 = vmatprep.subr.mxu0 0.0
    %629 = vmatpush1.msra.mxu0 0.0
    %630 = vmatprep.subr.mxu0 0.0
    %631 = vmatpush1.msra.mxu0 0.0
    %632 = vmatprep.subr.mxu0 0.0
    %633 = vmatpush1.msra.mxu0 0.0
    %634 = vmatprep.mubr.f32.mxu0 0.0
    %635 = vmatmul.mubr.f32.gmra.mrb[0].mxu0 %v568
    %v636 = vpop.f32.mrb[0].mxu0
    %v637 = vadd.f32 0.0, %v636
    %v638 = vpop.f32.mrb[0].mxu0
    %639 = vdwg.mxu0
    %v640 = vsel %vm429, %v637, -inf
    %v641 = vrot.slane %v640, 4
    %v642 = vmax.f32 %v640, %v641
    %v643 = vrot.slane %v642, 2
    %v644 = vmax.f32 %v642, %v643
    %v645 = vrot.slane %v644, 1
    %v646 = vmax.f32 %v644, %v645
    %v647 = vsub.f32 %v637, %v646
    %v648 = vmul.f32 %v647, 1.442695
    %v649 = vpow.pop %v648
    %v650 = vsel %vm429, %v649, 0.0
    %v651 = vrot.slane %v650, 4
    %v652 = vadd.f32 %v650, %v651
    %v653 = vrot.slane %v652, 2
    %v654 = vadd.f32 %v652, %v653
    %v655 = vrot.slane %v654, 1
    %v656 = vadd.f32 %v654, %v655
    %v657 = vrcp.pop %v656
    %v658 = vmul.f32 %v649, %v657
    %659 = vxpose.xlu0.b32.start [1/16] %v658, 128
    %660 = vxpose.xlu0.b32.cont [2/16] 0.0, 128
    %661 = vxpose.xlu0.b32.cont [3/16] 0.0, 128
    %662 = vxpose.xlu0.b32.cont [4/16] 0.0, 128
    %663 = vxpose.xlu0.b32.cont [5/16] 0.0, 128
    %664 = vxpose.xlu0.b32.cont [6/16] 0.0, 128
    %665 = vxpose.xlu0.b32.cont [7/16] 0.0, 128
    %666 = vxpose.xlu0.b32.cont [8/16] 0.0, 128
    %667 = vxpose.xlu0.b32.cont [9/16] 0.0, 128
    %668 = vxpose.xlu0.b32.cont [10/16] 0.0, 128
    %669 = vxpose.xlu0.b32.cont [11/16] 0.0, 128
    %670 = vxpose.xlu0.b32.cont [12/16] 0.0, 128
    %671 = vxpose.xlu0.b32.cont [13/16] 0.0, 128
    %672 = vxpose.xlu0.b32.cont [14/16] 0.0, 128
    %673 = vxpose.xlu0.b32.cont [15/16] 0.0, 128
    %674 = vxpose.xlu0.b32.end [16/16] 0.0, 128
    %v675 = vpop.trf.xlu0
    %v676 = vpop.trf.xlu0
    %v677 = vpop.trf.xlu0
    %v678 = vpop.trf.xlu0
    %v679 = vpop.trf.xlu0
    %v680 = vpop.trf.xlu0
    %v681 = vpop.trf.xlu0
    %v682 = vpop.trf.xlu0
    %v683 = vpop.trf.xlu0
    %v684 = vpop.trf.xlu0
    %v685 = vpop.trf.xlu0
    %v686 = vpop.trf.xlu0
    %v687 = vpop.trf.xlu0
    %v688 = vpop.trf.xlu0
    %v689 = vpop.trf.xlu0
    %v690 = vpop.trf.xlu0
    %692 = vrot.lane.b32.xlu0 %v217, 96
    %v693 = vpop.permute.xlu0 %692
    %v696 = vsel %vm481, %v675, 0
    %698 = vmatprep.subr.mxu0 0.0
    %699 = vmatpush1.msra.mxu0 %v693
    %700 = vmatprep.subr.mxu0 0.0
    %701 = vmatpush1.msra.mxu0 0.0
    %702 = vmatprep.subr.mxu0 0.0
    %703 = vmatpush1.msra.mxu0 0.0
    %704 = vmatprep.subr.mxu0 0.0
    %705 = vmatpush1.msra.mxu0 0.0
    %706 = vmatprep.subr.mxu0 0.0
    %707 = vmatpush1.msra.mxu0 0.0
    %708 = vmatprep.subr.mxu0 0.0
    %709 = vmatpush1.msra.mxu0 0.0
    %710 = vmatprep.subr.mxu0 0.0
    %711 = vmatpush1.msra.mxu0 0.0
    %712 = vmatprep.subr.mxu0 0.0
    %713 = vmatpush1.msra.mxu0 0.0
    %714 = vmatprep.subr.mxu0 0.0
    %715 = vmatpush1.msra.mxu0 0.0
    %716 = vmatprep.subr.mxu0 0.0
    %717 = vmatpush1.msra.mxu0 0.0
    %718 = vmatprep.subr.mxu0 0.0
    %719 = vmatpush1.msra.mxu0 0.0
    %720 = vmatprep.subr.mxu0 0.0
    %721 = vmatpush1.msra.mxu0 0.0
    %722 = vmatprep.subr.mxu0 0.0
    %723 = vmatpush1.msra.mxu0 0.0
    %724 = vmatprep.subr.mxu0 0.0
    %725 = vmatpush1.msra.mxu0 0.0
    %726 = vmatprep.subr.mxu0 0.0
    %727 = vmatpush1.msra.mxu0 0.0
    %728 = vmatprep.subr.mxu0 0.0
    %729 = vmatpush1.msra.mxu0 0.0
    %730 = vmatprep.subr.mxu0 0.0
    %731 = vmatpush1.msra.mxu0 0.0
    %732 = vmatprep.subr.mxu0 0.0
    %733 = vmatpush1.msra.mxu0 0.0
    %734 = vmatprep.subr.mxu0 0.0
    %735 = vmatpush1.msra.mxu0 0.0
    %736 = vmatprep.subr.mxu0 0.0
    %737 = vmatpush1.msra.mxu0 0.0
    %738 = vmatprep.subr.mxu0 0.0
    %739 = vmatpush1.msra.mxu0 0.0
    %740 = vmatprep.subr.mxu0 0.0
    %741 = vmatpush1.msra.mxu0 0.0
    %742 = vmatprep.subr.mxu0 0.0
    %743 = vmatpush1.msra.mxu0 0.0
    %744 = vmatprep.subr.mxu0 0.0
    %745 = vmatpush1.msra.mxu0 0.0
    %746 = vmatprep.subr.mxu0 0.0
    %747 = vmatpush1.msra.mxu0 0.0
    %748 = vmatprep.subr.mxu0 0.0
    %749 = vmatpush1.msra.mxu0 0.0
    %750 = vmatprep.subr.mxu0 0.0
    %751 = vmatpush1.msra.mxu0 0.0
    %752 = vmatprep.subr.mxu0 0.0
    %753 = vmatpush1.msra.mxu0 0.0
    %754 = vmatprep.subr.mxu0 0.0
    %755 = vmatpush1.msra.mxu0 0.0
    %756 = vmatprep.subr.mxu0 0.0
    %757 = vmatpush1.msra.mxu0 0.0
    %758 = vmatprep.subr.mxu0 0.0
    %759 = vmatpush1.msra.mxu0 0.0
    %760 = vmatprep.subr.mxu0 0.0
    %761 = vmatpush1.msra.mxu0 0.0
    %762 = vmatprep.mubr.f32.mxu0 0.0
    %763 = vmatmul.mubr.f32.gmra.mrb[0].mxu0 %v696
    %v764 = vpop.f32.mrb[0].mxu0
    %v765 = vadd.f32 0.0, %v764
    %v766 = vpop.f32.mrb[0].mxu0
    %767 = vdwg.mxu0
    %v768 = vlaneseq
    %v769 = vshrl.u32 %v768, 7
    %v770 = vsub.s32 0, %v769
    %v771 = vrot.slane %v765, %v770
    %v772 = vadd.f32 %v137, %v771
    %v773 = vtanh.pop %v772
    %774 = vrot.lane.b32.xlu0 %v141, 63
    %v775 = vpop.permute.xlu0 %774
    %776 = vrot.lane.b32.xlu0 %v142, 63
    %v777 = vpop.permute.xlu0 %776
    %778 = vrot.lane.b32.xlu0 %v143, 63
    %v779 = vpop.permute.xlu0 %778
    %780 = vrot.lane.b32.xlu0 %v144, 63
    %v781 = vpop.permute.xlu0 %780
    %v787 = vsel %vm66, %v773, 0
    %789 = vmatprep.subr.mxu0 0.0
    %790 = vmatpush1.msra.mxu0 %v775
    %791 = vmatprep.subr.mxu0 0.0
    %792 = vmatpush1.msra.mxu0 %v777
    %793 = vmatprep.subr.mxu0 0.0
    %794 = vmatpush1.msra.mxu0 %v779
    %795 = vmatprep.subr.mxu0 0.0
    %796 = vmatpush1.msra.mxu0 %v781
    %797 = vmatprep.subr.mxu0 0.0
    %798 = vmatpush1.msra.mxu0 0.0
    %799 = vmatprep.subr.mxu0 0.0
    %800 = vmatpush1.msra.mxu0 0.0
    %801 = vmatprep.subr.mxu0 0.0
    %802 = vmatpush1.msra.mxu0 0.0
    %803 = vmatprep.subr.mxu0 0.0
    %804 = vmatpush1.msra.mxu0 0.0
    %805 = vmatprep.subr.mxu0 0.0
    %806 = vmatpush1.msra.mxu0 0.0
    %807 = vmatprep.subr.mxu0 0.0
    %808 = vmatpush1.msra.mxu0 0.0
    %809 = vmatprep.subr.mxu0 0.0
    %810 = vmatpush1.msra.mxu0 0.0
    %811 = vmatprep.subr.mxu0 0.0
    %812 = vmatpush1.msra.mxu0 0.0
    %813 = vmatprep.subr.mxu0 0.0
    %814 = vmatpush1.msra.mxu0 0.0
    %815 = vmatprep.subr.mxu0 0.0
    %816 = vmatpush1.msra.mxu0 0.0
    %817 = vmatprep.subr.mxu0 0.0
    %818 = vmatpush1.msra.mxu0 0.0
    %819 = vmatprep.subr.mxu0 0.0
    %820 = vmatpush1.msra.mxu0 0.0
    %821 = vmatprep.subr.mxu0 0.0
    %822 = vmatpush1.msra.mxu0 0.0
    %823 = vmatprep.subr.mxu0 0.0
    %824 = vmatpush1.msra.mxu0 0.0
    %825 = vmatprep.subr.mxu0 0.0
    %826 = vmatpush1.msra.mxu0 0.0
    %827 = vmatprep.subr.mxu0 0.0
    %828 = vmatpush1.msra.mxu0 0.0
    %829 = vmatprep.subr.mxu0 0.0
    %830 = vmatpush1.msra.mxu0 0.0
    %831 = vmatprep.subr.mxu0 0.0
    %832 = vmatpush1.msra.mxu0 0.0
    %833 = vmatprep.subr.mxu0 0.0
    %834 = vmatpush1.msra.mxu0 0.0
    %835 = vmatprep.subr.mxu0 0.0
    %836 = vmatpush1.msra.mxu0 0.0
    %837 = vmatprep.subr.mxu0 0.0
    %838 = vmatpush1.msra.mxu0 0.0
    %839 = vmatprep.subr.mxu0 0.0
    %840 = vmatpush1.msra.mxu0 0.0
    %841 = vmatprep.subr.mxu0 0.0
    %842 = vmatpush1.msra.mxu0 0.0
    %843 = vmatprep.subr.mxu0 0.0
    %844 = vmatpush1.msra.mxu0 0.0
    %845 = vmatprep.subr.mxu0 0.0
    %846 = vmatpush1.msra.mxu0 0.0
    %847 = vmatprep.subr.mxu0 0.0
    %848 = vmatpush1.msra.mxu0 0.0
    %849 = vmatprep.subr.mxu0 0.0
    %850 = vmatpush1.msra.mxu0 0.0
    %851 = vmatprep.subr.mxu0 0.0
    %852 = vmatpush1.msra.mxu0 0.0
    %853 = vmatprep.mubr.f32.mxu0 0.0
    %854 = vmatmul.mubr.f32.gmra.mrb[0].mxu0 %v787
    %v855 = vpop.f32.mrb[0].mxu0
    %v856 = vadd.f32 0.0, %v855
    %v857 = vpop.f32.mrb[0].mxu0
    %858 = vdwg.mxu0
    %v859 = vsel %vm429, %v856, -inf
    %v860 = vrot.slane %v859, 4
    %v861 = vmax.f32 %v859, %v860
    %v862 = vrot.slane %v861, 2
    %v863 = vmax.f32 %v861, %v862
    %v864 = vrot.slane %v863, 1
    %v865 = vmax.f32 %v863, %v864
    %v866 = vsub.f32 %v856, %v865
    %v867 = vmul.f32 %v866, 1.442695
    %v868 = vpow.pop %v867
    %v869 = vsel %vm429, %v868, 0.0
    %v870 = vrot.slane %v869, 4
    %v871 = vadd.f32 %v869, %v870
    %v872 = vrot.slane %v871, 2
    %v873 = vadd.f32 %v871, %v872
    %v874 = vrot.slane %v873, 1
    %v875 = vadd.f32 %v873, %v874
    %v876 = vrcp.pop %v875
    %v877 = vmul.f32 %v868, %v876
    %878 = vxpose.xlu0.b32.start [1/16] %v877, 128
    %879 = vxpose.xlu0.b32.cont [2/16] 0.0, 128
    %880 = vxpose.xlu0.b32.cont [3/16] 0.0, 128
    %881 = vxpose.xlu0.b32.cont [4/16] 0.0, 128
    %882 = vxpose.xlu0.b32.cont [5/16] 0.0, 128
    %883 = vxpose.xlu0.b32.cont [6/16] 0.0, 128
    %884 = vxpose.xlu0.b32.cont [7/16] 0.0, 128
    %885 = vxpose.xlu0.b32.cont [8/16] 0.0, 128
    %886 = vxpose.xlu0.b32.cont [9/16] 0.0, 128
    %887 = vxpose.xlu0.b32.cont [10/16] 0.0, 128
    %888 = vxpose.xlu0.b32.cont [11/16] 0.0, 128
    %889 = vxpose.xlu0.b32.cont [12/16] 0.0, 128
    %890 = vxpose.xlu0.b32.cont [13/16] 0.0, 128
    %891 = vxpose.xlu0.b32.cont [14/16] 0.0, 128
    %892 = vxpose.xlu0.b32.cont [15/16] 0.0, 128
    %893 = vxpose.xlu0.b32.end [16/16] 0.0, 128
    %v894 = vpop.trf.xlu0
    %v895 = vpop.trf.xlu0
    %v896 = vpop.trf.xlu0
    %v897 = vpop.trf.xlu0
    %v898 = vpop.trf.xlu0
    %v899 = vpop.trf.xlu0
    %v900 = vpop.trf.xlu0
    %v901 = vpop.trf.xlu0
    %v902 = vpop.trf.xlu0
    %v903 = vpop.trf.xlu0
    %v904 = vpop.trf.xlu0
    %v905 = vpop.trf.xlu0
    %v906 = vpop.trf.xlu0
    %v907 = vpop.trf.xlu0
    %v908 = vpop.trf.xlu0
    %v909 = vpop.trf.xlu0
    %911 = vrot.lane.b32.xlu0 %v137, 64
    %v912 = vpop.permute.xlu0 %911
    %913 = vrot.lane.b32.xlu0 %v139, 64
    %v914 = vpop.permute.xlu0 %913
    %vm915 = vcmask 523264
    %v916 = vsel %vm915, %v912, %v914
    %v920 = vsel %vm481, %v894, 0
    %922 = vmatprep.subr.mxu0 %v914
    %923 = vmatpush1.msra.mxu0 %v916
    %924 = vmatprep.subr.mxu0 0.0
    %925 = vmatpush1.msra.mxu0 0.0
    %926 = vmatprep.subr.mxu0 0.0
    %927 = vmatpush1.msra.mxu0 0.0
    %928 = vmatprep.subr.mxu0 0.0
    %929 = vmatpush1.msra.mxu0 0.0
    %930 = vmatprep.subr.mxu0 0.0
    %931 = vmatpush1.msra.mxu0 0.0
    %932 = vmatprep.subr.mxu0 0.0
    %933 = vmatpush1.msra.mxu0 0.0
    %934 = vmatprep.subr.mxu0 0.0
    %935 = vmatpush1.msra.mxu0 0.0
    %936 = vmatprep.subr.mxu0 0.0
    %937 = vmatpush1.msra.mxu0 0.0
    %938 = vmatprep.subr.mxu0 0.0
    %939 = vmatpush1.msra.mxu0 0.0
    %940 = vmatprep.subr.mxu0 0.0
    %941 = vmatpush1.msra.mxu0 0.0
    %942 = vmatprep.subr.mxu0 0.0
    %943 = vmatpush1.msra.mxu0 0.0
    %944 = vmatprep.subr.mxu0 0.0
    %945 = vmatpush1.msra.mxu0 0.0
    %946 = vmatprep.subr.mxu0 0.0
    %947 = vmatpush1.msra.mxu0 0.0
    %948 = vmatprep.subr.mxu0 0.0
    %949 = vmatpush1.msra.mxu0 0.0
    %950 = vmatprep.subr.mxu0 0.0
    %951 = vmatpush1.msra.mxu0 0.0
    %952 = vmatprep.subr.mxu0 0.0
    %953 = vmatpush1.msra.mxu0 0.0
    %954 = vmatprep.subr.mxu0 0.0
    %955 = vmatpush1.msra.mxu0 0.0
    %956 = vmatprep.subr.mxu0 0.0
    %957 = vmatpush1.msra.mxu0 0.0
    %958 = vmatprep.subr.mxu0 0.0
    %959 = vmatpush1.msra.mxu0 0.0
    %960 = vmatprep.subr.mxu0 0.0
    %961 = vmatpush1.msra.mxu0 0.0
    %962 = vmatprep.subr.mxu0 0.0
    %963 = vmatpush1.msra.mxu0 0.0
    %964 = vmatprep.subr.mxu0 0.0
    %965 = vmatpush1.msra.mxu0 0.0
    %966 = vmatprep.subr.mxu0 0.0
    %967 = vmatpush1.msra.mxu0 0.0
    %968 = vmatprep.subr.mxu0 0.0
    %969 = vmatpush1.msra.mxu0 0.0
    %970 = vmatprep.subr.mxu0 0.0
    %971 = vmatpush1.msra.mxu0 0.0
    %972 = vmatprep.subr.mxu0 0.0
    %973 = vmatpush1.msra.mxu0 0.0
    %974 = vmatprep.subr.mxu0 0.0
    %975 = vmatpush1.msra.mxu0 0.0
    %976 = vmatprep.subr.mxu0 0.0
    %977 = vmatpush1.msra.mxu0 0.0
    %978 = vmatprep.subr.mxu0 0.0
    %979 = vmatpush1.msra.mxu0 0.0
    %980 = vmatprep.subr.mxu0 0.0
    %981 = vmatpush1.msra.mxu0 0.0
    %982 = vmatprep.subr.mxu0 0.0
    %983 = vmatpush1.msra.mxu0 0.0
    %984 = vmatprep.subr.mxu0 0.0
    %985 = vmatpush1.msra.mxu0 0.0
    %986 = vmatprep.mubr.f32.mxu0 0.0
    %987 = vmatmul.mubr.f32.gmra.mrb[0].mxu0 %v920
    %v988 = vpop.f32.mrb[0].mxu0
    %v989 = vadd.f32 0.0, %v988
    %v990 = vpop.f32.mrb[0].mxu0
    %v991 = vadd.f32 0.0, %v990
    %992 = vdwg.mxu0
    %993 = vrot.lane.b32.xlu0 %v232, 96
    %v994 = vpop.permute.xlu0 %993
    %v996 = vadd.f32 %v991, %v994
    %vm997 = vcmp.eq.s32.totalorder %v222, 0
    %999 = vset.pattern.permute.xlu0 0
    %1000 = vperm.xlu0 %999, %v996
    %v1001 = vpop.permute.xlu0 %1000
    %v1003 = vsel %vm997, %v1001, 0.0
    %v1004 = vrot.slane %v220, 1
    %v1006 = vadd.f32 %v989, %v1004
    %v1007 = vmul.f32 %v1006, %v226
    %v1008 = vtanh.pop %v1007
    %v1009 = vmul.f32 %v1008, 0.5
    %v1010 = vadd.f32 %v1009, 0.5
    %v1011 = vmul.f32 %v1010, %v234
    %1013 = vrot.lane.b32.xlu0 %v1008, 64
    %v1014 = vpop.permute.xlu0 %1013
    %v1016 = vmul.f32 %v1010, %v1014
    %1018 = vrot.lane.b32.xlu0 %v1016, 32
    %v1019 = vpop.permute.xlu0 %1018
    %v1021 = vadd.f32 %v1011, %v1019
    %v1022 = vtanh.pop %v1021
    %1024 = vrot.lane.b32.xlu0 %v1022, 64
    %v1025 = vpop.permute.xlu0 %1024
    %v1027 = vmul.f32 %v1010, %v1025
    %1029 = vrot.lane.b32.xlu0 %v1027, 32
    %v1030 = vpop.permute.xlu0 %1029
    %v1031 = vsel %vm66, %v1030, 0
    %1033 = vmatprep.subr.mxu0 0.0
    %1034 = vmatpush1.msra.mxu0 %v141
    %1035 = vmatprep.subr.mxu0 0.0
    %1036 = vmatpush1.msra.mxu0 %v142
    %1037 = vmatprep.subr.mxu0 0.0
    %1038 = vmatpush1.msra.mxu0 %v143
    %1039 = vmatprep.subr.mxu0 0.0
    %1040 = vmatpush1.msra.mxu0 %v144
    %1041 = vmatprep.subr.mxu0 0.0
    %1042 = vmatpush1.msra.mxu0 0.0
    %1043 = vmatprep.subr.mxu0 0.0
    %1044 = vmatpush1.msra.mxu0 0.0
    %1045 = vmatprep.subr.mxu0 0.0
    %1046 = vmatpush1.msra.mxu0 0.0
    %1047 = vmatprep.subr.mxu0 0.0
    %1048 = vmatpush1.msra.mxu0 0.0
    %1049 = vmatprep.subr.mxu0 0.0
    %1050 = vmatpush1.msra.mxu0 0.0
    %1051 = vmatprep.subr.mxu0 0.0
    %1052 = vmatpush1.msra.mxu0 0.0
    %1053 = vmatprep.subr.mxu0 0.0
    %1054 = vmatpush1.msra.mxu0 0.0
    %1055 = vmatprep.subr.mxu0 0.0
    %1056 = vmatpush1.msra.mxu0 0.0
    %1057 = vmatprep.subr.mxu0 0.0
    %1058 = vmatpush1.msra.mxu0 0.0
    %1059 = vmatprep.subr.mxu0 0.0
    %1060 = vmatpush1.msra.mxu0 0.0
    %1061 = vmatprep.subr.mxu0 0.0
    %1062 = vmatpush1.msra.mxu0 0.0
    %1063 = vmatprep.subr.mxu0 0.0
    %1064 = vmatpush1.msra.mxu0 0.0
    %1065 = vmatprep.subr.mxu0 0.0
    %1066 = vmatpush1.msra.mxu0 0.0
    %1067 = vmatprep.subr.mxu0 0.0
    %1068 = vmatpush1.msra.mxu0 0.0
    %1069 = vmatprep.subr.mxu0 0.0
    %1070 = vmatpush1.msra.mxu0 0.0
    %1071 = vmatprep.subr.mxu0 0.0
    %1072 = vmatpush1.msra.mxu0 0.0
    %1073 = vmatprep.subr.mxu0 0.0
    %1074 = vmatpush1.msra.mxu0 0.0
    %1075 = vmatprep.subr.mxu0 0.0
    %1076 = vmatpush1.msra.mxu0 0.0
    %1077 = vmatprep.subr.mxu0 0.0
    %1078 = vmatpush1.msra.mxu0 0.0
    %1079 = vmatprep.subr.mxu0 0.0
    %1080 = vmatpush1.msra.mxu0 0.0
    %1081 = vmatprep.subr.mxu0 0.0
    %1082 = vmatpush1.msra.mxu0 0.0
    %1083 = vmatprep.subr.mxu0 0.0
    %1084 = vmatpush1.msra.mxu0 0.0
    %1085 = vmatprep.subr.mxu0 0.0
    %1086 = vmatpush1.msra.mxu0 0.0
    %1087 = vmatprep.subr.mxu0 0.0
    %1088 = vmatpush1.msra.mxu0 0.0
    %1089 = vmatprep.subr.mxu0 0.0
    %1090 = vmatpush1.msra.mxu0 0.0
    %1091 = vmatprep.subr.mxu0 0.0
    %1092 = vmatpush1.msra.mxu0 0.0
    %1093 = vmatprep.subr.mxu0 0.0
    %1094 = vmatpush1.msra.mxu0 0.0
    %1095 = vmatprep.subr.mxu0 0.0
    %1096 = vmatpush1.msra.mxu0 0.0
    %1097 = vmatprep.mubr.f32.mxu0 0.0
    %1098 = vmatmul.mubr.f32.gmra.mrb[0].mxu0 %v1031
    %v1099 = vpop.f32.mrb[0].mxu0
    %v1100 = vadd.f32 0.0, %v1099
    %v1101 = vpop.f32.mrb[0].mxu0
    %1102 = vdwg.mxu0
    %v1103 = vlaneseq
    %v1104 = vshrl.u32 %v1103, 7
    %v1105 = vsub.s32 0, %v1104
    %v1106 = vrot.slane %v1100, %v1105
    %1108 = vrot.lane.b32.xlu0 %v1106, 32
    %v1109 = vpop.permute.xlu0 %1108
    %v1111 = vadd.f32 %v137, %v1109
    %v1112 = vtanh.pop %v1111
    %1114 = vrot.lane.b32.xlu0 %v1112, 96
    %v1115 = vpop.permute.xlu0 %1114
    %v1116 = vsel %vm66, %v1115, 0
    %1118 = vmatprep.subr.mxu0 0.0
    %1119 = vmatpush1.msra.mxu0 %v346
    %1120 = vmatprep.subr.mxu0 0.0
    %1121 = vmatpush1.msra.mxu0 %v348
    %1122 = vmatprep.subr.mxu0 0.0
    %1123 = vmatpush1.msra.mxu0 %v350
    %1124 = vmatprep.subr.mxu0 0.0
    %1125 = vmatpush1.msra.mxu0 %v352
    %1126 = vmatprep.subr.mxu0 0.0
    %1127 = vmatpush1.msra.mxu0 0.0
    %1128 = vmatprep.subr.mxu0 0.0
    %1129 = vmatpush1.msra.mxu0 0.0
    %1130 = vmatprep.subr.mxu0 0.0
    %1131 = vmatpush1.msra.mxu0 0.0
    %1132 = vmatprep.subr.mxu0 0.0
    %1133 = vmatpush1.msra.mxu0 0.0
    %1134 = vmatprep.subr.mxu0 0.0
    %1135 = vmatpush1.msra.mxu0 0.0
    %1136 = vmatprep.subr.mxu0 0.0
    %1137 = vmatpush1.msra.mxu0 0.0
    %1138 = vmatprep.subr.mxu0 0.0
    %1139 = vmatpush1.msra.mxu0 0.0
    %1140 = vmatprep.subr.mxu0 0.0
    %1141 = vmatpush1.msra.mxu0 0.0
    %1142 = vmatprep.subr.mxu0 0.0
    %1143 = vmatpush1.msra.mxu0 0.0
    %1144 = vmatprep.subr.mxu0 0.0
    %1145 = vmatpush1.msra.mxu0 0.0
    %1146 = vmatprep.subr.mxu0 0.0
    %1147 = vmatpush1.msra.mxu0 0.0
    %1148 = vmatprep.subr.mxu0 0.0
    %1149 = vmatpush1.msra.mxu0 0.0
    %1150 = vmatprep.subr.mxu0 0.0
    %1151 = vmatpush1.msra.mxu0 0.0
    %1152 = vmatprep.subr.mxu0 0.0
    %1153 = vmatpush1.msra.mxu0 0.0
    %1154 = vmatprep.subr.mxu0 0.0
    %1155 = vmatpush1.msra.mxu0 0.0
    %1156 = vmatprep.subr.mxu0 0.0
    %1157 = vmatpush1.msra.mxu0 0.0
    %1158 = vmatprep.subr.mxu0 0.0
    %1159 = vmatpush1.msra.mxu0 0.0
    %1160 = vmatprep.subr.mxu0 0.0
    %1161 = vmatpush1.msra.mxu0 0.0
    %1162 = vmatprep.subr.mxu0 0.0
    %1163 = vmatpush1.msra.mxu0 0.0
    %1164 = vmatprep.subr.mxu0 0.0
    %1165 = vmatpush1.msra.mxu0 0.0
    %1166 = vmatprep.subr.mxu0 0.0
    %1167 = vmatpush1.msra.mxu0 0.0
    %1168 = vmatprep.subr.mxu0 0.0
    %1169 = vmatpush1.msra.mxu0 0.0
    %1170 = vmatprep.subr.mxu0 0.0
    %1171 = vmatpush1.msra.mxu0 0.0
    %1172 = vmatprep.subr.mxu0 0.0
    %1173 = vmatpush1.msra.mxu0 0.0
    %1174 = vmatprep.subr.mxu0 0.0
    %1175 = vmatpush1.msra.mxu0 0.0
    %1176 = vmatprep.subr.mxu0 0.0
    %1177 = vmatpush1.msra.mxu0 0.0
    %1178 = vmatprep.subr.mxu0 0.0
    %1179 = vmatpush1.msra.mxu0 0.0
    %1180 = vmatprep.subr.mxu0 0.0
    %1181 = vmatpush1.msra.mxu0 0.0
    %1182 = vmatprep.mubr.f32.mxu0 0.0
    %1183 = vmatmul.mubr.f32.gmra.mrb[0].mxu0 %v1116
    %v1184 = vpop.f32.mrb[0].mxu0
    %v1185 = vadd.f32 0.0, %v1184
    %v1186 = vpop.f32.mrb[0].mxu0
    %1187 = vdwg.mxu0
    %v1188 = vsel %vm429, %v1185, -inf
    %v1189 = vrot.slane %v1188, 4
    %v1190 = vmax.f32 %v1188, %v1189
    %v1191 = vrot.slane %v1190, 2
    %v1192 = vmax.f32 %v1190, %v1191
    %v1193 = vrot.slane %v1192, 1
    %v1194 = vmax.f32 %v1192, %v1193
    %v1195 = vsub.f32 %v1185, %v1194
    %v1196 = vmul.f32 %v1195, 1.442695
    %v1197 = vpow.pop %v1196
    %v1198 = vsel %vm429, %v1197, 0.0
    %v1199 = vrot.slane %v1198, 4
    %v1200 = vadd.f32 %v1198, %v1199
    %v1201 = vrot.slane %v1200, 2
    %v1202 = vadd.f32 %v1200, %v1201
    %v1203 = vrot.slane %v1202, 1
    %v1204 = vadd.f32 %v1202, %v1203
    %v1205 = vrcp.pop %v1204
    %v1206 = vmul.f32 %v1197, %v1205
    %1207 = vxpose.xlu0.b32.start [1/16] %v1206, 128
    %1208 = vxpose.xlu0.b32.cont [2/16] 0.0, 128
    %1209 = vxpose.xlu0.b32.cont [3/16] 0.0, 128
    %1210 = vxpose.xlu0.b32.cont [4/16] 0.0, 128
    %1211 = vxpose.xlu0.b32.cont [5/16] 0.0, 128
    %1212 = vxpose.xlu0.b32.cont [6/16] 0.0, 128
    %1213 = vxpose.xlu0.b32.cont [7/16] 0.0, 128
    %1214 = vxpose.xlu0.b32.cont [8/16] 0.0, 128
    %1215 = vxpose.xlu0.b32.cont [9/16] 0.0, 128
    %1216 = vxpose.xlu0.b32.cont [10/16] 0.0, 128
    %1217 = vxpose.xlu0.b32.cont [11/16] 0.0, 128
    %1218 = vxpose.xlu0.b32.cont [12/16] 0.0, 128
    %1219 = vxpose.xlu0.b32.cont [13/16] 0.0, 128
    %1220 = vxpose.xlu0.b32.cont [14/16] 0.0, 128
    %1221 = vxpose.xlu0.b32.cont [15/16] 0.0, 128
    %1222 = vxpose.xlu0.b32.end [16/16] 0.0, 128
    %v1223 = vpop.trf.xlu0
    %v1224 = vpop.trf.xlu0
    %v1225 = vpop.trf.xlu0
    %v1226 = vpop.trf.xlu0
    %v1227 = vpop.trf.xlu0
    %v1228 = vpop.trf.xlu0
    %v1229 = vpop.trf.xlu0
    %v1230 = vpop.trf.xlu0
    %v1231 = vpop.trf.xlu0
    %v1232 = vpop.trf.xlu0
    %v1233 = vpop.trf.xlu0
    %v1234 = vpop.trf.xlu0
    %v1235 = vpop.trf.xlu0
    %v1236 = vpop.trf.xlu0
    %v1237 = vpop.trf.xlu0
    %v1238 = vpop.trf.xlu0
    %v1240 = vsel %vm481, %v1223, 0
    %1242 = vmatprep.subr.mxu0 0.0
    %1243 = vmatpush1.msra.mxu0 %v217
    %1244 = vmatprep.subr.mxu0 0.0
    %1245 = vmatpush1.msra.mxu0 0.0
    %1246 = vmatprep.subr.mxu0 0.0
    %1247 = vmatpush1.msra.mxu0 0.0
    %1248 = vmatprep.subr.mxu0 0.0
    %1249 = vmatpush1.msra.mxu0 0.0
    %1250 = vmatprep.subr.mxu0 0.0
    %1251 = vmatpush1.msra.mxu0 0.0
    %1252 = vmatprep.subr.mxu0 0.0
    %1253 = vmatpush1.msra.mxu0 0.0
    %1254 = vmatprep.subr.mxu0 0.0
    %1255 = vmatpush1.msra.mxu0 0.0
    %1256 = vmatprep.subr.mxu0 0.0
    %1257 = vmatpush1.msra.mxu0 0.0
    %1258 = vmatprep.subr.mxu0 0.0
    %1259 = vmatpush1.msra.mxu0 0.0
    %1260 = vmatprep.subr.mxu0 0.0
    %1261 = vmatpush1.msra.mxu0 0.0
    %1262 = vmatprep.subr.mxu0 0.0
    %1263 = vmatpush1.msra.mxu0 0.0
    %1264 = vmatprep.subr.mxu0 0.0
    %1265 = vmatpush1.msra.mxu0 0.0
    %1266 = vmatprep.subr.mxu0 0.0
    %1267 = vmatpush1.msra.mxu0 0.0
    %1268 = vmatprep.subr.mxu0 0.0
    %1269 = vmatpush1.msra.mxu0 0.0
    %1270 = vmatprep.subr.mxu0 0.0
    %1271 = vmatpush1.msra.mxu0 0.0
    %1272 = vmatprep.subr.mxu0 0.0
    %1273 = vmatpush1.msra.mxu0 0.0
    %1274 = vmatprep.subr.mxu0 0.0
    %1275 = vmatpush1.msra.mxu0 0.0
    %1276 = vmatprep.subr.mxu0 0.0
    %1277 = vmatpush1.msra.mxu0 0.0
    %1278 = vmatprep.subr.mxu0 0.0
    %1279 = vmatpush1.msra.mxu0 0.0
    %1280 = vmatprep.subr.mxu0 0.0
    %1281 = vmatpush1.msra.mxu0 0.0
    %1282 = vmatprep.subr.mxu0 0.0
    %1283 = vmatpush1.msra.mxu0 0.0
    %1284 = vmatprep.subr.mxu0 0.0
    %1285 = vmatpush1.msra.mxu0 0.0
    %1286 = vmatprep.subr.mxu0 0.0
    %1287 = vmatpush1.msra.mxu0 0.0
    %1288 = vmatprep.subr.mxu0 0.0
    %1289 = vmatpush1.msra.mxu0 0.0
    %1290 = vmatprep.subr.mxu0 0.0
    %1291 = vmatpush1.msra.mxu0 0.0
    %1292 = vmatprep.subr.mxu0 0.0
    %1293 = vmatpush1.msra.mxu0 0.0
    %1294 = vmatprep.subr.mxu0 0.0
    %1295 = vmatpush1.msra.mxu0 0.0
    %1296 = vmatprep.subr.mxu0 0.0
    %1297 = vmatpush1.msra.mxu0 0.0
    %1298 = vmatprep.subr.mxu0 0.0
    %1299 = vmatpush1.msra.mxu0 0.0
    %1300 = vmatprep.subr.mxu0 0.0
    %1301 = vmatpush1.msra.mxu0 0.0
    %1302 = vmatprep.subr.mxu0 0.0
    %1303 = vmatpush1.msra.mxu0 0.0
    %1304 = vmatprep.subr.mxu0 0.0
    %1305 = vmatpush1.msra.mxu0 0.0
    %1306 = vmatprep.mubr.f32.mxu0 0.0
    %1307 = vmatmul.mubr.f32.gmra.mrb[0].mxu0 %v1240
    %v1308 = vpop.f32.mrb[0].mxu0
    %v1309 = vadd.f32 0.0, %v1308
    %v1310 = vpop.f32.mrb[0].mxu0
    %1311 = vdwg.mxu0
    %v1312 = vlaneseq
    %v1313 = vshrl.u32 %v1312, 7
    %v1314 = vsub.s32 0, %v1313
    %v1315 = vrot.slane %v1309, %v1314
    %1317 = vrot.lane.b32.xlu0 %v1315, 32
    %v1318 = vpop.permute.xlu0 %1317
    %v1320 = vadd.f32 %v137, %v1318
    %v1321 = vtanh.pop %v1320
    %1323 = vrot.lane.b32.xlu0 %v1321, 96
    %v1324 = vpop.permute.xlu0 %1323
    %v1325 = vsel %vm66, %v1324, 0
    %1327 = vmatprep.subr.mxu0 0.0
    %1328 = vmatpush1.msra.mxu0 %v346
    %1329 = vmatprep.subr.mxu0 0.0
    %1330 = vmatpush1.msra.mxu0 %v348
    %1331 = vmatprep.subr.mxu0 0.0
    %1332 = vmatpush1.msra.mxu0 %v350
    %1333 = vmatprep.subr.mxu0 0.0
    %1334 = vmatpush1.msra.mxu0 %v352
    %1335 = vmatprep.subr.mxu0 0.0
    %1336 = vmatpush1.msra.mxu0 0.0
    %1337 = vmatprep.subr.mxu0 0.0
    %1338 = vmatpush1.msra.mxu0 0.0
    %1339 = vmatprep.subr.mxu0 0.0
    %1340 = vmatpush1.msra.mxu0 0.0
    %1341 = vmatprep.subr.mxu0 0.0
    %1342 = vmatpush1.msra.mxu0 0.0
    %1343 = vmatprep.subr.mxu0 0.0
    %1344 = vmatpush1.msra.mxu0 0.0
    %1345 = vmatprep.subr.mxu0 0.0
    %1346 = vmatpush1.msra.mxu0 0.0
    %1347 = vmatprep.subr.mxu0 0.0
    %1348 = vmatpush1.msra.mxu0 0.0
    %1349 = vmatprep.subr.mxu0 0.0
    %1350 = vmatpush1.msra.mxu0 0.0
    %1351 = vmatprep.subr.mxu0 0.0
    %1352 = vmatpush1.msra.mxu0 0.0
    %1353 = vmatprep.subr.mxu0 0.0
    %1354 = vmatpush1.msra.mxu0 0.0
    %1355 = vmatprep.subr.mxu0 0.0
    %1356 = vmatpush1.msra.mxu0 0.0
    %1357 = vmatprep.subr.mxu0 0.0
    %1358 = vmatpush1.msra.mxu0 0.0
    %1359 = vmatprep.subr.mxu0 0.0
    %1360 = vmatpush1.msra.mxu0 0.0
    %1361 = vmatprep.subr.mxu0 0.0
    %1362 = vmatpush1.msra.mxu0 0.0
    %1363 = vmatprep.subr.mxu0 0.0
    %1364 = vmatpush1.msra.mxu0 0.0
    %1365 = vmatprep.subr.mxu0 0.0
    %1366 = vmatpush1.msra.mxu0 0.0
    %1367 = vmatprep.subr.mxu0 0.0
    %1368 = vmatpush1.msra.mxu0 0.0
    %1369 = vmatprep.subr.mxu0 0.0
    %1370 = vmatpush1.msra.mxu0 0.0
    %1371 = vmatprep.subr.mxu0 0.0
    %1372 = vmatpush1.msra.mxu0 0.0
    %1373 = vmatprep.subr.mxu0 0.0
    %1374 = vmatpush1.msra.mxu0 0.0
    %1375 = vmatprep.subr.mxu0 0.0
    %1376 = vmatpush1.msra.mxu0 0.0
    %1377 = vmatprep.subr.mxu0 0.0
    %1378 = vmatpush1.msra.mxu0 0.0
    %1379 = vmatprep.subr.mxu0 0.0
    %1380 = vmatpush1.msra.mxu0 0.0
    %1381 = vmatprep.subr.mxu0 0.0
    %1382 = vmatpush1.msra.mxu0 0.0
    %1383 = vmatprep.subr.mxu0 0.0
    %1384 = vmatpush1.msra.mxu0 0.0
    %1385 = vmatprep.subr.mxu0 0.0
    %1386 = vmatpush1.msra.mxu0 0.0
    %1387 = vmatprep.subr.mxu0 0.0
    %1388 = vmatpush1.msra.mxu0 0.0
    %1389 = vmatprep.subr.mxu0 0.0
    %1390 = vmatpush1.msra.mxu0 0.0
    %1391 = vmatprep.mubr.f32.mxu0 0.0
    %1392 = vmatmul.mubr.f32.gmra.mrb[0].mxu0 %v1325
    %v1393 = vpop.f32.mrb[0].mxu0
    %v1394 = vadd.f32 0.0, %v1393
    %v1395 = vpop.f32.mrb[0].mxu0
    %1396 = vdwg.mxu0
    %v1397 = vsel %vm429, %v1394, -inf
    %v1398 = vrot.slane %v1397, 4
    %v1399 = vmax.f32 %v1397, %v1398
    %v1400 = vrot.slane %v1399, 2
    %v1401 = vmax.f32 %v1399, %v1400
    %v1402 = vrot.slane %v1401, 1
    %v1403 = vmax.f32 %v1401, %v1402
    %v1404 = vsub.f32 %v1394, %v1403
    %v1405 = vmul.f32 %v1404, 1.442695
    %v1406 = vpow.pop %v1405
    %v1407 = vsel %vm429, %v1406, 0.0
    %v1408 = vrot.slane %v1407, 4
    %v1409 = vadd.f32 %v1407, %v1408
    %v1410 = vrot.slane %v1409, 2
    %v1411 = vadd.f32 %v1409, %v1410
    %v1412 = vrot.slane %v1411, 1
    %v1413 = vadd.f32 %v1411, %v1412
    %v1414 = vrcp.pop %v1413
    %v1415 = vmul.f32 %v1406, %v1414
    %1416 = vxpose.xlu0.b32.start [1/16] %v1415, 128
    %1417 = vxpose.xlu0.b32.cont [2/16] 0.0, 128
    %1418 = vxpose.xlu0.b32.cont [3/16] 0.0, 128
    %1419 = vxpose.xlu0.b32.cont [4/16] 0.0, 128
    %1420 = vxpose.xlu0.b32.cont [5/16] 0.0, 128
    %1421 = vxpose.xlu0.b32.cont [6/16] 0.0, 128
    %1422 = vxpose.xlu0.b32.cont [7/16] 0.0, 128
    %1423 = vxpose.xlu0.b32.cont [8/16] 0.0, 128
    %1424 = vxpose.xlu0.b32.cont [9/16] 0.0, 128
    %1425 = vxpose.xlu0.b32.cont [10/16] 0.0, 128
    %1426 = vxpose.xlu0.b32.cont [11/16] 0.0, 128
    %1427 = vxpose.xlu0.b32.cont [12/16] 0.0, 128
    %1428 = vxpose.xlu0.b32.cont [13/16] 0.0, 128
    %1429 = vxpose.xlu0.b32.cont [14/16] 0.0, 128
    %1430 = vxpose.xlu0.b32.cont [15/16] 0.0, 128
    %1431 = vxpose.xlu0.b32.end [16/16] 0.0, 128
    %v1432 = vpop.trf.xlu0
    %v1433 = vpop.trf.xlu0
    %v1434 = vpop.trf.xlu0
    %v1435 = vpop.trf.xlu0
    %v1436 = vpop.trf.xlu0
    %v1437 = vpop.trf.xlu0
    %v1438 = vpop.trf.xlu0
    %v1439 = vpop.trf.xlu0
    %v1440 = vpop.trf.xlu0
    %v1441 = vpop.trf.xlu0
    %v1442 = vpop.trf.xlu0
    %v1443 = vpop.trf.xlu0
    %v1444 = vpop.trf.xlu0
    %v1445 = vpop.trf.xlu0
    %v1446 = vpop.trf.xlu0
    %v1447 = vpop.trf.xlu0
    %v1449 = vsel %vm481, %v1432, 0
    %1451 = vmatprep.subr.mxu0 0.0
    %1452 = vmatpush1.msra.mxu0 %v693
    %1453 = vmatprep.subr.mxu0 0.0
    %1454 = vmatpush1.msra.mxu0 0.0
    %1455 = vmatprep.subr.mxu0 0.0
    %1456 = vmatpush1.msra.mxu0 0.0
    %1457 = vmatprep.subr.mxu0 0.0
    %1458 = vmatpush1.msra.mxu0 0.0
    %1459 = vmatprep.subr.mxu0 0.0
    %1460 = vmatpush1.msra.mxu0 0.0
    %1461 = vmatprep.subr.mxu0 0.0
    %1462 = vmatpush1.msra.mxu0 0.0
    %1463 = vmatprep.subr.mxu0 0.0
    %1464 = vmatpush1.msra.mxu0 0.0
    %1465 = vmatprep.subr.mxu0 0.0
    %1466 = vmatpush1.msra.mxu0 0.0
    %1467 = vmatprep.subr.mxu0 0.0
    %1468 = vmatpush1.msra.mxu0 0.0
    %1469 = vmatprep.subr.mxu0 0.0
    %1470 = vmatpush1.msra.mxu0 0.0
    %1471 = vmatprep.subr.mxu0 0.0
    %1472 = vmatpush1.msra.mxu0 0.0
    %1473 = vmatprep.subr.mxu0 0.0
    %1474 = vmatpush1.msra.mxu0 0.0
    %1475 = vmatprep.subr.mxu0 0.0
    %1476 = vmatpush1.msra.mxu0 0.0
    %1477 = vmatprep.subr.mxu0 0.0
    %1478 = vmatpush1.msra.mxu0 0.0
    %1479 = vmatprep.subr.mxu0 0.0
    %1480 = vmatpush1.msra.mxu0 0.0
    %1481 = vmatprep.subr.mxu0 0.0
    %1482 = vmatpush1.msra.mxu0 0.0
    %1483 = vmatprep.subr.mxu0 0.0
    %1484 = vmatpush1.msra.mxu0 0.0
    %1485 = vmatprep.subr.mxu0 0.0
    %1486 = vmatpush1.msra.mxu0 0.0
    %1487 = vmatprep.subr.mxu0 0.0
    %1488 = vmatpush1.msra.mxu0 0.0
    %1489 = vmatprep.subr.mxu0 0.0
    %1490 = vmatpush1.msra.mxu0 0.0
    %1491 = vmatprep.subr.mxu0 0.0
    %1492 = vmatpush1.msra.mxu0 0.0
    %1493 = vmatprep.subr.mxu0 0.0
    %1494 = vmatpush1.msra.mxu0 0.0
    %1495 = vmatprep.subr.mxu0 0.0
    %1496 = vmatpush1.msra.mxu0 0.0
    %1497 = vmatprep.subr.mxu0 0.0
    %1498 = vmatpush1.msra.mxu0 0.0
    %1499 = vmatprep.subr.mxu0 0.0
    %1500 = vmatpush1.msra.mxu0 0.0
    %1501 = vmatprep.subr.mxu0 0.0
    %1502 = vmatpush1.msra.mxu0 0.0
    %1503 = vmatprep.subr.mxu0 0.0
    %1504 = vmatpush1.msra.mxu0 0.0
    %1505 = vmatprep.subr.mxu0 0.0
    %1506 = vmatpush1.msra.mxu0 0.0
    %1507 = vmatprep.subr.mxu0 0.0
    %1508 = vmatpush1.msra.mxu0 0.0
    %1509 = vmatprep.subr.mxu0 0.0
    %1510 = vmatpush1.msra.mxu0 0.0
    %1511 = vmatprep.subr.mxu0 0.0
    %1512 = vmatpush1.msra.mxu0 0.0
    %1513 = vmatprep.subr.mxu0 0.0
    %1514 = vmatpush1.msra.mxu0 0.0
    %1515 = vmatprep.mubr.f32.mxu0 0.0
    %1516 = vmatmul.mubr.f32.gmra.mrb[0].mxu0 %v1449
    %v1517 = vpop.f32.mrb[0].mxu0
    %v1518 = vadd.f32 0.0, %v1517
    %v1519 = vpop.f32.mrb[0].mxu0
    %1520 = vdwg.mxu0
    %v1521 = vlaneseq
    %v1522 = vshrl.u32 %v1521, 7
    %v1523 = vsub.s32 0, %v1522
    %v1524 = vrot.slane %v1518, %v1523
    %v1525 = vadd.f32 %v137, %v1524
    %v1526 = vtanh.pop %v1525
    %v1528 = vsel %vm66, %v1526, 0
    %1530 = vmatprep.subr.mxu0 0.0
    %1531 = vmatpush1.msra.mxu0 %v775
    %1532 = vmatprep.subr.mxu0 0.0
    %1533 = vmatpush1.msra.mxu0 %v777
    %1534 = vmatprep.subr.mxu0 0.0
    %1535 = vmatpush1.msra.mxu0 %v779
    %1536 = vmatprep.subr.mxu0 0.0
    %1537 = vmatpush1.msra.mxu0 %v781
    %1538 = vmatprep.subr.mxu0 0.0
    %1539 = vmatpush1.msra.mxu0 0.0
    %1540 = vmatprep.subr.mxu0 0.0
    %1541 = vmatpush1.msra.mxu0 0.0
    %1542 = vmatprep.subr.mxu0 0.0
    %1543 = vmatpush1.msra.mxu0 0.0
    %1544 = vmatprep.subr.mxu0 0.0
    %1545 = vmatpush1.msra.mxu0 0.0
    %1546 = vmatprep.subr.mxu0 0.0
    %1547 = vmatpush1.msra.mxu0 0.0
    %1548 = vmatprep.subr.mxu0 0.0
    %1549 = vmatpush1.msra.mxu0 0.0
    %1550 = vmatprep.subr.mxu0 0.0
    %1551 = vmatpush1.msra.mxu0 0.0
    %1552 = vmatprep.subr.mxu0 0.0
    %1553 = vmatpush1.msra.mxu0 0.0
    %1554 = vmatprep.subr.mxu0 0.0
    %1555 = vmatpush1.msra.mxu0 0.0
    %1556 = vmatprep.subr.mxu0 0.0
    %1557 = vmatpush1.msra.mxu0 0.0
    %1558 = vmatprep.subr.mxu0 0.0
    %1559 = vmatpush1.msra.mxu0 0.0
    %1560 = vmatprep.subr.mxu0 0.0
    %1561 = vmatpush1.msra.mxu0 0.0
    %1562 = vmatprep.subr.mxu0 0.0
    %1563 = vmatpush1.msra.mxu0 0.0
    %1564 = vmatprep.subr.mxu0 0.0
    %1565 = vmatpush1.msra.mxu0 0.0
    %1566 = vmatprep.subr.mxu0 0.0
    %1567 = vmatpush1.msra.mxu0 0.0
    %1568 = vmatprep.subr.mxu0 0.0
    %1569 = vmatpush1.msra.mxu0 0.0
    %1570 = vmatprep.subr.mxu0 0.0
    %1571 = vmatpush1.msra.mxu0 0.0
    %1572 = vmatprep.subr.mxu0 0.0
    %1573 = vmatpush1.msra.mxu0 0.0
    %1574 = vmatprep.subr.mxu0 0.0
    %1575 = vmatpush1.msra.mxu0 0.0
    %1576 = vmatprep.subr.mxu0 0.0
    %1577 = vmatpush1.msra.mxu0 0.0
    %1578 = vmatprep.subr.mxu0 0.0
    %1579 = vmatpush1.msra.mxu0 0.0
    %1580 = vmatprep.subr.mxu0 0.0
    %1581 = vmatpush1.msra.mxu0 0.0
    %1582 = vmatprep.subr.mxu0 0.0
    %1583 = vmatpush1.msra.mxu0 0.0
    %1584 = vmatprep.subr.mxu0 0.0
    %1585 = vmatpush1.msra.mxu0 0.0
    %1586 = vmatprep.subr.mxu0 0.0
    %1587 = vmatpush1.msra.mxu0 0.0
    %1588 = vmatprep.subr.mxu0 0.0
    %1589 = vmatpush1.msra.mxu0 0.0
    %1590 = vmatprep.subr.mxu0 0.0
    %1591 = vmatpush1.msra.mxu0 0.0
    %1592 = vmatprep.subr.mxu0 0.0
    %1593 = vmatpush1.msra.mxu0 0.0
    %1594 = vmatprep.mubr.f32.mxu0 0.0
    %1595 = vmatmul.mubr.f32.gmra.mrb[0].mxu0 %v1528
    %v1596 = vpop.f32.mrb[0].mxu0
    %v1597 = vadd.f32 0.0, %v1596
    %v1598 = vpop.f32.mrb[0].mxu0
    %1599 = vdwg.mxu0
    %v1600 = vsel %vm429, %v1597, -inf
    %v1601 = vrot.slane %v1600, 4
    %v1602 = vmax.f32 %v1600, %v1601
    %v1603 = vrot.slane %v1602, 2
    %v1604 = vmax.f32 %v1602, %v1603
    %v1605 = vrot.slane %v1604, 1
    %v1606 = vmax.f32 %v1604, %v1605
    %v1607 = vsub.f32 %v1597, %v1606
    %v1608 = vmul.f32 %v1607, 1.442695
    %v1609 = vpow.pop %v1608
    %v1610 = vsel %vm429, %v1609, 0.0
    %v1611 = vrot.slane %v1610, 4
    %v1612 = vadd.f32 %v1610, %v1611
    %v1613 = vrot.slane %v1612, 2
    %v1614 = vadd.f32 %v1612, %v1613
    %v1615 = vrot.slane %v1614, 1
    %v1616 = vadd.f32 %v1614, %v1615
    %v1617 = vrcp.pop %v1616
    %v1618 = vmul.f32 %v1609, %v1617
    %1619 = vxpose.xlu0.b32.start [1/16] %v1618, 128
    %1620 = vxpose.xlu0.b32.cont [2/16] 0.0, 128
    %1621 = vxpose.xlu0.b32.cont [3/16] 0.0, 128
    %1622 = vxpose.xlu0.b32.cont [4/16] 0.0, 128
    %1623 = vxpose.xlu0.b32.cont [5/16] 0.0, 128
    %1624 = vxpose.xlu0.b32.cont [6/16] 0.0, 128
    %1625 = vxpose.xlu0.b32.cont [7/16] 0.0, 128
    %1626 = vxpose.xlu0.b32.cont [8/16] 0.0, 128
    %1627 = vxpose.xlu0.b32.cont [9/16] 0.0, 128
    %1628 = vxpose.xlu0.b32.cont [10/16] 0.0, 128
    %1629 = vxpose.xlu0.b32.cont [11/16] 0.0, 128
    %1630 = vxpose.xlu0.b32.cont [12/16] 0.0, 128
    %1631 = vxpose.xlu0.b32.cont [13/16] 0.0, 128
    %1632 = vxpose.xlu0.b32.cont [14/16] 0.0, 128
    %1633 = vxpose.xlu0.b32.cont [15/16] 0.0, 128
    %1634 = vxpose.xlu0.b32.end [16/16] 0.0, 128
    %v1635 = vpop.trf.xlu0
    %v1636 = vpop.trf.xlu0
    %v1637 = vpop.trf.xlu0
    %v1638 = vpop.trf.xlu0
    %v1639 = vpop.trf.xlu0
    %v1640 = vpop.trf.xlu0
    %v1641 = vpop.trf.xlu0
    %v1642 = vpop.trf.xlu0
    %v1643 = vpop.trf.xlu0
    %v1644 = vpop.trf.xlu0
    %v1645 = vpop.trf.xlu0
    %v1646 = vpop.trf.xlu0
    %v1647 = vpop.trf.xlu0
    %v1648 = vpop.trf.xlu0
    %v1649 = vpop.trf.xlu0
    %v1650 = vpop.trf.xlu0
    %v1652 = vsel %vm481, %v1635, 0
    %1654 = vmatprep.subr.mxu0 %v914
    %1655 = vmatpush1.msra.mxu0 %v916
    %1656 = vmatprep.subr.mxu0 0.0
    %1657 = vmatpush1.msra.mxu0 0.0
    %1658 = vmatprep.subr.mxu0 0.0
    %1659 = vmatpush1.msra.mxu0 0.0
    %1660 = vmatprep.subr.mxu0 0.0
    %1661 = vmatpush1.msra.mxu0 0.0
    %1662 = vmatprep.subr.mxu0 0.0
    %1663 = vmatpush1.msra.mxu0 0.0
    %1664 = vmatprep.subr.mxu0 0.0
    %1665 = vmatpush1.msra.mxu0 0.0
    %1666 = vmatprep.subr.mxu0 0.0
    %1667 = vmatpush1.msra.mxu0 0.0
    %1668 = vmatprep.subr.mxu0 0.0
    %1669 = vmatpush1.msra.mxu0 0.0
    %1670 = vmatprep.subr.mxu0 0.0
    %1671 = vmatpush1.msra.mxu0 0.0
    %1672 = vmatprep.subr.mxu0 0.0
    %1673 = vmatpush1.msra.mxu0 0.0
    %1674 = vmatprep.subr.mxu0 0.0
    %1675 = vmatpush1.msra.mxu0 0.0
    %1676 = vmatprep.subr.mxu0 0.0
    %1677 = vmatpush1.msra.mxu0 0.0
    %1678 = vmatprep.subr.mxu0 0.0
    %1679 = vmatpush1.msra.mxu0 0.0
    %1680 = vmatprep.subr.mxu0 0.0
    %1681 = vmatpush1.msra.mxu0 0.0
    %1682 = vmatprep.subr.mxu0 0.0
    %1683 = vmatpush1.msra.mxu0 0.0
    %1684 = vmatprep.subr.mxu0 0.0
    %1685 = vmatpush1.msra.mxu0 0.0
    %1686 = vmatprep.subr.mxu0 0.0
    %1687 = vmatpush1.msra.mxu0 0.0
    %1688 = vmatprep.subr.mxu0 0.0
    %1689 = vmatpush1.msra.mxu0 0.0
    %1690 = vmatprep.subr.mxu0 0.0
    %1691 = vmatpush1.msra.mxu0 0.0
    %1692 = vmatprep.subr.mxu0 0.0
    %1693 = vmatpush1.msra.mxu0 0.0
    %1694 = vmatprep.subr.mxu0 0.0
    %1695 = vmatpush1.msra.mxu0 0.0
    %1696 = vmatprep.subr.mxu0 0.0
    %1697 = vmatpush1.msra.mxu0 0.0
    %1698 = vmatprep.subr.mxu0 0.0
    %1699 = vmatpush1.msra.mxu0 0.0
    %1700 = vmatprep.subr.mxu0 0.0
    %1701 = vmatpush1.msra.mxu0 0.0
    %1702 = vmatprep.subr.mxu0 0.0
    %1703 = vmatpush1.msra.mxu0 0.0
    %1704 = vmatprep.subr.mxu0 0.0
    %1705 = vmatpush1.msra.mxu0 0.0
    %1706 = vmatprep.subr.mxu0 0.0
    %1707 = vmatpush1.msra.mxu0 0.0
    %1708 = vmatprep.subr.mxu0 0.0
    %1709 = vmatpush1.msra.mxu0 0.0
    %1710 = vmatprep.subr.mxu0 0.0
    %1711 = vmatpush1.msra.mxu0 0.0
    %1712 = vmatprep.subr.mxu0 0.0
    %1713 = vmatpush1.msra.mxu0 0.0
    %1714 = vmatprep.subr.mxu0 0.0
    %1715 = vmatpush1.msra.mxu0 0.0
    %1716 = vmatprep.subr.mxu0 0.0
    %1717 = vmatpush1.msra.mxu0 0.0
    %1718 = vmatprep.mubr.f32.mxu0 0.0
    %1719 = vmatmul.mubr.f32.gmra.mrb[0].mxu0 %v1652
    %v1720 = vpop.f32.mrb[0].mxu0
    %v1721 = vadd.f32 0.0, %v1720
    %v1722 = vpop.f32.mrb[0].mxu0
    %v1723 = vadd.f32 0.0, %v1722
    %1724 = vdwg.mxu0
    %v1725 = vadd.f32 %v1723, %v994
    %vm1726 = vcmp.eq.s32.totalorder %v222, 1
    %1728 = vset.pattern.permute.xlu0 0
    %1729 = vperm.xlu0 %1728, %v1725
    %v1730 = vpop.permute.xlu0 %1729
    %v1732 = vsel %vm1726, %v1730, %v1003
    %v1733 = vadd.f32 %v1721, %v1004
    %v1734 = vmul.f32 %v1733, %v226
    %v1735 = vtanh.pop %v1734
    %v1736 = vmul.f32 %v1735, 0.5
    %v1737 = vadd.f32 %v1736, 0.5
    %v1738 = vmul.f32 %v1737, %v234
    %1740 = vrot.lane.b32.xlu0 %v1735, 64
    %v1741 = vpop.permute.xlu0 %1740
    %v1743 = vmul.f32 %v1737, %v1741
    %1745 = vrot.lane.b32.xlu0 %v1743, 32
    %v1746 = vpop.permute.xlu0 %1745
    %v1748 = vadd.f32 %v1738, %v1746
    %v1749 = vtanh.pop %v1748
    %1751 = vrot.lane.b32.xlu0 %v1749, 64
    %v1752 = vpop.permute.xlu0 %1751
    %v1754 = vmul.f32 %v1737, %v1752
    %1756 = vrot.lane.b32.xlu0 %v1754, 32
    %v1757 = vpop.permute.xlu0 %1756
    %v1758 = vsel %vm66, %v1757, 0
    %1760 = vmatprep.subr.mxu0 0.0
    %1761 = vmatpush1.msra.mxu0 %v141
    %1762 = vmatprep.subr.mxu0 0.0
    %1763 = vmatpush1.msra.mxu0 %v142
    %1764 = vmatprep.subr.mxu0 0.0
    %1765 = vmatpush1.msra.mxu0 %v143
    %1766 = vmatprep.subr.mxu0 0.0
    %1767 = vmatpush1.msra.mxu0 %v144
    %1768 = vmatprep.subr.mxu0 0.0
    %1769 = vmatpush1.msra.mxu0 0.0
    %1770 = vmatprep.subr.mxu0 0.0
    %1771 = vmatpush1.msra.mxu0 0.0
    %1772 = vmatprep.subr.mxu0 0.0
    %1773 = vmatpush1.msra.mxu0 0.0
    %1774 = vmatprep.subr.mxu0 0.0
    %1775 = vmatpush1.msra.mxu0 0.0
    %1776 = vmatprep.subr.mxu0 0.0
    %1777 = vmatpush1.msra.mxu0 0.0
    %1778 = vmatprep.subr.mxu0 0.0
    %1779 = vmatpush1.msra.mxu0 0.0
    %1780 = vmatprep.subr.mxu0 0.0
    %1781 = vmatpush1.msra.mxu0 0.0
    %1782 = vmatprep.subr.mxu0 0.0
    %1783 = vmatpush1.msra.mxu0 0.0
    %1784 = vmatprep.subr.mxu0 0.0
    %1785 = vmatpush1.msra.mxu0 0.0
    %1786 = vmatprep.subr.mxu0 0.0
    %1787 = vmatpush1.msra.mxu0 0.0
    %1788 = vmatprep.subr.mxu0 0.0
    %1789 = vmatpush1.msra.mxu0 0.0
    %1790 = vmatprep.subr.mxu0 0.0
    %1791 = vmatpush1.msra.mxu0 0.0
    %1792 = vmatprep.subr.mxu0 0.0
    %1793 = vmatpush1.msra.mxu0 0.0
    %1794 = vmatprep.subr.mxu0 0.0
    %1795 = vmatpush1.msra.mxu0 0.0
    %1796 = vmatprep.subr.mxu0 0.0
    %1797 = vmatpush1.msra.mxu0 0.0
    %1798 = vmatprep.subr.mxu0 0.0
    %1799 = vmatpush1.msra.mxu0 0.0
    %1800 = vmatprep.subr.mxu0 0.0
    %1801 = vmatpush1.msra.mxu0 0.0
    %1802 = vmatprep.subr.mxu0 0.0
    %1803 = vmatpush1.msra.mxu0 0.0
    %1804 = vmatprep.subr.mxu0 0.0
    %1805 = vmatpush1.msra.mxu0 0.0
    %1806 = vmatprep.subr.mxu0 0.0
    %1807 = vmatpush1.msra.mxu0 0.0
    %1808 = vmatprep.subr.mxu0 0.0
    %1809 = vmatpush1.msra.mxu0 0.0
    %1810 = vmatprep.subr.mxu0 0.0
    %1811 = vmatpush1.msra.mxu0 0.0
    %1812 = vmatprep.subr.mxu0 0.0
    %1813 = vmatpush1.msra.mxu0 0.0
    %1814 = vmatprep.subr.mxu0 0.0
    %1815 = vmatpush1.msra.mxu0 0.0
    %1816 = vmatprep.subr.mxu0 0.0
    %1817 = vmatpush1.msra.mxu0 0.0
    %1818 = vmatprep.subr.mxu0 0.0
    %1819 = vmatpush1.msra.mxu0 0.0
    %1820 = vmatprep.subr.mxu0 0.0
    %1821 = vmatpush1.msra.mxu0 0.0
    %1822 = vmatprep.subr.mxu0 0.0
    %1823 = vmatpush1.msra.mxu0 0.0
    %1824 = vmatprep.mubr.f32.mxu0 0.0
    %1825 = vmatmul.mubr.f32.gmra.mrb[0].mxu0 %v1758
    %v1826 = vpop.f32.mrb[0].mxu0
    %v1827 = vadd.f32 0.0, %v1826
    %v1828 = vpop.f32.mrb[0].mxu0
    %1829 = vdwg.mxu0
    %v1830 = vlaneseq
    %v1831 = vshrl.u32 %v1830, 7
    %v1832 = vsub.s32 0, %v1831
    %v1833 = vrot.slane %v1827, %v1832
    %1835 = vrot.lane.b32.xlu0 %v1833, 32
    %v1836 = vpop.permute.xlu0 %1835
    %v1838 = vadd.f32 %v137, %v1836
    %v1839 = vtanh.pop %v1838
    %1841 = vrot.lane.b32.xlu0 %v1839, 96
    %v1842 = vpop.permute.xlu0 %1841
    %v1843 = vsel %vm66, %v1842, 0
    %1845 = vmatprep.subr.mxu0 0.0
    %1846 = vmatpush1.msra.mxu0 %v346
    %1847 = vmatprep.subr.mxu0 0.0
    %1848 = vmatpush1.msra.mxu0 %v348
    %1849 = vmatprep.subr.mxu0 0.0
    %1850 = vmatpush1.msra.mxu0 %v350
    %1851 = vmatprep.subr.mxu0 0.0
    %1852 = vmatpush1.msra.mxu0 %v352
    %1853 = vmatprep.subr.mxu0 0.0
    %1854 = vmatpush1.msra.mxu0 0.0
    %1855 = vmatprep.subr.mxu0 0.0
    %1856 = vmatpush1.msra.mxu0 0.0
    %1857 = vmatprep.subr.mxu0 0.0
    %1858 = vmatpush1.msra.mxu0 0.0
    %1859 = vmatprep.subr.mxu0 0.0
    %1860 = vmatpush1.msra.mxu0 0.0
    %1861 = vmatprep.subr.mxu0 0.0
    %1862 = vmatpush1.msra.mxu0 0.0
    %1863 = vmatprep.subr.mxu0 0.0
    %1864 = vmatpush1.msra.mxu0 0.0
    %1865 = vmatprep.subr.mxu0 0.0
    %1866 = vmatpush1.msra.mxu0 0.0
    %1867 = vmatprep.subr.mxu0 0.0
    %1868 = vmatpush1.msra.mxu0 0.0
    %1869 = vmatprep.subr.mxu0 0.0
    %1870 = vmatpush1.msra.mxu0 0.0
    %1871 = vmatprep.subr.mxu0 0.0
    %1872 = vmatpush1.msra.mxu0 0.0
    %1873 = vmatprep.subr.mxu0 0.0
    %1874 = vmatpush1.msra.mxu0 0.0
    %1875 = vmatprep.subr.mxu0 0.0
    %1876 = vmatpush1.msra.mxu0 0.0
    %1877 = vmatprep.subr.mxu0 0.0
    %1878 = vmatpush1.msra.mxu0 0.0
    %1879 = vmatprep.subr.mxu0 0.0
    %1880 = vmatpush1.msra.mxu0 0.0
    %1881 = vmatprep.subr.mxu0 0.0
    %1882 = vmatpush1.msra.mxu0 0.0
    %1883 = vmatprep.subr.mxu0 0.0
    %1884 = vmatpush1.msra.mxu0 0.0
    %1885 = vmatprep.subr.mxu0 0.0
    %1886 = vmatpush1.msra.mxu0 0.0
    %1887 = vmatprep.subr.mxu0 0.0
    %1888 = vmatpush1.msra.mxu0 0.0
    %1889 = vmatprep.subr.mxu0 0.0
    %1890 = vmatpush1.msra.mxu0 0.0
    %1891 = vmatprep.subr.mxu0 0.0
    %1892 = vmatpush1.msra.mxu0 0.0
    %1893 = vmatprep.subr.mxu0 0.0
    %1894 = vmatpush1.msra.mxu0 0.0
    %1895 = vmatprep.subr.mxu0 0.0
    %1896 = vmatpush1.msra.mxu0 0.0
    %1897 = vmatprep.subr.mxu0 0.0
    %1898 = vmatpush1.msra.mxu0 0.0
    %1899 = vmatprep.subr.mxu0 0.0
    %1900 = vmatpush1.msra.mxu0 0.0
    %1901 = vmatprep.subr.mxu0 0.0
    %1902 = vmatpush1.msra.mxu0 0.0
    %1903 = vmatprep.subr.mxu0 0.0
    %1904 = vmatpush1.msra.mxu0 0.0
    %1905 = vmatprep.subr.mxu0 0.0
    %1906 = vmatpush1.msra.mxu0 0.0
    %1907 = vmatprep.subr.mxu0 0.0
    %1908 = vmatpush1.msra.mxu0 0.0
    %1909 = vmatprep.mubr.f32.mxu0 0.0
    %1910 = vmatmul.mubr.f32.gmra.mrb[0].mxu0 %v1843
    %v1911 = vpop.f32.mrb[0].mxu0
    %v1912 = vadd.f32 0.0, %v1911
    %v1913 = vpop.f32.mrb[0].mxu0
    %1914 = vdwg.mxu0
    %v1915 = vsel %vm429, %v1912, -inf
    %v1916 = vrot.slane %v1915, 4
    %v1917 = vmax.f32 %v1915, %v1916
    %v1918 = vrot.slane %v1917, 2
    %v1919 = vmax.f32 %v1917, %v1918
    %v1920 = vrot.slane %v1919, 1
    %v1921 = vmax.f32 %v1919, %v1920
    %v1922 = vsub.f32 %v1912, %v1921
    %v1923 = vmul.f32 %v1922, 1.442695
    %v1924 = vpow.pop %v1923
    %v1925 = vsel %vm429, %v1924, 0.0
    %v1926 = vrot.slane %v1925, 4
    %v1927 = vadd.f32 %v1925, %v1926
    %v1928 = vrot.slane %v1927, 2
    %v1929 = vadd.f32 %v1927, %v1928
    %v1930 = vrot.slane %v1929, 1
    %v1931 = vadd.f32 %v1929, %v1930
    %v1932 = vrcp.pop %v1931
    %v1933 = vmul.f32 %v1924, %v1932
    %1934 = vxpose.xlu0.b32.start [1/16] %v1933, 128
    %1935 = vxpose.xlu0.b32.cont [2/16] 0.0, 128
    %1936 = vxpose.xlu0.b32.cont [3/16] 0.0, 128
    %1937 = vxpose.xlu0.b32.cont [4/16] 0.0, 128
    %1938 = vxpose.xlu0.b32.cont [5/16] 0.0, 128
    %1939 = vxpose.xlu0.b32.cont [6/16] 0.0, 128
    %1940 = vxpose.xlu0.b32.cont [7/16] 0.0, 128
    %1941 = vxpose.xlu0.b32.cont [8/16] 0.0, 128
    %1942 = vxpose.xlu0.b32.cont [9/16] 0.0, 128
    %1943 = vxpose.xlu0.b32.cont [10/16] 0.0, 128
    %1944 = vxpose.xlu0.b32.cont [11/16] 0.0, 128
    %1945 = vxpose.xlu0.b32.cont [12/16] 0.0, 128
    %1946 = vxpose.xlu0.b32.cont [13/16] 0.0, 128
    %1947 = vxpose.xlu0.b32.cont [14/16] 0.0, 128
    %1948 = vxpose.xlu0.b32.cont [15/16] 0.0, 128
    %1949 = vxpose.xlu0.b32.end [16/16] 0.0, 128
    %v1950 = vpop.trf.xlu0
    %v1951 = vpop.trf.xlu0
    %v1952 = vpop.trf.xlu0
    %v1953 = vpop.trf.xlu0
    %v1954 = vpop.trf.xlu0
    %v1955 = vpop.trf.xlu0
    %v1956 = vpop.trf.xlu0
    %v1957 = vpop.trf.xlu0
    %v1958 = vpop.trf.xlu0
    %v1959 = vpop.trf.xlu0
    %v1960 = vpop.trf.xlu0
    %v1961 = vpop.trf.xlu0
    %v1962 = vpop.trf.xlu0
    %v1963 = vpop.trf.xlu0
    %v1964 = vpop.trf.xlu0
    %v1965 = vpop.trf.xlu0
    %v1967 = vsel %vm481, %v1950, 0
    %1969 = vmatprep.subr.mxu0 0.0
    %1970 = vmatpush1.msra.mxu0 %v217
    %1971 = vmatprep.subr.mxu0 0.0
    %1972 = vmatpush1.msra.mxu0 0.0
    %1973 = vmatprep.subr.mxu0 0.0
    %1974 = vmatpush1.msra.mxu0 0.0
    %1975 = vmatprep.subr.mxu0 0.0
    %1976 = vmatpush1.msra.mxu0 0.0
    %1977 = vmatprep.subr.mxu0 0.0
    %1978 = vmatpush1.msra.mxu0 0.0
    %1979 = vmatprep.subr.mxu0 0.0
    %1980 = vmatpush1.msra.mxu0 0.0
    %1981 = vmatprep.subr.mxu0 0.0
    %1982 = vmatpush1.msra.mxu0 0.0
    %1983 = vmatprep.subr.mxu0 0.0
    %1984 = vmatpush1.msra.mxu0 0.0
    %1985 = vmatprep.subr.mxu0 0.0
    %1986 = vmatpush1.msra.mxu0 0.0
    %1987 = vmatprep.subr.mxu0 0.0
    %1988 = vmatpush1.msra.mxu0 0.0
    %1989 = vmatprep.subr.mxu0 0.0
    %1990 = vmatpush1.msra.mxu0 0.0
    %1991 = vmatprep.subr.mxu0 0.0
    %1992 = vmatpush1.msra.mxu0 0.0
    %1993 = vmatprep.subr.mxu0 0.0
    %1994 = vmatpush1.msra.mxu0 0.0
    %1995 = vmatprep.subr.mxu0 0.0
    %1996 = vmatpush1.msra.mxu0 0.0
    %1997 = vmatprep.subr.mxu0 0.0
    %1998 = vmatpush1.msra.mxu0 0.0
    %1999 = vmatprep.subr.mxu0 0.0
    %2000 = vmatpush1.msra.mxu0 0.0
    %2001 = vmatprep.subr.mxu0 0.0
    %2002 = vmatpush1.msra.mxu0 0.0
    %2003 = vmatprep.subr.mxu0 0.0
    %2004 = vmatpush1.msra.mxu0 0.0
    %2005 = vmatprep.subr.mxu0 0.0
    %2006 = vmatpush1.msra.mxu0 0.0
    %2007 = vmatprep.subr.mxu0 0.0
    %2008 = vmatpush1.msra.mxu0 0.0
    %2009 = vmatprep.subr.mxu0 0.0
    %2010 = vmatpush1.msra.mxu0 0.0
    %2011 = vmatprep.subr.mxu0 0.0
    %2012 = vmatpush1.msra.mxu0 0.0
    %2013 = vmatprep.subr.mxu0 0.0
    %2014 = vmatpush1.msra.mxu0 0.0
    %2015 = vmatprep.subr.mxu0 0.0
    %2016 = vmatpush1.msra.mxu0 0.0
    %2017 = vmatprep.subr.mxu0 0.0
    %2018 = vmatpush1.msra.mxu0 0.0
    %2019 = vmatprep.subr.mxu0 0.0
    %2020 = vmatpush1.msra.mxu0 0.0
    %2021 = vmatprep.subr.mxu0 0.0
    %2022 = vmatpush1.msra.mxu0 0.0
    %2023 = vmatprep.subr.mxu0 0.0
    %2024 = vmatpush1.msra.mxu0 0.0
    %2025 = vmatprep.subr.mxu0 0.0
    %2026 = vmatpush1.msra.mxu0 0.0
    %2027 = vmatprep.subr.mxu0 0.0
    %2028 = vmatpush1.msra.mxu0 0.0
    %2029 = vmatprep.subr.mxu0 0.0
    %2030 = vmatpush1.msra.mxu0 0.0
    %2031 = vmatprep.subr.mxu0 0.0
    %2032 = vmatpush1.msra.mxu0 0.0
    %2033 = vmatprep.mubr.f32.mxu0 0.0
    %2034 = vmatmul.mubr.f32.gmra.mrb[0].mxu0 %v1967
    %v2035 = vpop.f32.mrb[0].mxu0
    %v2036 = vadd.f32 0.0, %v2035
    %v2037 = vpop.f32.mrb[0].mxu0
    %2038 = vdwg.mxu0
    %v2039 = vlaneseq
    %v2040 = vshrl.u32 %v2039, 7
    %v2041 = vsub.s32 0, %v2040
    %v2042 = vrot.slane %v2036, %v2041
    %2044 = vrot.lane.b32.xlu0 %v2042, 32
    %v2045 = vpop.permute.xlu0 %2044
    %v2047 = vadd.f32 %v137, %v2045
    %v2048 = vtanh.pop %v2047
    %2050 = vrot.lane.b32.xlu0 %v2048, 96
    %v2051 = vpop.permute.xlu0 %2050
    %v2052 = vsel %vm66, %v2051, 0
    %2054 = vmatprep.subr.mxu0 0.0
    %2055 = vmatpush1.msra.mxu0 %v346
    %2056 = vmatprep.subr.mxu0 0.0
    %2057 = vmatpush1.msra.mxu0 %v348
    %2058 = vmatprep.subr.mxu0 0.0
    %2059 = vmatpush1.msra.mxu0 %v350
    %2060 = vmatprep.subr.mxu0 0.0
    %2061 = vmatpush1.msra.mxu0 %v352
    %2062 = vmatprep.subr.mxu0 0.0
    %2063 = vmatpush1.msra.mxu0 0.0
    %2064 = vmatprep.subr.mxu0 0.0
    %2065 = vmatpush1.msra.mxu0 0.0
    %2066 = vmatprep.subr.mxu0 0.0
    %2067 = vmatpush1.msra.mxu0 0.0
    %2068 = vmatprep.subr.mxu0 0.0
    %2069 = vmatpush1.msra.mxu0 0.0
    %2070 = vmatprep.subr.mxu0 0.0
    %2071 = vmatpush1.msra.mxu0 0.0
    %2072 = vmatprep.subr.mxu0 0.0
    %2073 = vmatpush1.msra.mxu0 0.0
    %2074 = vmatprep.subr.mxu0 0.0
    %2075 = vmatpush1.msra.mxu0 0.0
    %2076 = vmatprep.subr.mxu0 0.0
    %2077 = vmatpush1.msra.mxu0 0.0
    %2078 = vmatprep.subr.mxu0 0.0
    %2079 = vmatpush1.msra.mxu0 0.0
    %2080 = vmatprep.subr.mxu0 0.0
    %2081 = vmatpush1.msra.mxu0 0.0
    %2082 = vmatprep.subr.mxu0 0.0
    %2083 = vmatpush1.msra.mxu0 0.0
    %2084 = vmatprep.subr.mxu0 0.0
    %2085 = vmatpush1.msra.mxu0 0.0
    %2086 = vmatprep.subr.mxu0 0.0
    %2087 = vmatpush1.msra.mxu0 0.0
    %2088 = vmatprep.subr.mxu0 0.0
    %2089 = vmatpush1.msra.mxu0 0.0
    %2090 = vmatprep.subr.mxu0 0.0
    %2091 = vmatpush1.msra.mxu0 0.0
    %2092 = vmatprep.subr.mxu0 0.0
    %2093 = vmatpush1.msra.mxu0 0.0
    %2094 = vmatprep.subr.mxu0 0.0
    %2095 = vmatpush1.msra.mxu0 0.0
    %2096 = vmatprep.subr.mxu0 0.0
    %2097 = vmatpush1.msra.mxu0 0.0
    %2098 = vmatprep.subr.mxu0 0.0
    %2099 = vmatpush1.msra.mxu0 0.0
    %2100 = vmatprep.subr.mxu0 0.0
    %2101 = vmatpush1.msra.mxu0 0.0
    %2102 = vmatprep.subr.mxu0 0.0
    %2103 = vmatpush1.msra.mxu0 0.0
    %2104 = vmatprep.subr.mxu0 0.0
    %2105 = vmatpush1.msra.mxu0 0.0
    %2106 = vmatprep.subr.mxu0 0.0
    %2107 = vmatpush1.msra.mxu0 0.0
    %2108 = vmatprep.subr.mxu0 0.0
    %2109 = vmatpush1.msra.mxu0 0.0
    %2110 = vmatprep.subr.mxu0 0.0
    %2111 = vmatpush1.msra.mxu0 0.0
    %2112 = vmatprep.subr.mxu0 0.0
    %2113 = vmatpush1.msra.mxu0 0.0
    %2114 = vmatprep.subr.mxu0 0.0
    %2115 = vmatpush1.msra.mxu0 0.0
    %2116 = vmatprep.subr.mxu0 0.0
    %2117 = vmatpush1.msra.mxu0 0.0
    %2118 = vmatprep.mubr.f32.mxu0 0.0
    %2119 = vmatmul.mubr.f32.gmra.mrb[0].mxu0 %v2052
    %v2120 = vpop.f32.mrb[0].mxu0
    %v2121 = vadd.f32 0.0, %v2120
    %v2122 = vpop.f32.mrb[0].mxu0
    %2123 = vdwg.mxu0
    %v2124 = vsel %vm429, %v2121, -inf
    %v2125 = vrot.slane %v2124, 4
    %v2126 = vmax.f32 %v2124, %v2125
    %v2127 = vrot.slane %v2126, 2
    %v2128 = vmax.f32 %v2126, %v2127
    %v2129 = vrot.slane %v2128, 1
    %v2130 = vmax.f32 %v2128, %v2129
    %v2131 = vsub.f32 %v2121, %v2130
    %v2132 = vmul.f32 %v2131, 1.442695
    %v2133 = vpow.pop %v2132
    %v2134 = vsel %vm429, %v2133, 0.0
    %v2135 = vrot.slane %v2134, 4
    %v2136 = vadd.f32 %v2134, %v2135
    %v2137 = vrot.slane %v2136, 2
    %v2138 = vadd.f32 %v2136, %v2137
    %v2139 = vrot.slane %v2138, 1
    %v2140 = vadd.f32 %v2138, %v2139
    %v2141 = vrcp.pop %v2140
    %v2142 = vmul.f32 %v2133, %v2141
    %2143 = vxpose.xlu0.b32.start [1/16] %v2142, 128
    %2144 = vxpose.xlu0.b32.cont [2/16] 0.0, 128
    %2145 = vxpose.xlu0.b32.cont [3/16] 0.0, 128
    %2146 = vxpose.xlu0.b32.cont [4/16] 0.0, 128
    %2147 = vxpose.xlu0.b32.cont [5/16] 0.0, 128
    %2148 = vxpose.xlu0.b32.cont [6/16] 0.0, 128
    %2149 = vxpose.xlu0.b32.cont [7/16] 0.0, 128
    %2150 = vxpose.xlu0.b32.cont [8/16] 0.0, 128
    %2151 = vxpose.xlu0.b32.cont [9/16] 0.0, 128
    %2152 = vxpose.xlu0.b32.cont [10/16] 0.0, 128
    %2153 = vxpose.xlu0.b32.cont [11/16] 0.0, 128
    %2154 = vxpose.xlu0.b32.cont [12/16] 0.0, 128
    %2155 = vxpose.xlu0.b32.cont [13/16] 0.0, 128
    %2156 = vxpose.xlu0.b32.cont [14/16] 0.0, 128
    %2157 = vxpose.xlu0.b32.cont [15/16] 0.0, 128
    %2158 = vxpose.xlu0.b32.end [16/16] 0.0, 128
    %v2159 = vpop.trf.xlu0
    %v2160 = vpop.trf.xlu0
    %v2161 = vpop.trf.xlu0
    %v2162 = vpop.trf.xlu0
    %v2163 = vpop.trf.xlu0
    %v2164 = vpop.trf.xlu0
    %v2165 = vpop.trf.xlu0
    %v2166 = vpop.trf.xlu0
    %v2167 = vpop.trf.xlu0
    %v2168 = vpop.trf.xlu0
    %v2169 = vpop.trf.xlu0
    %v2170 = vpop.trf.xlu0
    %v2171 = vpop.trf.xlu0
    %v2172 = vpop.trf.xlu0
    %v2173 = vpop.trf.xlu0
    %v2174 = vpop.trf.xlu0
    %v2176 = vsel %vm481, %v2159, 0
    %2178 = vmatprep.subr.mxu0 0.0
    %2179 = vmatpush1.msra.mxu0 %v693
    %2180 = vmatprep.subr.mxu0 0.0
    %2181 = vmatpush1.msra.mxu0 0.0
    %2182 = vmatprep.subr.mxu0 0.0
    %2183 = vmatpush1.msra.mxu0 0.0
    %2184 = vmatprep.subr.mxu0 0.0
    %2185 = vmatpush1.msra.mxu0 0.0
    %2186 = vmatprep.subr.mxu0 0.0
    %2187 = vmatpush1.msra.mxu0 0.0
    %2188 = vmatprep.subr.mxu0 0.0
    %2189 = vmatpush1.msra.mxu0 0.0
    %2190 = vmatprep.subr.mxu0 0.0
    %2191 = vmatpush1.msra.mxu0 0.0
    %2192 = vmatprep.subr.mxu0 0.0
    %2193 = vmatpush1.msra.mxu0 0.0
    %2194 = vmatprep.subr.mxu0 0.0
    %2195 = vmatpush1.msra.mxu0 0.0
    %2196 = vmatprep.subr.mxu0 0.0
    %2197 = vmatpush1.msra.mxu0 0.0
    %2198 = vmatprep.subr.mxu0 0.0
    %2199 = vmatpush1.msra.mxu0 0.0
    %2200 = vmatprep.subr.mxu0 0.0
    %2201 = vmatpush1.msra.mxu0 0.0
    %2202 = vmatprep.subr.mxu0 0.0
    %2203 = vmatpush1.msra.mxu0 0.0
    %2204 = vmatprep.subr.mxu0 0.0
    %2205 = vmatpush1.msra.mxu0 0.0
    %2206 = vmatprep.subr.mxu0 0.0
    %2207 = vmatpush1.msra.mxu0 0.0
    %2208 = vmatprep.subr.mxu0 0.0
    %2209 = vmatpush1.msra.mxu0 0.0
    %2210 = vmatprep.subr.mxu0 0.0
    %2211 = vmatpush1.msra.mxu0 0.0
    %2212 = vmatprep.subr.mxu0 0.0
    %2213 = vmatpush1.msra.mxu0 0.0
    %2214 = vmatprep.subr.mxu0 0.0
    %2215 = vmatpush1.msra.mxu0 0.0
    %2216 = vmatprep.subr.mxu0 0.0
    %2217 = vmatpush1.msra.mxu0 0.0
    %2218 = vmatprep.subr.mxu0 0.0
    %2219 = vmatpush1.msra.mxu0 0.0
    %2220 = vmatprep.subr.mxu0 0.0
    %2221 = vmatpush1.msra.mxu0 0.0
    %2222 = vmatprep.subr.mxu0 0.0
    %2223 = vmatpush1.msra.mxu0 0.0
    %2224 = vmatprep.subr.mxu0 0.0
    %2225 = vmatpush1.msra.mxu0 0.0
    %2226 = vmatprep.subr.mxu0 0.0
    %2227 = vmatpush1.msra.mxu0 0.0
    %2228 = vmatprep.subr.mxu0 0.0
    %2229 = vmatpush1.msra.mxu0 0.0
    %2230 = vmatprep.subr.mxu0 0.0
    %2231 = vmatpush1.msra.mxu0 0.0
    %2232 = vmatprep.subr.mxu0 0.0
    %2233 = vmatpush1.msra.mxu0 0.0
    %2234 = vmatprep.subr.mxu0 0.0
    %2235 = vmatpush1.msra.mxu0 0.0
    %2236 = vmatprep.subr.mxu0 0.0
    %2237 = vmatpush1.msra.mxu0 0.0
    %2238 = vmatprep.subr.mxu0 0.0
    %2239 = vmatpush1.msra.mxu0 0.0
    %2240 = vmatprep.subr.mxu0 0.0
    %2241 = vmatpush1.msra.mxu0 0.0
    %2242 = vmatprep.mubr.f32.mxu0 0.0
    %2243 = vmatmul.mubr.f32.gmra.mrb[0].mxu0 %v2176
    %v2244 = vpop.f32.mrb[0].mxu0
    %v2245 = vadd.f32 0.0, %v2244
    %v2246 = vpop.f32.mrb[0].mxu0
    %2247 = vdwg.mxu0
    %v2248 = vlaneseq
    %v2249 = vshrl.u32 %v2248, 7
    %v2250 = vsub.s32 0, %v2249
    %v2251 = vrot.slane %v2245, %v2250
    %v2252 = vadd.f32 %v137, %v2251
    %v2253 = vtanh.pop %v2252
    %v2255 = vsel %vm66, %v2253, 0
    %2257 = vmatprep.subr.mxu0 0.0
    %2258 = vmatpush1.msra.mxu0 %v775
    %2259 = vmatprep.subr.mxu0 0.0
    %2260 = vmatpush1.msra.mxu0 %v777
    %2261 = vmatprep.subr.mxu0 0.0
    %2262 = vmatpush1.msra.mxu0 %v779
    %2263 = vmatprep.subr.mxu0 0.0
    %2264 = vmatpush1.msra.mxu0 %v781
    %2265 = vmatprep.subr.mxu0 0.0
    %2266 = vmatpush1.msra.mxu0 0.0
    %2267 = vmatprep.subr.mxu0 0.0
    %2268 = vmatpush1.msra.mxu0 0.0
    %2269 = vmatprep.subr.mxu0 0.0
    %2270 = vmatpush1.msra.mxu0 0.0
    %2271 = vmatprep.subr.mxu0 0.0
    %2272 = vmatpush1.msra.mxu0 0.0
    %2273 = vmatprep.subr.mxu0 0.0
    %2274 = vmatpush1.msra.mxu0 0.0
    %2275 = vmatprep.subr.mxu0 0.0
    %2276 = vmatpush1.msra.mxu0 0.0
    %2277 = vmatprep.subr.mxu0 0.0
    %2278 = vmatpush1.msra.mxu0 0.0
    %2279 = vmatprep.subr.mxu0 0.0
    %2280 = vmatpush1.msra.mxu0 0.0
    %2281 = vmatprep.subr.mxu0 0.0
    %2282 = vmatpush1.msra.mxu0 0.0
    %2283 = vmatprep.subr.mxu0 0.0
    %2284 = vmatpush1.msra.mxu0 0.0
    %2285 = vmatprep.subr.mxu0 0.0
    %2286 = vmatpush1.msra.mxu0 0.0
    %2287 = vmatprep.subr.mxu0 0.0
    %2288 = vmatpush1.msra.mxu0 0.0
    %2289 = vmatprep.subr.mxu0 0.0
    %2290 = vmatpush1.msra.mxu0 0.0
    %2291 = vmatprep.subr.mxu0 0.0
    %2292 = vmatpush1.msra.mxu0 0.0
    %2293 = vmatprep.subr.mxu0 0.0
    %2294 = vmatpush1.msra.mxu0 0.0
    %2295 = vmatprep.subr.mxu0 0.0
    %2296 = vmatpush1.msra.mxu0 0.0
    %2297 = vmatprep.subr.mxu0 0.0
    %2298 = vmatpush1.msra.mxu0 0.0
    %2299 = vmatprep.subr.mxu0 0.0
    %2300 = vmatpush1.msra.mxu0 0.0
    %2301 = vmatprep.subr.mxu0 0.0
    %2302 = vmatpush1.msra.mxu0 0.0
    %2303 = vmatprep.subr.mxu0 0.0
    %2304 = vmatpush1.msra.mxu0 0.0
    %2305 = vmatprep.subr.mxu0 0.0
    %2306 = vmatpush1.msra.mxu0 0.0
    %2307 = vmatprep.subr.mxu0 0.0
    %2308 = vmatpush1.msra.mxu0 0.0
    %2309 = vmatprep.subr.mxu0 0.0
    %2310 = vmatpush1.msra.mxu0 0.0
    %2311 = vmatprep.subr.mxu0 0.0
    %2312 = vmatpush1.msra.mxu0 0.0
    %2313 = vmatprep.subr.mxu0 0.0
    %2314 = vmatpush1.msra.mxu0 0.0
    %2315 = vmatprep.subr.mxu0 0.0
    %2316 = vmatpush1.msra.mxu0 0.0
    %2317 = vmatprep.subr.mxu0 0.0
    %2318 = vmatpush1.msra.mxu0 0.0
    %2319 = vmatprep.subr.mxu0 0.0
    %2320 = vmatpush1.msra.mxu0 0.0
    %2321 = vmatprep.mubr.f32.mxu0 0.0
    %2322 = vmatmul.mubr.f32.gmra.mrb[0].mxu0 %v2255
    %v2323 = vpop.f32.mrb[0].mxu0
    %v2324 = vadd.f32 0.0, %v2323
    %v2325 = vpop.f32.mrb[0].mxu0
    %2326 = vdwg.mxu0
    %v2327 = vsel %vm429, %v2324, -inf
    %v2328 = vrot.slane %v2327, 4
    %v2329 = vmax.f32 %v2327, %v2328
    %v2330 = vrot.slane %v2329, 2
    %v2331 = vmax.f32 %v2329, %v2330
    %v2332 = vrot.slane %v2331, 1
    %v2333 = vmax.f32 %v2331, %v2332
    %v2334 = vsub.f32 %v2324, %v2333
    %v2335 = vmul.f32 %v2334, 1.442695
    %v2336 = vpow.pop %v2335
    %v2337 = vsel %vm429, %v2336, 0.0
    %v2338 = vrot.slane %v2337, 4
    %v2339 = vadd.f32 %v2337, %v2338
    %v2340 = vrot.slane %v2339, 2
    %v2341 = vadd.f32 %v2339, %v2340
    %v2342 = vrot.slane %v2341, 1
    %v2343 = vadd.f32 %v2341, %v2342
    %v2344 = vrcp.pop %v2343
    %v2345 = vmul.f32 %v2336, %v2344
    %2346 = vxpose.xlu0.b32.start [1/16] %v2345, 128
    %2347 = vxpose.xlu0.b32.cont [2/16] 0.0, 128
    %2348 = vxpose.xlu0.b32.cont [3/16] 0.0, 128
    %2349 = vxpose.xlu0.b32.cont [4/16] 0.0, 128
    %2350 = vxpose.xlu0.b32.cont [5/16] 0.0, 128
    %2351 = vxpose.xlu0.b32.cont [6/16] 0.0, 128
    %2352 = vxpose.xlu0.b32.cont [7/16] 0.0, 128
    %2353 = vxpose.xlu0.b32.cont [8/16] 0.0, 128
    %2354 = vxpose.xlu0.b32.cont [9/16] 0.0, 128
    %2355 = vxpose.xlu0.b32.cont [10/16] 0.0, 128
    %2356 = vxpose.xlu0.b32.cont [11/16] 0.0, 128
    %2357 = vxpose.xlu0.b32.cont [12/16] 0.0, 128
    %2358 = vxpose.xlu0.b32.cont [13/16] 0.0, 128
    %2359 = vxpose.xlu0.b32.cont [14/16] 0.0, 128
    %2360 = vxpose.xlu0.b32.cont [15/16] 0.0, 128
    %2361 = vxpose.xlu0.b32.end [16/16] 0.0, 128
    %v2362 = vpop.trf.xlu0
    %v2363 = vpop.trf.xlu0
    %v2364 = vpop.trf.xlu0
    %v2365 = vpop.trf.xlu0
    %v2366 = vpop.trf.xlu0
    %v2367 = vpop.trf.xlu0
    %v2368 = vpop.trf.xlu0
    %v2369 = vpop.trf.xlu0
    %v2370 = vpop.trf.xlu0
    %v2371 = vpop.trf.xlu0
    %v2372 = vpop.trf.xlu0
    %v2373 = vpop.trf.xlu0
    %v2374 = vpop.trf.xlu0
    %v2375 = vpop.trf.xlu0
    %v2376 = vpop.trf.xlu0
    %v2377 = vpop.trf.xlu0
    %v2379 = vsel %vm481, %v2362, 0
    %2381 = vmatprep.subr.mxu0 %v914
    %2382 = vmatpush1.msra.mxu0 %v916
    %2383 = vmatprep.subr.mxu0 0.0
    %2384 = vmatpush1.msra.mxu0 0.0
    %2385 = vmatprep.subr.mxu0 0.0
    %2386 = vmatpush1.msra.mxu0 0.0
    %2387 = vmatprep.subr.mxu0 0.0
    %2388 = vmatpush1.msra.mxu0 0.0
    %2389 = vmatprep.subr.mxu0 0.0
    %2390 = vmatpush1.msra.mxu0 0.0
    %2391 = vmatprep.subr.mxu0 0.0
    %2392 = vmatpush1.msra.mxu0 0.0
    %2393 = vmatprep.subr.mxu0 0.0
    %2394 = vmatpush1.msra.mxu0 0.0
    %2395 = vmatprep.subr.mxu0 0.0
    %2396 = vmatpush1.msra.mxu0 0.0
    %2397 = vmatprep.subr.mxu0 0.0
    %2398 = vmatpush1.msra.mxu0 0.0
    %2399 = vmatprep.subr.mxu0 0.0
    %2400 = vmatpush1.msra.mxu0 0.0
    %2401 = vmatprep.subr.mxu0 0.0
    %2402 = vmatpush1.msra.mxu0 0.0
    %2403 = vmatprep.subr.mxu0 0.0
    %2404 = vmatpush1.msra.mxu0 0.0
    %2405 = vmatprep.subr.mxu0 0.0
    %2406 = vmatpush1.msra.mxu0 0.0
    %2407 = vmatprep.subr.mxu0 0.0
    %2408 = vmatpush1.msra.mxu0 0.0
    %2409 = vmatprep.subr.mxu0 0.0
    %2410 = vmatpush1.msra.mxu0 0.0
    %2411 = vmatprep.subr.mxu0 0.0
    %2412 = vmatpush1.msra.mxu0 0.0
    %2413 = vmatprep.subr.mxu0 0.0
    %2414 = vmatpush1.msra.mxu0 0.0
    %2415 = vmatprep.subr.mxu0 0.0
    %2416 = vmatpush1.msra.mxu0 0.0
    %2417 = vmatprep.subr.mxu0 0.0
    %2418 = vmatpush1.msra.mxu0 0.0
    %2419 = vmatprep.subr.mxu0 0.0
    %2420 = vmatpush1.msra.mxu0 0.0
    %2421 = vmatprep.subr.mxu0 0.0
    %2422 = vmatpush1.msra.mxu0 0.0
    %2423 = vmatprep.subr.mxu0 0.0
    %2424 = vmatpush1.msra.mxu0 0.0
    %2425 = vmatprep.subr.mxu0 0.0
    %2426 = vmatpush1.msra.mxu0 0.0
    %2427 = vmatprep.subr.mxu0 0.0
    %2428 = vmatpush1.msra.mxu0 0.0
    %2429 = vmatprep.subr.mxu0 0.0
    %2430 = vmatpush1.msra.mxu0 0.0
    %2431 = vmatprep.subr.mxu0 0.0
    %2432 = vmatpush1.msra.mxu0 0.0
    %2433 = vmatprep.subr.mxu0 0.0
    %2434 = vmatpush1.msra.mxu0 0.0
    %2435 = vmatprep.subr.mxu0 0.0
    %2436 = vmatpush1.msra.mxu0 0.0
    %2437 = vmatprep.subr.mxu0 0.0
    %2438 = vmatpush1.msra.mxu0 0.0
    %2439 = vmatprep.subr.mxu0 0.0
    %2440 = vmatpush1.msra.mxu0 0.0
    %2441 = vmatprep.subr.mxu0 0.0
    %2442 = vmatpush1.msra.mxu0 0.0
    %2443 = vmatprep.subr.mxu0 0.0
    %2444 = vmatpush1.msra.mxu0 0.0
    %2445 = vmatprep.mubr.f32.mxu0 0.0
    %2446 = vmatmul.mubr.f32.gmra.mrb[0].mxu0 %v2379
    %v2447 = vpop.f32.mrb[0].mxu0
    %v2448 = vadd.f32 0.0, %v2447
    %v2449 = vpop.f32.mrb[0].mxu0
    %v2450 = vadd.f32 0.0, %v2449
    %2451 = vdwg.mxu0
    %v2452 = vadd.f32 %v2450, %v994
    %vm2453 = vcmp.eq.s32.totalorder %v222, 2
    %2455 = vset.pattern.permute.xlu0 0
    %2456 = vperm.xlu0 %2455, %v2452
    %v2457 = vpop.permute.xlu0 %2456
    %v2459 = vsel %vm2453, %v2457, %v1732
    %v2460 = vadd.f32 %v2448, %v1004
    %v2461 = vmul.f32 %v2460, %v226
    %v2462 = vtanh.pop %v2461
    %v2463 = vmul.f32 %v2462, 0.5
    %v2464 = vadd.f32 %v2463, 0.5
    %v2465 = vmul.f32 %v2464, %v234
    %2467 = vrot.lane.b32.xlu0 %v2462, 64
    %v2468 = vpop.permute.xlu0 %2467
    %v2470 = vmul.f32 %v2464, %v2468
    %2472 = vrot.lane.b32.xlu0 %v2470, 32
    %v2473 = vpop.permute.xlu0 %2472
    %v2475 = vadd.f32 %v2465, %v2473
    %v2476 = vtanh.pop %v2475
    %2478 = vrot.lane.b32.xlu0 %v2476, 64
    %v2479 = vpop.permute.xlu0 %2478
    %v2481 = vmul.f32 %v2464, %v2479
    %2483 = vrot.lane.b32.xlu0 %v2481, 32
    %v2484 = vpop.permute.xlu0 %2483
    %v2485 = vsel %vm66, %v2484, 0
    %2487 = vmatprep.subr.mxu0 0.0
    %2488 = vmatpush1.msra.mxu0 %v141
    %2489 = vmatprep.subr.mxu0 0.0
    %2490 = vmatpush1.msra.mxu0 %v142
    %2491 = vmatprep.subr.mxu0 0.0
    %2492 = vmatpush1.msra.mxu0 %v143
    %2493 = vmatprep.subr.mxu0 0.0
    %2494 = vmatpush1.msra.mxu0 %v144
    %2495 = vmatprep.subr.mxu0 0.0
    %2496 = vmatpush1.msra.mxu0 0.0
    %2497 = vmatprep.subr.mxu0 0.0
    %2498 = vmatpush1.msra.mxu0 0.0
    %2499 = vmatprep.subr.mxu0 0.0
    %2500 = vmatpush1.msra.mxu0 0.0
    %2501 = vmatprep.subr.mxu0 0.0
    %2502 = vmatpush1.msra.mxu0 0.0
    %2503 = vmatprep.subr.mxu0 0.0
    %2504 = vmatpush1.msra.mxu0 0.0
    %2505 = vmatprep.subr.mxu0 0.0
    %2506 = vmatpush1.msra.mxu0 0.0
    %2507 = vmatprep.subr.mxu0 0.0
    %2508 = vmatpush1.msra.mxu0 0.0
    %2509 = vmatprep.subr.mxu0 0.0
    %2510 = vmatpush1.msra.mxu0 0.0
    %2511 = vmatprep.subr.mxu0 0.0
    %2512 = vmatpush1.msra.mxu0 0.0
    %2513 = vmatprep.subr.mxu0 0.0
    %2514 = vmatpush1.msra.mxu0 0.0
    %2515 = vmatprep.subr.mxu0 0.0
    %2516 = vmatpush1.msra.mxu0 0.0
    %2517 = vmatprep.subr.mxu0 0.0
    %2518 = vmatpush1.msra.mxu0 0.0
    %2519 = vmatprep.subr.mxu0 0.0
    %2520 = vmatpush1.msra.mxu0 0.0
    %2521 = vmatprep.subr.mxu0 0.0
    %2522 = vmatpush1.msra.mxu0 0.0
    %2523 = vmatprep.subr.mxu0 0.0
    %2524 = vmatpush1.msra.mxu0 0.0
    %2525 = vmatprep.subr.mxu0 0.0
    %2526 = vmatpush1.msra.mxu0 0.0
    %2527 = vmatprep.subr.mxu0 0.0
    %2528 = vmatpush1.msra.mxu0 0.0
    %2529 = vmatprep.subr.mxu0 0.0
    %2530 = vmatpush1.msra.mxu0 0.0
    %2531 = vmatprep.subr.mxu0 0.0
    %2532 = vmatpush1.msra.mxu0 0.0
    %2533 = vmatprep.subr.mxu0 0.0
    %2534 = vmatpush1.msra.mxu0 0.0
    %2535 = vmatprep.subr.mxu0 0.0
    %2536 = vmatpush1.msra.mxu0 0.0
    %2537 = vmatprep.subr.mxu0 0.0
    %2538 = vmatpush1.msra.mxu0 0.0
    %2539 = vmatprep.subr.mxu0 0.0
    %2540 = vmatpush1.msra.mxu0 0.0
    %2541 = vmatprep.subr.mxu0 0.0
    %2542 = vmatpush1.msra.mxu0 0.0
    %2543 = vmatprep.subr.mxu0 0.0
    %2544 = vmatpush1.msra.mxu0 0.0
    %2545 = vmatprep.subr.mxu0 0.0
    %2546 = vmatpush1.msra.mxu0 0.0
    %2547 = vmatprep.subr.mxu0 0.0
    %2548 = vmatpush1.msra.mxu0 0.0
    %2549 = vmatprep.subr.mxu0 0.0
    %2550 = vmatpush1.msra.mxu0 0.0
    %2551 = vmatprep.mubr.f32.mxu0 0.0
    %2552 = vmatmul.mubr.f32.gmra.mrb[0].mxu0 %v2485
    %v2553 = vpop.f32.mrb[0].mxu0
    %v2554 = vadd.f32 0.0, %v2553
    %v2555 = vpop.f32.mrb[0].mxu0
    %2556 = vdwg.mxu0
    %v2557 = vlaneseq
    %v2558 = vshrl.u32 %v2557, 7
    %v2559 = vsub.s32 0, %v2558
    %v2560 = vrot.slane %v2554, %v2559
    %2562 = vrot.lane.b32.xlu0 %v2560, 32
    %v2563 = vpop.permute.xlu0 %2562
    %v2565 = vadd.f32 %v137, %v2563
    %v2566 = vtanh.pop %v2565
    %2568 = vrot.lane.b32.xlu0 %v2566, 96
    %v2569 = vpop.permute.xlu0 %2568
    %v2570 = vsel %vm66, %v2569, 0
    %2572 = vmatprep.subr.mxu0 0.0
    %2573 = vmatpush1.msra.mxu0 %v346
    %2574 = vmatprep.subr.mxu0 0.0
    %2575 = vmatpush1.msra.mxu0 %v348
    %2576 = vmatprep.subr.mxu0 0.0
    %2577 = vmatpush1.msra.mxu0 %v350
    %2578 = vmatprep.subr.mxu0 0.0
    %2579 = vmatpush1.msra.mxu0 %v352
    %2580 = vmatprep.subr.mxu0 0.0
    %2581 = vmatpush1.msra.mxu0 0.0
    %2582 = vmatprep.subr.mxu0 0.0
    %2583 = vmatpush1.msra.mxu0 0.0
    %2584 = vmatprep.subr.mxu0 0.0
    %2585 = vmatpush1.msra.mxu0 0.0
    %2586 = vmatprep.subr.mxu0 0.0
    %2587 = vmatpush1.msra.mxu0 0.0
    %2588 = vmatprep.subr.mxu0 0.0
    %2589 = vmatpush1.msra.mxu0 0.0
    %2590 = vmatprep.subr.mxu0 0.0
    %2591 = vmatpush1.msra.mxu0 0.0
    %2592 = vmatprep.subr.mxu0 0.0
    %2593 = vmatpush1.msra.mxu0 0.0
    %2594 = vmatprep.subr.mxu0 0.0
    %2595 = vmatpush1.msra.mxu0 0.0
    %2596 = vmatprep.subr.mxu0 0.0
    %2597 = vmatpush1.msra.mxu0 0.0
    %2598 = vmatprep.subr.mxu0 0.0
    %2599 = vmatpush1.msra.mxu0 0.0
    %2600 = vmatprep.subr.mxu0 0.0
    %2601 = vmatpush1.msra.mxu0 0.0
    %2602 = vmatprep.subr.mxu0 0.0
    %2603 = vmatpush1.msra.mxu0 0.0
    %2604 = vmatprep.subr.mxu0 0.0
    %2605 = vmatpush1.msra.mxu0 0.0
    %2606 = vmatprep.subr.mxu0 0.0
    %2607 = vmatpush1.msra.mxu0 0.0
    %2608 = vmatprep.subr.mxu0 0.0
    %2609 = vmatpush1.msra.mxu0 0.0
    %2610 = vmatprep.subr.mxu0 0.0
    %2611 = vmatpush1.msra.mxu0 0.0
    %2612 = vmatprep.subr.mxu0 0.0
    %2613 = vmatpush1.msra.mxu0 0.0
    %2614 = vmatprep.subr.mxu0 0.0
    %2615 = vmatpush1.msra.mxu0 0.0
    %2616 = vmatprep.subr.mxu0 0.0
    %2617 = vmatpush1.msra.mxu0 0.0
    %2618 = vmatprep.subr.mxu0 0.0
    %2619 = vmatpush1.msra.mxu0 0.0
    %2620 = vmatprep.subr.mxu0 0.0
    %2621 = vmatpush1.msra.mxu0 0.0
    %2622 = vmatprep.subr.mxu0 0.0
    %2623 = vmatpush1.msra.mxu0 0.0
    %2624 = vmatprep.subr.mxu0 0.0
    %2625 = vmatpush1.msra.mxu0 0.0
    %2626 = vmatprep.subr.mxu0 0.0
    %2627 = vmatpush1.msra.mxu0 0.0
    %2628 = vmatprep.subr.mxu0 0.0
    %2629 = vmatpush1.msra.mxu0 0.0
    %2630 = vmatprep.subr.mxu0 0.0
    %2631 = vmatpush1.msra.mxu0 0.0
    %2632 = vmatprep.subr.mxu0 0.0
    %2633 = vmatpush1.msra.mxu0 0.0
    %2634 = vmatprep.subr.mxu0 0.0
    %2635 = vmatpush1.msra.mxu0 0.0
    %2636 = vmatprep.mubr.f32.mxu0 0.0
    %2637 = vmatmul.mubr.f32.gmra.mrb[0].mxu0 %v2570
    %v2638 = vpop.f32.mrb[0].mxu0
    %v2639 = vadd.f32 0.0, %v2638
    %v2640 = vpop.f32.mrb[0].mxu0
    %2641 = vdwg.mxu0
    %v2642 = vsel %vm429, %v2639, -inf
    %v2643 = vrot.slane %v2642, 4
    %v2644 = vmax.f32 %v2642, %v2643
    %v2645 = vrot.slane %v2644, 2
    %v2646 = vmax.f32 %v2644, %v2645
    %v2647 = vrot.slane %v2646, 1
    %v2648 = vmax.f32 %v2646, %v2647
    %v2649 = vsub.f32 %v2639, %v2648
    %v2650 = vmul.f32 %v2649, 1.442695
    %v2651 = vpow.pop %v2650
    %v2652 = vsel %vm429, %v2651, 0.0
    %v2653 = vrot.slane %v2652, 4
    %v2654 = vadd.f32 %v2652, %v2653
    %v2655 = vrot.slane %v2654, 2
    %v2656 = vadd.f32 %v2654, %v2655
    %v2657 = vrot.slane %v2656, 1
    %v2658 = vadd.f32 %v2656, %v2657
    %v2659 = vrcp.pop %v2658
    %v2660 = vmul.f32 %v2651, %v2659
    %2661 = vxpose.xlu0.b32.start [1/16] %v2660, 128
    %2662 = vxpose.xlu0.b32.cont [2/16] 0.0, 128
    %2663 = vxpose.xlu0.b32.cont [3/16] 0.0, 128
    %2664 = vxpose.xlu0.b32.cont [4/16] 0.0, 128
    %2665 = vxpose.xlu0.b32.cont [5/16] 0.0, 128
    %2666 = vxpose.xlu0.b32.cont [6/16] 0.0, 128
    %2667 = vxpose.xlu0.b32.cont [7/16] 0.0, 128
    %2668 = vxpose.xlu0.b32.cont [8/16] 0.0, 128
    %2669 = vxpose.xlu0.b32.cont [9/16] 0.0, 128
    %2670 = vxpose.xlu0.b32.cont [10/16] 0.0, 128
    %2671 = vxpose.xlu0.b32.cont [11/16] 0.0, 128
    %2672 = vxpose.xlu0.b32.cont [12/16] 0.0, 128
    %2673 = vxpose.xlu0.b32.cont [13/16] 0.0, 128
    %2674 = vxpose.xlu0.b32.cont [14/16] 0.0, 128
    %2675 = vxpose.xlu0.b32.cont [15/16] 0.0, 128
    %2676 = vxpose.xlu0.b32.end [16/16] 0.0, 128
    %v2677 = vpop.trf.xlu0
    %v2678 = vpop.trf.xlu0
    %v2679 = vpop.trf.xlu0
    %v2680 = vpop.trf.xlu0
    %v2681 = vpop.trf.xlu0
    %v2682 = vpop.trf.xlu0
    %v2683 = vpop.trf.xlu0
    %v2684 = vpop.trf.xlu0
    %v2685 = vpop.trf.xlu0
    %v2686 = vpop.trf.xlu0
    %v2687 = vpop.trf.xlu0
    %v2688 = vpop.trf.xlu0
    %v2689 = vpop.trf.xlu0
    %v2690 = vpop.trf.xlu0
    %v2691 = vpop.trf.xlu0
    %v2692 = vpop.trf.xlu0
    %v2694 = vsel %vm481, %v2677, 0
    %2696 = vmatprep.subr.mxu0 0.0
    %2697 = vmatpush1.msra.mxu0 %v217
    %2698 = vmatprep.subr.mxu0 0.0
    %2699 = vmatpush1.msra.mxu0 0.0
    %2700 = vmatprep.subr.mxu0 0.0
    %2701 = vmatpush1.msra.mxu0 0.0
    %2702 = vmatprep.subr.mxu0 0.0
    %2703 = vmatpush1.msra.mxu0 0.0
    %2704 = vmatprep.subr.mxu0 0.0
    %2705 = vmatpush1.msra.mxu0 0.0
    %2706 = vmatprep.subr.mxu0 0.0
    %2707 = vmatpush1.msra.mxu0 0.0
    %2708 = vmatprep.subr.mxu0 0.0
    %2709 = vmatpush1.msra.mxu0 0.0
    %2710 = vmatprep.subr.mxu0 0.0
    %2711 = vmatpush1.msra.mxu0 0.0
    %2712 = vmatprep.subr.mxu0 0.0
    %2713 = vmatpush1.msra.mxu0 0.0
    %2714 = vmatprep.subr.mxu0 0.0
    %2715 = vmatpush1.msra.mxu0 0.0
    %2716 = vmatprep.subr.mxu0 0.0
    %2717 = vmatpush1.msra.mxu0 0.0
    %2718 = vmatprep.subr.mxu0 0.0
    %2719 = vmatpush1.msra.mxu0 0.0
    %2720 = vmatprep.subr.mxu0 0.0
    %2721 = vmatpush1.msra.mxu0 0.0
    %2722 = vmatprep.subr.mxu0 0.0
    %2723 = vmatpush1.msra.mxu0 0.0
    %2724 = vmatprep.subr.mxu0 0.0
    %2725 = vmatpush1.msra.mxu0 0.0
    %2726 = vmatprep.subr.mxu0 0.0
    %2727 = vmatpush1.msra.mxu0 0.0
    %2728 = vmatprep.subr.mxu0 0.0
    %2729 = vmatpush1.msra.mxu0 0.0
    %2730 = vmatprep.subr.mxu0 0.0
    %2731 = vmatpush1.msra.mxu0 0.0
    %2732 = vmatprep.subr.mxu0 0.0
    %2733 = vmatpush1.msra.mxu0 0.0
    %2734 = vmatprep.subr.mxu0 0.0
    %2735 = vmatpush1.msra.mxu0 0.0
    %2736 = vmatprep.subr.mxu0 0.0
    %2737 = vmatpush1.msra.mxu0 0.0
    %2738 = vmatprep.subr.mxu0 0.0
    %2739 = vmatpush1.msra.mxu0 0.0
    %2740 = vmatprep.subr.mxu0 0.0
    %2741 = vmatpush1.msra.mxu0 0.0
    %2742 = vmatprep.subr.mxu0 0.0
    %2743 = vmatpush1.msra.mxu0 0.0
    %2744 = vmatprep.subr.mxu0 0.0
    %2745 = vmatpush1.msra.mxu0 0.0
    %2746 = vmatprep.subr.mxu0 0.0
    %2747 = vmatpush1.msra.mxu0 0.0
    %2748 = vmatprep.subr.mxu0 0.0
    %2749 = vmatpush1.msra.mxu0 0.0
    %2750 = vmatprep.subr.mxu0 0.0
    %2751 = vmatpush1.msra.mxu0 0.0
    %2752 = vmatprep.subr.mxu0 0.0
    %2753 = vmatpush1.msra.mxu0 0.0
    %2754 = vmatprep.subr.mxu0 0.0
    %2755 = vmatpush1.msra.mxu0 0.0
    %2756 = vmatprep.subr.mxu0 0.0
    %2757 = vmatpush1.msra.mxu0 0.0
    %2758 = vmatprep.subr.mxu0 0.0
    %2759 = vmatpush1.msra.mxu0 0.0
    %2760 = vmatprep.mubr.f32.mxu0 0.0
    %2761 = vmatmul.mubr.f32.gmra.mrb[0].mxu0 %v2694
    %v2762 = vpop.f32.mrb[0].mxu0
    %v2763 = vadd.f32 0.0, %v2762
    %v2764 = vpop.f32.mrb[0].mxu0
    %2765 = vdwg.mxu0
    %v2766 = vlaneseq
    %v2767 = vshrl.u32 %v2766, 7
    %v2768 = vsub.s32 0, %v2767
    %v2769 = vrot.slane %v2763, %v2768
    %2771 = vrot.lane.b32.xlu0 %v2769, 32
    %v2772 = vpop.permute.xlu0 %2771
    %v2774 = vadd.f32 %v137, %v2772
    %v2775 = vtanh.pop %v2774
    %2777 = vrot.lane.b32.xlu0 %v2775, 96
    %v2778 = vpop.permute.xlu0 %2777
    %v2779 = vsel %vm66, %v2778, 0
    %2781 = vmatprep.subr.mxu0 0.0
    %2782 = vmatpush1.msra.mxu0 %v346
    %2783 = vmatprep.subr.mxu0 0.0
    %2784 = vmatpush1.msra.mxu0 %v348
    %2785 = vmatprep.subr.mxu0 0.0
    %2786 = vmatpush1.msra.mxu0 %v350
    %2787 = vmatprep.subr.mxu0 0.0
    %2788 = vmatpush1.msra.mxu0 %v352
    %2789 = vmatprep.subr.mxu0 0.0
    %2790 = vmatpush1.msra.mxu0 0.0
    %2791 = vmatprep.subr.mxu0 0.0
    %2792 = vmatpush1.msra.mxu0 0.0
    %2793 = vmatprep.subr.mxu0 0.0
    %2794 = vmatpush1.msra.mxu0 0.0
    %2795 = vmatprep.subr.mxu0 0.0
    %2796 = vmatpush1.msra.mxu0 0.0
    %2797 = vmatprep.subr.mxu0 0.0
    %2798 = vmatpush1.msra.mxu0 0.0
    %2799 = vmatprep.subr.mxu0 0.0
    %2800 = vmatpush1.msra.mxu0 0.0
    %2801 = vmatprep.subr.mxu0 0.0
    %2802 = vmatpush1.msra.mxu0 0.0
    %2803 = vmatprep.subr.mxu0 0.0
    %2804 = vmatpush1.msra.mxu0 0.0
    %2805 = vmatprep.subr.mxu0 0.0
    %2806 = vmatpush1.msra.mxu0 0.0
    %2807 = vmatprep.subr.mxu0 0.0
    %2808 = vmatpush1.msra.mxu0 0.0
    %2809 = vmatprep.subr.mxu0 0.0
    %2810 = vmatpush1.msra.mxu0 0.0
    %2811 = vmatprep.subr.mxu0 0.0
    %2812 = vmatpush1.msra.mxu0 0.0
    %2813 = vmatprep.subr.mxu0 0.0
    %2814 = vmatpush1.msra.mxu0 0.0
    %2815 = vmatprep.subr.mxu0 0.0
    %2816 = vmatpush1.msra.mxu0 0.0
    %2817 = vmatprep.subr.mxu0 0.0
    %2818 = vmatpush1.msra.mxu0 0.0
    %2819 = vmatprep.subr.mxu0 0.0
    %2820 = vmatpush1.msra.mxu0 0.0
    %2821 = vmatprep.subr.mxu0 0.0
    %2822 = vmatpush1.msra.mxu0 0.0
    %2823 = vmatprep.subr.mxu0 0.0
    %2824 = vmatpush1.msra.mxu0 0.0
    %2825 = vmatprep.subr.mxu0 0.0
    %2826 = vmatpush1.msra.mxu0 0.0
    %2827 = vmatprep.subr.mxu0 0.0
    %2828 = vmatpush1.msra.mxu0 0.0
    %2829 = vmatprep.subr.mxu0 0.0
    %2830 = vmatpush1.msra.mxu0 0.0
    %2831 = vmatprep.subr.mxu0 0.0
    %2832 = vmatpush1.msra.mxu0 0.0
    %2833 = vmatprep.subr.mxu0 0.0
    %2834 = vmatpush1.msra.mxu0 0.0
    %2835 = vmatprep.subr.mxu0 0.0
    %2836 = vmatpush1.msra.mxu0 0.0
    %2837 = vmatprep.subr.mxu0 0.0
    %2838 = vmatpush1.msra.mxu0 0.0
    %2839 = vmatprep.subr.mxu0 0.0
    %2840 = vmatpush1.msra.mxu0 0.0
    %2841 = vmatprep.subr.mxu0 0.0
    %2842 = vmatpush1.msra.mxu0 0.0
    %2843 = vmatprep.subr.mxu0 0.0
    %2844 = vmatpush1.msra.mxu0 0.0
    %2845 = vmatprep.mubr.f32.mxu0 0.0
    %2846 = vmatmul.mubr.f32.gmra.mrb[0].mxu0 %v2779
    %v2847 = vpop.f32.mrb[0].mxu0
    %v2848 = vadd.f32 0.0, %v2847
    %v2849 = vpop.f32.mrb[0].mxu0
    %2850 = vdwg.mxu0
    %v2851 = vsel %vm429, %v2848, -inf
    %v2852 = vrot.slane %v2851, 4
    %v2853 = vmax.f32 %v2851, %v2852
    %v2854 = vrot.slane %v2853, 2
    %v2855 = vmax.f32 %v2853, %v2854
    %v2856 = vrot.slane %v2855, 1
    %v2857 = vmax.f32 %v2855, %v2856
    %v2858 = vsub.f32 %v2848, %v2857
    %v2859 = vmul.f32 %v2858, 1.442695
    %v2860 = vpow.pop %v2859
    %v2861 = vsel %vm429, %v2860, 0.0
    %v2862 = vrot.slane %v2861, 4
    %v2863 = vadd.f32 %v2861, %v2862
    %v2864 = vrot.slane %v2863, 2
    %v2865 = vadd.f32 %v2863, %v2864
    %v2866 = vrot.slane %v2865, 1
    %v2867 = vadd.f32 %v2865, %v2866
    %v2868 = vrcp.pop %v2867
    %v2869 = vmul.f32 %v2860, %v2868
    %2870 = vxpose.xlu0.b32.start [1/16] %v2869, 128
    %2871 = vxpose.xlu0.b32.cont [2/16] 0.0, 128
    %2872 = vxpose.xlu0.b32.cont [3/16] 0.0, 128
    %2873 = vxpose.xlu0.b32.cont [4/16] 0.0, 128
    %2874 = vxpose.xlu0.b32.cont [5/16] 0.0, 128
    %2875 = vxpose.xlu0.b32.cont [6/16] 0.0, 128
    %2876 = vxpose.xlu0.b32.cont [7/16] 0.0, 128
    %2877 = vxpose.xlu0.b32.cont [8/16] 0.0, 128
    %2878 = vxpose.xlu0.b32.cont [9/16] 0.0, 128
    %2879 = vxpose.xlu0.b32.cont [10/16] 0.0, 128
    %2880 = vxpose.xlu0.b32.cont [11/16] 0.0, 128
    %2881 = vxpose.xlu0.b32.cont [12/16] 0.0, 128
    %2882 = vxpose.xlu0.b32.cont [13/16] 0.0, 128
    %2883 = vxpose.xlu0.b32.cont [14/16] 0.0, 128
    %2884 = vxpose.xlu0.b32.cont [15/16] 0.0, 128
    %2885 = vxpose.xlu0.b32.end [16/16] 0.0, 128
    %v2886 = vpop.trf.xlu0
    %v2887 = vpop.trf.xlu0
    %v2888 = vpop.trf.xlu0
    %v2889 = vpop.trf.xlu0
    %v2890 = vpop.trf.xlu0
    %v2891 = vpop.trf.xlu0
    %v2892 = vpop.trf.xlu0
    %v2893 = vpop.trf.xlu0
    %v2894 = vpop.trf.xlu0
    %v2895 = vpop.trf.xlu0
    %v2896 = vpop.trf.xlu0
    %v2897 = vpop.trf.xlu0
    %v2898 = vpop.trf.xlu0
    %v2899 = vpop.trf.xlu0
    %v2900 = vpop.trf.xlu0
    %v2901 = vpop.trf.xlu0
    %v2903 = vsel %vm481, %v2886, 0
    %2905 = vmatprep.subr.mxu0 0.0
    %2906 = vmatpush1.msra.mxu0 %v693
    %2907 = vmatprep.subr.mxu0 0.0
    %2908 = vmatpush1.msra.mxu0 0.0
    %2909 = vmatprep.subr.mxu0 0.0
    %2910 = vmatpush1.msra.mxu0 0.0
    %2911 = vmatprep.subr.mxu0 0.0
    %2912 = vmatpush1.msra.mxu0 0.0
    %2913 = vmatprep.subr.mxu0 0.0
    %2914 = vmatpush1.msra.mxu0 0.0
    %2915 = vmatprep.subr.mxu0 0.0
    %2916 = vmatpush1.msra.mxu0 0.0
    %2917 = vmatprep.subr.mxu0 0.0
    %2918 = vmatpush1.msra.mxu0 0.0
    %2919 = vmatprep.subr.mxu0 0.0
    %2920 = vmatpush1.msra.mxu0 0.0
    %2921 = vmatprep.subr.mxu0 0.0
    %2922 = vmatpush1.msra.mxu0 0.0
    %2923 = vmatprep.subr.mxu0 0.0
    %2924 = vmatpush1.msra.mxu0 0.0
    %2925 = vmatprep.subr.mxu0 0.0
    %2926 = vmatpush1.msra.mxu0 0.0
    %2927 = vmatprep.subr.mxu0 0.0
    %2928 = vmatpush1.msra.mxu0 0.0
    %2929 = vmatprep.subr.mxu0 0.0
    %2930 = vmatpush1.msra.mxu0 0.0
    %2931 = vmatprep.subr.mxu0 0.0
    %2932 = vmatpush1.msra.mxu0 0.0
    %2933 = vmatprep.subr.mxu0 0.0
    %2934 = vmatpush1.msra.mxu0 0.0
    %2935 = vmatprep.subr.mxu0 0.0
    %2936 = vmatpush1.msra.mxu0 0.0
    %2937 = vmatprep.subr.mxu0 0.0
    %2938 = vmatpush1.msra.mxu0 0.0
    %2939 = vmatprep.subr.mxu0 0.0
    %2940 = vmatpush1.msra.mxu0 0.0
    %2941 = vmatprep.subr.mxu0 0.0
    %2942 = vmatpush1.msra.mxu0 0.0
    %2943 = vmatprep.subr.mxu0 0.0
    %2944 = vmatpush1.msra.mxu0 0.0
    %2945 = vmatprep.subr.mxu0 0.0
    %2946 = vmatpush1.msra.mxu0 0.0
    %2947 = vmatprep.subr.mxu0 0.0
    %2948 = vmatpush1.msra.mxu0 0.0
    %2949 = vmatprep.subr.mxu0 0.0
    %2950 = vmatpush1.msra.mxu0 0.0
    %2951 = vmatprep.subr.mxu0 0.0
    %2952 = vmatpush1.msra.mxu0 0.0
    %2953 = vmatprep.subr.mxu0 0.0
    %2954 = vmatpush1.msra.mxu0 0.0
    %2955 = vmatprep.subr.mxu0 0.0
    %2956 = vmatpush1.msra.mxu0 0.0
    %2957 = vmatprep.subr.mxu0 0.0
    %2958 = vmatpush1.msra.mxu0 0.0
    %2959 = vmatprep.subr.mxu0 0.0
    %2960 = vmatpush1.msra.mxu0 0.0
    %2961 = vmatprep.subr.mxu0 0.0
    %2962 = vmatpush1.msra.mxu0 0.0
    %2963 = vmatprep.subr.mxu0 0.0
    %2964 = vmatpush1.msra.mxu0 0.0
    %2965 = vmatprep.subr.mxu0 0.0
    %2966 = vmatpush1.msra.mxu0 0.0
    %2967 = vmatprep.subr.mxu0 0.0
    %2968 = vmatpush1.msra.mxu0 0.0
    %2969 = vmatprep.mubr.f32.mxu0 0.0
    %2970 = vmatmul.mubr.f32.gmra.mrb[0].mxu0 %v2903
    %v2971 = vpop.f32.mrb[0].mxu0
    %v2972 = vadd.f32 0.0, %v2971
    %v2973 = vpop.f32.mrb[0].mxu0
    %2974 = vdwg.mxu0
    %v2975 = vlaneseq
    %v2976 = vshrl.u32 %v2975, 7
    %v2977 = vsub.s32 0, %v2976
    %v2978 = vrot.slane %v2972, %v2977
    %v2979 = vadd.f32 %v137, %v2978
    %v2980 = vtanh.pop %v2979
    %v2982 = vsel %vm66, %v2980, 0
    %2984 = vmatprep.subr.mxu0 0.0
    %2985 = vmatpush1.msra.mxu0 %v775
    %2986 = vmatprep.subr.mxu0 0.0
    %2987 = vmatpush1.msra.mxu0 %v777
    %2988 = vmatprep.subr.mxu0 0.0
    %2989 = vmatpush1.msra.mxu0 %v779
    %2990 = vmatprep.subr.mxu0 0.0
    %2991 = vmatpush1.msra.mxu0 %v781
    %2992 = vmatprep.subr.mxu0 0.0
    %2993 = vmatpush1.msra.mxu0 0.0
    %2994 = vmatprep.subr.mxu0 0.0
    %2995 = vmatpush1.msra.mxu0 0.0
    %2996 = vmatprep.subr.mxu0 0.0
    %2997 = vmatpush1.msra.mxu0 0.0
    %2998 = vmatprep.subr.mxu0 0.0
    %2999 = vmatpush1.msra.mxu0 0.0
    %3000 = vmatprep.subr.mxu0 0.0
    %3001 = vmatpush1.msra.mxu0 0.0
    %3002 = vmatprep.subr.mxu0 0.0
    %3003 = vmatpush1.msra.mxu0 0.0
    %3004 = vmatprep.subr.mxu0 0.0
    %3005 = vmatpush1.msra.mxu0 0.0
    %3006 = vmatprep.subr.mxu0 0.0
    %3007 = vmatpush1.msra.mxu0 0.0
    %3008 = vmatprep.subr.mxu0 0.0
    %3009 = vmatpush1.msra.mxu0 0.0
    %3010 = vmatprep.subr.mxu0 0.0
    %3011 = vmatpush1.msra.mxu0 0.0
    %3012 = vmatprep.subr.mxu0 0.0
    %3013 = vmatpush1.msra.mxu0 0.0
    %3014 = vmatprep.subr.mxu0 0.0
    %3015 = vmatpush1.msra.mxu0 0.0
    %3016 = vmatprep.subr.mxu0 0.0
    %3017 = vmatpush1.msra.mxu0 0.0
    %3018 = vmatprep.subr.mxu0 0.0
    %3019 = vmatpush1.msra.mxu0 0.0
    %3020 = vmatprep.subr.mxu0 0.0
    %3021 = vmatpush1.msra.mxu0 0.0
    %3022 = vmatprep.subr.mxu0 0.0
    %3023 = vmatpush1.msra.mxu0 0.0
    %3024 = vmatprep.subr.mxu0 0.0
    %3025 = vmatpush1.msra.mxu0 0.0
    %3026 = vmatprep.subr.mxu0 0.0
    %3027 = vmatpush1.msra.mxu0 0.0
    %3028 = vmatprep.subr.mxu0 0.0
    %3029 = vmatpush1.msra.mxu0 0.0
    %3030 = vmatprep.subr.mxu0 0.0
    %3031 = vmatpush1.msra.mxu0 0.0
    %3032 = vmatprep.subr.mxu0 0.0
    %3033 = vmatpush1.msra.mxu0 0.0
    %3034 = vmatprep.subr.mxu0 0.0
    %3035 = vmatpush1.msra.mxu0 0.0
    %3036 = vmatprep.subr.mxu0 0.0
    %3037 = vmatpush1.msra.mxu0 0.0
    %3038 = vmatprep.subr.mxu0 0.0
    %3039 = vmatpush1.msra.mxu0 0.0
    %3040 = vmatprep.subr.mxu0 0.0
    %3041 = vmatpush1.msra.mxu0 0.0
    %3042 = vmatprep.subr.mxu0 0.0
    %3043 = vmatpush1.msra.mxu0 0.0
    %3044 = vmatprep.subr.mxu0 0.0
    %3045 = vmatpush1.msra.mxu0 0.0
    %3046 = vmatprep.subr.mxu0 0.0
    %3047 = vmatpush1.msra.mxu0 0.0
    %3048 = vmatprep.mubr.f32.mxu0 0.0
    %3049 = vmatmul.mubr.f32.gmra.mrb[0].mxu0 %v2982
    %v3050 = vpop.f32.mrb[0].mxu0
    %v3051 = vadd.f32 0.0, %v3050
    %v3052 = vpop.f32.mrb[0].mxu0
    %3053 = vdwg.mxu0
    %v3054 = vsel %vm429, %v3051, -inf
    %v3055 = vrot.slane %v3054, 4
    %v3056 = vmax.f32 %v3054, %v3055
    %v3057 = vrot.slane %v3056, 2
    %v3058 = vmax.f32 %v3056, %v3057
    %v3059 = vrot.slane %v3058, 1
    %v3060 = vmax.f32 %v3058, %v3059
    %v3061 = vsub.f32 %v3051, %v3060
    %v3062 = vmul.f32 %v3061, 1.442695
    %v3063 = vpow.pop %v3062
    %v3064 = vsel %vm429, %v3063, 0.0
    %v3065 = vrot.slane %v3064, 4
    %v3066 = vadd.f32 %v3064, %v3065
    %v3067 = vrot.slane %v3066, 2
    %v3068 = vadd.f32 %v3066, %v3067
    %v3069 = vrot.slane %v3068, 1
    %v3070 = vadd.f32 %v3068, %v3069
    %v3071 = vrcp.pop %v3070
    %v3072 = vmul.f32 %v3063, %v3071
    %3073 = vxpose.xlu0.b32.start [1/16] %v3072, 128
    %3074 = vxpose.xlu0.b32.cont [2/16] 0.0, 128
    %3075 = vxpose.xlu0.b32.cont [3/16] 0.0, 128
    %3076 = vxpose.xlu0.b32.cont [4/16] 0.0, 128
    %3077 = vxpose.xlu0.b32.cont [5/16] 0.0, 128
    %3078 = vxpose.xlu0.b32.cont [6/16] 0.0, 128
    %3079 = vxpose.xlu0.b32.cont [7/16] 0.0, 128
    %3080 = vxpose.xlu0.b32.cont [8/16] 0.0, 128
    %3081 = vxpose.xlu0.b32.cont [9/16] 0.0, 128
    %3082 = vxpose.xlu0.b32.cont [10/16] 0.0, 128
    %3083 = vxpose.xlu0.b32.cont [11/16] 0.0, 128
    %3084 = vxpose.xlu0.b32.cont [12/16] 0.0, 128
    %3085 = vxpose.xlu0.b32.cont [13/16] 0.0, 128
    %3086 = vxpose.xlu0.b32.cont [14/16] 0.0, 128
    %3087 = vxpose.xlu0.b32.cont [15/16] 0.0, 128
    %3088 = vxpose.xlu0.b32.end [16/16] 0.0, 128
    %v3089 = vpop.trf.xlu0
    %v3090 = vpop.trf.xlu0
    %v3091 = vpop.trf.xlu0
    %v3092 = vpop.trf.xlu0
    %v3093 = vpop.trf.xlu0
    %v3094 = vpop.trf.xlu0
    %v3095 = vpop.trf.xlu0
    %v3096 = vpop.trf.xlu0
    %v3097 = vpop.trf.xlu0
    %v3098 = vpop.trf.xlu0
    %v3099 = vpop.trf.xlu0
    %v3100 = vpop.trf.xlu0
    %v3101 = vpop.trf.xlu0
    %v3102 = vpop.trf.xlu0
    %v3103 = vpop.trf.xlu0
    %v3104 = vpop.trf.xlu0
    %v3106 = vsel %vm481, %v3089, 0
    %3108 = vmatprep.subr.mxu0 %v914
    %3109 = vmatpush1.msra.mxu0 %v916
    %3110 = vmatprep.subr.mxu0 0.0
    %3111 = vmatpush1.msra.mxu0 0.0
    %3112 = vmatprep.subr.mxu0 0.0
    %3113 = vmatpush1.msra.mxu0 0.0
    %3114 = vmatprep.subr.mxu0 0.0
    %3115 = vmatpush1.msra.mxu0 0.0
    %3116 = vmatprep.subr.mxu0 0.0
    %3117 = vmatpush1.msra.mxu0 0.0
    %3118 = vmatprep.subr.mxu0 0.0
    %3119 = vmatpush1.msra.mxu0 0.0
    %3120 = vmatprep.subr.mxu0 0.0
    %3121 = vmatpush1.msra.mxu0 0.0
    %3122 = vmatprep.subr.mxu0 0.0
    %3123 = vmatpush1.msra.mxu0 0.0
    %3124 = vmatprep.subr.mxu0 0.0
    %3125 = vmatpush1.msra.mxu0 0.0
    %3126 = vmatprep.subr.mxu0 0.0
    %3127 = vmatpush1.msra.mxu0 0.0
    %3128 = vmatprep.subr.mxu0 0.0
    %3129 = vmatpush1.msra.mxu0 0.0
    %3130 = vmatprep.subr.mxu0 0.0
    %3131 = vmatpush1.msra.mxu0 0.0
    %3132 = vmatprep.subr.mxu0 0.0
    %3133 = vmatpush1.msra.mxu0 0.0
    %3134 = vmatprep.subr.mxu0 0.0
    %3135 = vmatpush1.msra.mxu0 0.0
    %3136 = vmatprep.subr.mxu0 0.0
    %3137 = vmatpush1.msra.mxu0 0.0
    %3138 = vmatprep.subr.mxu0 0.0
    %3139 = vmatpush1.msra.mxu0 0.0
    %3140 = vmatprep.subr.mxu0 0.0
    %3141 = vmatpush1.msra.mxu0 0.0
    %3142 = vmatprep.subr.mxu0 0.0
    %3143 = vmatpush1.msra.mxu0 0.0
    %3144 = vmatprep.subr.mxu0 0.0
    %3145 = vmatpush1.msra.mxu0 0.0
    %3146 = vmatprep.subr.mxu0 0.0
    %3147 = vmatpush1.msra.mxu0 0.0
    %3148 = vmatprep.subr.mxu0 0.0
    %3149 = vmatpush1.msra.mxu0 0.0
    %3150 = vmatprep.subr.mxu0 0.0
    %3151 = vmatpush1.msra.mxu0 0.0
    %3152 = vmatprep.subr.mxu0 0.0
    %3153 = vmatpush1.msra.mxu0 0.0
    %3154 = vmatprep.subr.mxu0 0.0
    %3155 = vmatpush1.msra.mxu0 0.0
    %3156 = vmatprep.subr.mxu0 0.0
    %3157 = vmatpush1.msra.mxu0 0.0
    %3158 = vmatprep.subr.mxu0 0.0
    %3159 = vmatpush1.msra.mxu0 0.0
    %3160 = vmatprep.subr.mxu0 0.0
    %3161 = vmatpush1.msra.mxu0 0.0
    %3162 = vmatprep.subr.mxu0 0.0
    %3163 = vmatpush1.msra.mxu0 0.0
    %3164 = vmatprep.subr.mxu0 0.0
    %3165 = vmatpush1.msra.mxu0 0.0
    %3166 = vmatprep.subr.mxu0 0.0
    %3167 = vmatpush1.msra.mxu0 0.0
    %3168 = vmatprep.subr.mxu0 0.0
    %3169 = vmatpush1.msra.mxu0 0.0
    %3170 = vmatprep.subr.mxu0 0.0
    %3171 = vmatpush1.msra.mxu0 0.0
    %3172 = vmatprep.mubr.f32.mxu0 0.0
    %3173 = vmatmul.mubr.f32.gmra.mrb[0].mxu0 %v3106
    %v3174 = vpop.f32.mrb[0].mxu0
    %v3175 = vpop.f32.mrb[0].mxu0
    %v3176 = vadd.f32 0.0, %v3175
    %3177 = vdwg.mxu0
    %v3178 = vadd.f32 %v3176, %v994
    %vm3179 = vcmp.eq.s32.totalorder %v222, 3
    %3181 = vset.pattern.permute.xlu0 0
    %3182 = vperm.xlu0 %3181, %v3178
    %v3183 = vpop.permute.xlu0 %3182
    %v3185 = vsel %vm3179, %v3183, %v2459
    %vm3186 = vcmask 24576
    %3187 = vst.msk [vmem:[#allocation8] sm:$0x1] %vm3186, %v3185
    // Predicated region
    $region30: #{tpu_custom_call.1} parent=1 // pred_check
      _
    $region31: #{tpu_custom_call.1} parent=1 // pred_check_branch
      %3189 = sbr.rel (0) target = $region33
    $region32: #{tpu_custom_call.1} parent=1 // pred_region
      %s3191 = ssub.s32 16, 16
      %3192 = vsyncadd [#allocation4], %s3191
      %s3194 = sshll.u32 [#allocation8], 4
      %s3195 = int_to_ptr.vmem [resolvable:$true] %s3194
      %3197 = dma.vmem_to_hbm [thread:$0]  %s3195, 16, %s4, [#allocation4]
    $region33: #{tpu_custom_call.1} parent=1 // pred_fallthru
      _
    // Predicated region
    $region34: #{tpu_custom_call.1} parent=1 // pred_check
      _
    $region35: #{tpu_custom_call.1} parent=1 // pred_check_branch
      %3199 = sbr.rel (0) target = $region37
    $region36: #{tpu_custom_call.1} parent=1 // pred_region
      %3200 = dma.done [#allocation4], 16
    $region37: #{tpu_custom_call.1} parent=1 // pred_fallthru
      _
    %3201 = vsyncpa [#allocation3], 1
    %3202 = vsyncpa [#allocation6], 1
    %3203 = vsyncpa [#allocation4], 1

</llo_original>
